<compile_context>
chip_gen: v7x
topology: tpu7x:2x2x1
jax: 0.10.0
libtpu: 0.0.40
codegen_flags: <defaults>
</compile_context>

<pallas_src>
import jax
import jax.numpy as jnp
from jax.experimental import pallas as pl
from jax.experimental.pallas import tpu as pltpu


# ----------------------------- Pallas kernels ------------------------------ #

def _make_conv_pool_kernel(g, pooled_rows):
    """Fused: patches @ weight (MXU) + bias, then 2x2 max-pool epilogue.

    Patch rows of a tile are ordered (image, pool_window_pos(4), pooled_pixel),
    so pooling is a max over 4 batch-dim slices -- no cross-lane work and the
    row splits land on 8-aligned sublane boundaries.
    """

    def kernel(p_ref, w_ref, b_ref, o_ref):
        c = w_ref.shape[-1]
        acc = jnp.dot(p_ref[...], w_ref[...], preferred_element_type=jnp.float32)
        acc = acc + b_ref[...]                               # (rows,128) + (1,128)
        t = acc.reshape(g, 4, pooled_rows, c)                # 8-aligned row split
        pooled = jnp.maximum(jnp.maximum(t[:, 0], t[:, 1]),
                             jnp.maximum(t[:, 2], t[:, 3]))
        o_ref[...] = pooled.reshape(g * pooled_rows, c).astype(o_ref.dtype)

    return kernel


def _fc_head_kernel(x_ref, w1_ref, b1_ref, w2_ref, b2_ref, o_ref):
    """fc1 + relu (+ eval-mode dropout) + fc2 + softmax over 128 padded lanes."""
    h = jnp.dot(x_ref[...], w1_ref[...], preferred_element_type=jnp.float32)
    h = jnp.maximum(h + b1_ref[...], 0.0)
    # TODO(synk): dropout(p=0.5) is eval-mode identity; training mode would use
    # pltpu.prng_seed / pltpu.prng_random_bits in-kernel.
    z = jnp.dot(h.astype(jnp.bfloat16), w2_ref[...],
                preferred_element_type=jnp.float32)
    z = z + b2_ref[...]           # padded lanes carry a -1e30 bias -> exp() == 0
    m = jnp.max(z, axis=-1, keepdims=True)
    e = jnp.exp(z - m)
    s = jnp.sum(e, axis=-1, keepdims=True)
    r = pl.reciprocal(s, approx=True)
    r = r * (2.0 - s * r)         # one Newton step: EUP path, full precision
    o_ref[...] = (e * r).astype(o_ref.dtype)


# ------------------------------ JAX glue ----------------------------------- #

def _round_up(n, m):
    return ((n + m - 1) // m) * m


def _largest_divisor_leq(n, cap):
    cap = max(1, min(n, cap))
    for d in range(cap, 0, -1):
        if n % d == 0:
            return d
    return 1


def _im2col_pool_grouped(x, k):
    """x:[B,H,W,C] -> patches:[B*4*ph*pw, k*k*C], rows ordered
    (image, pool_pos(py,px), pooled_pixel(oy,ox)). Valid conv, stride 1,
    feature order (kh, kw, cin). Requires even conv output dims."""
    B, H, W, C = x.shape
    oh, ow = H - k + 1, W - k + 1
    assert oh % 2 == 0 and ow % 2 == 0, "fused 2x2 pool needs even conv output"
    ph, pw = oh // 2, ow // 2
    cols = [x[:, i:i + oh, j:j + ow, :] for i in range(k) for j in range(k)]
    p = jnp.stack(cols, axis=3)                       # [B, oh, ow, k*k, C]
    p = p.reshape(B, ph, 2, pw, 2, k * k, C)          # oh->(oy,py), ow->(ox,px)
    p = p.transpose(0, 2, 4, 1, 3, 5, 6)              # [B, py, px, ph, pw, kk, C]
    return p.reshape(B * 4 * ph * pw, k * k * C), (ph, pw)


def conv_pool(x, w, b, k):
    """Fused conv(k, valid, +bias) then 2x2/stride-2 max-pool.
    x:[B,H,W,Cin] (bf16), w:[Kpad,128] bf16, b:[1,128] f32.
    Returns NHWC [B, ph, pw, 128] bf16 (padded output channels are zero)."""
    B = x.shape[0]
    patches, (ph, pw) = _im2col_pool_grouped(x, k)
    Kp, Cout = w.shape
    if patches.shape[1] < Kp:                          # conv1: K 25 -> 32
        patches = jnp.pad(patches, ((0, 0), (0, Kp - patches.shape[1])))
    patches = patches.astype(jnp.bfloat16)

    pooled_rows = ph * pw                              # multiple of 8 here
    rows_per_img = 4 * pooled_rows
    # images per grid step: keep row tiles <= ~1024 rows
    g = _largest_divisor_leq(B, max(1, 1024 // rows_per_img))

    out = pl.pallas_call(
        _make_conv_pool_kernel(g, pooled_rows),
        out_shape=jax.ShapeDtypeStruct((B * pooled_rows, Cout), jnp.bfloat16),
        grid=(B // g,),
        in_specs=[
            pl.BlockSpec((g * rows_per_img, Kp), lambda i: (i, 0)),
            pl.BlockSpec((Kp, Cout), lambda i: (0, 0)),     # weight resident
            pl.BlockSpec((1, Cout), lambda i: (0, 0)),      # bias resident
        ],
        out_specs=pl.BlockSpec((g * pooled_rows, Cout), lambda i: (i, 0)),
        compiler_params=pltpu.CompilerParams(dimension_semantics=("parallel",)),
    )(patches, w, b)
    return out.reshape(B, ph, pw, Cout)


def fc_head(flat, w1, b1, w2, b2):
    """Single Pallas call: fc1 + relu + fc2 + softmax. Returns [B, 10] f32."""
    B, D = flat.shape
    Bp = max(8, _round_up(B, 8))                       # rows: multiple of 8
    TM = 256 if Bp >= 256 else Bp                      # row tile (grid over M)
    Bp = _round_up(Bp, TM)
    xp = jnp.pad(flat.astype(jnp.bfloat16), ((0, Bp - B), (0, 0)))
    H1 = w1.shape[1]
    N = w2.shape[1]
    out = pl.pallas_call(
        _fc_head_kernel,
        out_shape=jax.ShapeDtypeStruct((Bp, N), jnp.float32),
        grid=(Bp // TM,),
        in_specs=[
            pl.BlockSpec((TM, D), lambda i: (i, 0)),
            pl.BlockSpec((D, H1), lambda i: (0, 0)),
            pl.BlockSpec((1, H1), lambda i: (0, 0)),
            pl.BlockSpec((H1, N), lambda i: (0, 0)),
            pl.BlockSpec((1, N), lambda i: (0, 0)),
        ],
        out_specs=pl.BlockSpec((TM, N), lambda i: (i, 0)),
        compiler_params=pltpu.CompilerParams(dimension_semantics=("parallel",)),
    )(xp, w1, b1, w2, b2)
    return out[:B, :10]


def init_params(key):
    """Synthetic weights in kernel-ready (padded, bf16) layout."""
    ks = jax.random.split(key, 8)
    scale = 0.05
    # conv1: [5,5,1,32] -> [K=25->32, Cout=32->128]
    w1 = (scale * jax.random.normal(ks[0], (5, 5, 1, 32), jnp.float32)).reshape(25, 32)
    w1 = jnp.pad(w1, ((0, 7), (0, 96))).astype(jnp.bfloat16)
    b1 = jnp.pad(scale * jax.random.normal(ks[1], (1, 32), jnp.float32),
                 ((0, 0), (0, 96)))
    # conv2: [5,5,32,64] -> [K=800, Cout=64->128]
    w2 = (scale * jax.random.normal(ks[2], (5, 5, 32, 64), jnp.float32)).reshape(800, 64)
    w2 = jnp.pad(w2, ((0, 0), (0, 64))).astype(jnp.bfloat16)
    b2 = jnp.pad(scale * jax.random.normal(ks[3], (1, 64), jnp.float32),
                 ((0, 0), (0, 64)))
    # fc1: [1024, 1024]
    wfc1 = (scale * jax.random.normal(ks[4], (1024, 1024), jnp.float32)).astype(jnp.bfloat16)
    bfc1 = scale * jax.random.normal(ks[5], (1, 1024), jnp.float32)
    # fc2: [1024, 10 -> 128]; padded bias lanes = -1e30 so softmax ignores them
    wfc2 = jnp.pad(scale * jax.random.normal(ks[6], (1024, 10), jnp.float32),
                   ((0, 0), (0, 118))).astype(jnp.bfloat16)
    bfc2 = jnp.pad(scale * jax.random.normal(ks[7], (1, 10), jnp.float32),
                   ((0, 0), (0, 118)), constant_values=-1e30)
    return dict(w1=w1, b1=b1, w2=w2, b2=b2,
                wfc1=wfc1, bfc1=bfc1, wfc2=wfc2, bfc2=bfc2)


@jax.jit
def mnist_forward(x_nchw, params):
    B = x_nchw.shape[0]
    x = jnp.transpose(x_nchw, (0, 2, 3, 1)).astype(jnp.bfloat16)   # NHWC bf16

    # conv1 (1 -> 32, k=5) + bias + 2x2 maxpool, fused Pallas kernel
    y1 = conv_pool(x, params["w1"], params["b1"], k=5)             # [B,12,12,128]
    x1 = y1[..., :32]                                              # real channels

    # conv2 (32 -> 64, k=5) + bias + 2x2 maxpool
    y2 = conv_pool(x1, params["w2"], params["b2"], k=5)            # [B,4,4,128]
    x2 = y2[..., :64]

    # flatten (h, w, c order) -> [B, 1024]
    flat = x2.reshape(B, 1024)

    # fc1 + relu + (eval-mode dropout) + fc2 + softmax, one Pallas kernel
    return fc_head(flat, params["wfc1"], params["bfc1"],
                   params["wfc2"], params["bfc2"])                 # [B, 10]


if __name__ == "__main__":
    key = jax.random.PRNGKey(0)
    kx, kp = jax.random.split(key)
    x = jax.random.normal(kx, (2, 1, 28, 28), dtype=jnp.float32)   # NCHW like PyTorch
    params = init_params(kp)

    y = jax.block_until_ready(mnist_forward(x, params))

    assert y.shape == (2, 10)
    assert jnp.allclose(jnp.sum(y, axis=1), 1.0, atol=1e-4)        # softmax rows sum to 1
    print("KERNEL_OK")
</pallas_src>

<mosaic_0001>
module attributes {stable_mosaic.version = 11 : i64} {
  func.func @kernel(%arg0: i32, %arg1: memref<576x32xbf16, #tpu.memory_space<vmem>>, %arg2: memref<32x128xbf16, #tpu.memory_space<vmem>>, %arg3: memref<1x128xf32, #tpu.memory_space<vmem>>, %arg4: memref<144x128xbf16, #tpu.memory_space<vmem>>) attributes {dimension_semantics = [#tpu.dimension_semantics<parallel>], iteration_bounds = array<i64: 2>, scalar_prefetch = 0 : i64, scratch_operands = 0 : i64, tpu.core_type = #tpu.core_type<tc>, window_params = [{transform_indices = @transform_0, window_bounds = array<i64: 576, 32>}, {pipeline_mode = #tpu.pipeline_mode<synchronous>, transform_indices = @transform_1, window_bounds = array<i64: 32, 128>}, {pipeline_mode = #tpu.pipeline_mode<synchronous>, transform_indices = @transform_2, window_bounds = array<i64: 1, 128>}, {transform_indices = @transform_3, window_bounds = array<i64: 144, 128>}]} {
    %c0 = arith.constant 0 : index
    %c0_0 = arith.constant 0 : index
    %0 = vector.load %arg1[%c0, %c0_0] : memref<576x32xbf16, #tpu.memory_space<vmem>>, vector<576x32xbf16>
    %c0_1 = arith.constant 0 : index
    %c0_2 = arith.constant 0 : index
    %1 = vector.load %arg2[%c0_1, %c0_2] : memref<32x128xbf16, #tpu.memory_space<vmem>>, vector<32x128xbf16>
    %cst = arith.constant dense<0.000000e+00> : vector<576x128xf32>
    %2 = tpu.matmul %0, %1, %cst {dimension_numbers = #tpu.dot_dimension_numbers<[1], [0], [0], [1], [0, 0, 1, 1], [], []>} : vector<576x32xbf16>, vector<32x128xbf16>, vector<576x128xf32> -> vector<576x128xf32>
    %c0_3 = arith.constant 0 : index
    %c0_4 = arith.constant 0 : index
    %3 = vector.load %arg3[%c0_3, %c0_4] : memref<1x128xf32, #tpu.memory_space<vmem>>, vector<1x128xf32>
    %4 = vector.broadcast %3 : vector<1x128xf32> to vector<576x128xf32>
    %5 = arith.addf %2, %4 : vector<576x128xf32>
    %6 = vector.shape_cast %5 : vector<576x128xf32> to vector<1x4x144x128xf32>
    %7 = vector.extract_strided_slice %6 {offsets = [0, 0, 0, 0], sizes = [1, 1, 144, 128], strides = [1, 1, 1, 1]} : vector<1x4x144x128xf32> to vector<1x1x144x128xf32>
    %8 = vector.shape_cast %7 : vector<1x1x144x128xf32> to vector<1x144x128xf32>
    %9 = vector.extract_strided_slice %6 {offsets = [0, 1, 0, 0], sizes = [1, 1, 144, 128], strides = [1, 1, 1, 1]} : vector<1x4x144x128xf32> to vector<1x1x144x128xf32>
    %10 = vector.shape_cast %9 : vector<1x1x144x128xf32> to vector<1x144x128xf32>
    %11 = arith.maximumf %8, %10 : vector<1x144x128xf32>
    %12 = vector.extract_strided_slice %6 {offsets = [0, 2, 0, 0], sizes = [1, 1, 144, 128], strides = [1, 1, 1, 1]} : vector<1x4x144x128xf32> to vector<1x1x144x128xf32>
    %13 = vector.shape_cast %12 : vector<1x1x144x128xf32> to vector<1x144x128xf32>
    %14 = vector.extract_strided_slice %6 {offsets = [0, 3, 0, 0], sizes = [1, 1, 144, 128], strides = [1, 1, 1, 1]} : vector<1x4x144x128xf32> to vector<1x1x144x128xf32>
    %15 = vector.shape_cast %14 : vector<1x1x144x128xf32> to vector<1x144x128xf32>
    %16 = arith.maximumf %13, %15 : vector<1x144x128xf32>
    %17 = arith.maximumf %11, %16 : vector<1x144x128xf32>
    %18 = vector.shape_cast %17 : vector<1x144x128xf32> to vector<144x128xf32>
    %19 = arith.truncf %18 : vector<144x128xf32> to vector<144x128xbf16>
    %c0_5 = arith.constant 0 : index
    %c0_6 = arith.constant 0 : index
    %20 = vector.load %arg4[%c0_5, %c0_6] : memref<144x128xbf16, #tpu.memory_space<vmem>>, vector<144x128xbf16>
    tpu.vector_store %arg4[%c0_5, %c0_6], %19 {strides = array<i32>} : memref<144x128xbf16, #tpu.memory_space<vmem>>, vector<144x128xbf16>,
    return
  }
  func.func @transform_0(%arg0: i32) -> (i32, i32) {
    %c0_i32 = arith.constant 0 : i32
    %c0_i32_0 = arith.constant 0 : i32
    return %arg0, %c0_i32 : i32, i32
  }
  func.func @transform_1(%arg0: i32) -> (i32, i32) {
    %c0_i32 = arith.constant 0 : i32
    %c0_i32_0 = arith.constant 0 : i32
    %c0_i32_1 = arith.constant 0 : i32
    return %c0_i32, %c0_i32_0 : i32, i32
  }
  func.func @transform_2(%arg0: i32) -> (i32, i32) {
    %c0_i32 = arith.constant 0 : i32
    %c0_i32_0 = arith.constant 0 : i32
    %c0_i32_1 = arith.constant 0 : i32
    return %c0_i32, %c0_i32_0 : i32, i32
  }
  func.func @transform_3(%arg0: i32) -> (i32, i32) {
    %c0_i32 = arith.constant 0 : i32
    %c0_i32_0 = arith.constant 0 : i32
    return %arg0, %c0_i32 : i32, i32
  }
}

module attributes {stable_mosaic.version = 11 : i64} {
  func.func @kernel(%arg0: i32, %arg1: memref<128x800xbf16, #tpu.memory_space<vmem>>, %arg2: memref<800x128xbf16, #tpu.memory_space<vmem>>, %arg3: memref<1x128xf32, #tpu.memory_space<vmem>>, %arg4: memref<32x128xbf16, #tpu.memory_space<vmem>>) attributes {dimension_semantics = [#tpu.dimension_semantics<parallel>], iteration_bounds = array<i64: 1>, scalar_prefetch = 0 : i64, scratch_operands = 0 : i64, tpu.core_type = #tpu.core_type<tc>, window_params = [{transform_indices = @transform_0, window_bounds = array<i64: 128, 800>}, {pipeline_mode = #tpu.pipeline_mode<synchronous>, transform_indices = @transform_1, window_bounds = array<i64: 800, 128>}, {pipeline_mode = #tpu.pipeline_mode<synchronous>, transform_indices = @transform_2, window_bounds = array<i64: 1, 128>}, {transform_indices = @transform_3, window_bounds = array<i64: 32, 128>}]} {
    %c0 = arith.constant 0 : index
    %c0_0 = arith.constant 0 : index
    %0 = vector.load %arg1[%c0, %c0_0] : memref<128x800xbf16, #tpu.memory_space<vmem>>, vector<128x800xbf16>
    %c0_1 = arith.constant 0 : index
    %c0_2 = arith.constant 0 : index
    %1 = vector.load %arg2[%c0_1, %c0_2] : memref<800x128xbf16, #tpu.memory_space<vmem>>, vector<800x128xbf16>
    %cst = arith.constant dense<0.000000e+00> : vector<128x128xf32>
    %2 = tpu.matmul %0, %1, %cst {dimension_numbers = #tpu.dot_dimension_numbers<[1], [0], [0], [1], [0, 0, 1, 1], [], []>} : vector<128x800xbf16>, vector<800x128xbf16>, vector<128x128xf32> -> vector<128x128xf32>
    %c0_3 = arith.constant 0 : index
    %c0_4 = arith.constant 0 : index
    %3 = vector.load %arg3[%c0_3, %c0_4] : memref<1x128xf32, #tpu.memory_space<vmem>>, vector<1x128xf32>
    %4 = vector.broadcast %3 : vector<1x128xf32> to vector<128x128xf32>
    %5 = arith.addf %2, %4 : vector<128x128xf32>
    %6 = vector.shape_cast %5 : vector<128x128xf32> to vector<2x4x16x128xf32>
    %7 = vector.extract_strided_slice %6 {offsets = [0, 0, 0, 0], sizes = [2, 1, 16, 128], strides = [1, 1, 1, 1]} : vector<2x4x16x128xf32> to vector<2x1x16x128xf32>
    %8 = vector.shape_cast %7 : vector<2x1x16x128xf32> to vector<2x16x128xf32>
    %9 = vector.extract_strided_slice %6 {offsets = [0, 1, 0, 0], sizes = [2, 1, 16, 128], strides = [1, 1, 1, 1]} : vector<2x4x16x128xf32> to vector<2x1x16x128xf32>
    %10 = vector.shape_cast %9 : vector<2x1x16x128xf32> to vector<2x16x128xf32>
    %11 = arith.maximumf %8, %10 : vector<2x16x128xf32>
    %12 = vector.extract_strided_slice %6 {offsets = [0, 2, 0, 0], sizes = [2, 1, 16, 128], strides = [1, 1, 1, 1]} : vector<2x4x16x128xf32> to vector<2x1x16x128xf32>
    %13 = vector.shape_cast %12 : vector<2x1x16x128xf32> to vector<2x16x128xf32>
    %14 = vector.extract_strided_slice %6 {offsets = [0, 3, 0, 0], sizes = [2, 1, 16, 128], strides = [1, 1, 1, 1]} : vector<2x4x16x128xf32> to vector<2x1x16x128xf32>
    %15 = vector.shape_cast %14 : vector<2x1x16x128xf32> to vector<2x16x128xf32>
    %16 = arith.maximumf %13, %15 : vector<2x16x128xf32>
    %17 = arith.maximumf %11, %16 : vector<2x16x128xf32>
    %18 = vector.shape_cast %17 : vector<2x16x128xf32> to vector<32x128xf32>
    %19 = arith.truncf %18 : vector<32x128xf32> to vector<32x128xbf16>
    %c0_5 = arith.constant 0 : index
    %c0_6 = arith.constant 0 : index
    %20 = vector.load %arg4[%c0_5, %c0_6] : memref<32x128xbf16, #tpu.memory_space<vmem>>, vector<32x128xbf16>
    tpu.vector_store %arg4[%c0_5, %c0_6], %19 {strides = array<i32>} : memref<32x128xbf16, #tpu.memory_space<vmem>>, vector<32x128xbf16>,
    return
  }
  func.func @transform_0(%arg0: i32) -> (i32, i32) {
    %c0_i32 = arith.constant 0 : i32
    %c0_i32_0 = arith.constant 0 : i32
    return %arg0, %c0_i32 : i32, i32
  }
  func.func @transform_1(%arg0: i32) -> (i32, i32) {
    %c0_i32 = arith.constant 0 : i32
    %c0_i32_0 = arith.constant 0 : i32
    %c0_i32_1 = arith.constant 0 : i32
    return %c0_i32, %c0_i32_0 : i32, i32
  }
  func.func @transform_2(%arg0: i32) -> (i32, i32) {
    %c0_i32 = arith.constant 0 : i32
    %c0_i32_0 = arith.constant 0 : i32
    %c0_i32_1 = arith.constant 0 : i32
    return %c0_i32, %c0_i32_0 : i32, i32
  }
  func.func @transform_3(%arg0: i32) -> (i32, i32) {
    %c0_i32 = arith.constant 0 : i32
    %c0_i32_0 = arith.constant 0 : i32
    return %arg0, %c0_i32 : i32, i32
  }
}

module attributes {stable_mosaic.version = 11 : i64} {
  func.func @_fc_head_kernel(%arg0: i32, %arg1: memref<8x1024xbf16, #tpu.memory_space<vmem>>, %arg2: memref<1024x1024xbf16, #tpu.memory_space<vmem>>, %arg3: memref<1x1024xf32, #tpu.memory_space<vmem>>, %arg4: memref<1024x128xbf16, #tpu.memory_space<vmem>>, %arg5: memref<1x128xf32, #tpu.memory_space<vmem>>, %arg6: memref<8x128xf32, #tpu.memory_space<vmem>>) attributes {dimension_semantics = [#tpu.dimension_semantics<parallel>], iteration_bounds = array<i64: 1>, scalar_prefetch = 0 : i64, scratch_operands = 0 : i64, tpu.core_type = #tpu.core_type<tc>, window_params = [{transform_indices = @transform_0, window_bounds = array<i64: 8, 1024>}, {pipeline_mode = #tpu.pipeline_mode<synchronous>, transform_indices = @transform_1, window_bounds = array<i64: 1024, 1024>}, {pipeline_mode = #tpu.pipeline_mode<synchronous>, transform_indices = @transform_2, window_bounds = array<i64: 1, 1024>}, {pipeline_mode = #tpu.pipeline_mode<synchronous>, transform_indices = @transform_3, window_bounds = array<i64: 1024, 128>}, {pipeline_mode = #tpu.pipeline_mode<synchronous>, transform_indices = @transform_4, window_bounds = array<i64: 1, 128>}, {transform_indices = @transform_5, window_bounds = array<i64: 8, 128>}]} {
    %c0 = arith.constant 0 : index
    %c0_0 = arith.constant 0 : index
    %0 = vector.load %arg1[%c0, %c0_0] : memref<8x1024xbf16, #tpu.memory_space<vmem>>, vector<8x1024xbf16>
    %c0_1 = arith.constant 0 : index
    %c0_2 = arith.constant 0 : index
    %1 = vector.load %arg2[%c0_1, %c0_2] : memref<1024x1024xbf16, #tpu.memory_space<vmem>>, vector<1024x1024xbf16>
    %cst = arith.constant dense<0.000000e+00> : vector<8x1024xf32>
    %2 = tpu.matmul %0, %1, %cst {dimension_numbers = #tpu.dot_dimension_numbers<[1], [0], [0], [1], [0, 0, 1, 1], [], []>} : vector<8x1024xbf16>, vector<1024x1024xbf16>, vector<8x1024xf32> -> vector<8x1024xf32>
    %c0_3 = arith.constant 0 : index
    %c0_4 = arith.constant 0 : index
    %3 = vector.load %arg3[%c0_3, %c0_4] : memref<1x1024xf32, #tpu.memory_space<vmem>>, vector<1x1024xf32>
    %4 = vector.broadcast %3 : vector<1x1024xf32> to vector<8x1024xf32>
    %5 = arith.addf %2, %4 : vector<8x1024xf32>
    %cst_5 = arith.constant 0.000000e+00 : f32
    %6 = vector.broadcast %cst_5 : f32 to vector<8x1024xf32>
    %7 = arith.maximumf %5, %6 : vector<8x1024xf32>
    %8 = arith.truncf %7 : vector<8x1024xf32> to vector<8x1024xbf16>
    %c0_6 = arith.constant 0 : index
    %c0_7 = arith.constant 0 : index
    %9 = vector.load %arg4[%c0_6, %c0_7] : memref<1024x128xbf16, #tpu.memory_space<vmem>>, vector<1024x128xbf16>
    %cst_8 = arith.constant dense<0.000000e+00> : vector<8x128xf32>
    %10 = tpu.matmul %8, %9, %cst_8 {dimension_numbers = #tpu.dot_dimension_numbers<[1], [0], [0], [1], [0, 0, 1, 1], [], []>} : vector<8x1024xbf16>, vector<1024x128xbf16>, vector<8x128xf32> -> vector<8x128xf32>
    %c0_9 = arith.constant 0 : index
    %c0_10 = arith.constant 0 : index
    %11 = vector.load %arg5[%c0_9, %c0_10] : memref<1x128xf32, #tpu.memory_space<vmem>>, vector<1x128xf32>
    %12 = vector.broadcast %11 : vector<1x128xf32> to vector<8x128xf32>
    %13 = arith.addf %10, %12 : vector<8x128xf32>
    %cst_11 = arith.constant dense<0xFF800000> : vector<8xf32>
    %14 = vector.multi_reduction <maximumf>, %13, %cst_11 [1] : vector<8x128xf32> to vector<8xf32>
    %15 = vector.shape_cast %14 : vector<8xf32> to vector<8x1xf32>
    %16 = vector.broadcast %15 : vector<8x1xf32> to vector<8x128xf32>
    %17 = arith.subf %13, %16 : vector<8x128xf32>
    %18 = math.exp %17 : vector<8x128xf32>
    %cst_12 = arith.constant dense<0.000000e+00> : vector<8xf32>
    %19 = vector.multi_reduction <add>, %18, %cst_12 [1] : vector<8x128xf32> to vector<8xf32>
    %20 = vector.shape_cast %19 : vector<8xf32> to vector<8x1xf32>
    %21 = tpu.reciprocal %20 {approx = true} : vector<8x1xf32> -> vector<8x1xf32>
    %22 = arith.mulf %20, %21 : vector<8x1xf32>
    %cst_13 = arith.constant 2.000000e+00 : f32
    %23 = vector.broadcast %cst_13 : f32 to vector<8x1xf32>
    %24 = arith.subf %23, %22 : vector<8x1xf32>
    %25 = arith.mulf %21, %24 : vector<8x1xf32>
    %26 = vector.broadcast %25 : vector<8x1xf32> to vector<8x128xf32>
    %27 = arith.mulf %18, %26 : vector<8x128xf32>
    %c0_14 = arith.constant 0 : index
    %c0_15 = arith.constant 0 : index
    %28 = vector.load %arg6[%c0_14, %c0_15] : memref<8x128xf32, #tpu.memory_space<vmem>>, vector<8x128xf32>
    tpu.vector_store %arg6[%c0_14, %c0_15], %27 {strides = array<i32>} : memref<8x128xf32, #tpu.memory_space<vmem>>, vector<8x128xf32>,
    return
  }
  func.func @transform_0(%arg0: i32) -> (i32, i32) {
    %c0_i32 = arith.constant 0 : i32
    %c0_i32_0 = arith.constant 0 : i32
    return %arg0, %c0_i32 : i32, i32
  }
  func.func @transform_1(%arg0: i32) -> (i32, i32) {
    %c0_i32 = arith.constant 0 : i32
    %c0_i32_0 = arith.constant 0 : i32
    %c0_i32_1 = arith.constant 0 : i32
    return %c0_i32, %c0_i32_0 : i32, i32
  }
  func.func @transform_2(%arg0: i32) -> (i32, i32) {
    %c0_i32 = arith.constant 0 : i32
    %c0_i32_0 = arith.constant 0 : i32
    %c0_i32_1 = arith.constant 0 : i32
    return %c0_i32, %c0_i32_0 : i32, i32
  }
  func.func @transform_3(%arg0: i32) -> (i32, i32) {
    %c0_i32 = arith.constant 0 : i32
    %c0_i32_0 = arith.constant 0 : i32
    %c0_i32_1 = arith.constant 0 : i32
    return %c0_i32, %c0_i32_0 : i32, i32
  }
  func.func @transform_4(%arg0: i32) -> (i32, i32) {
    %c0_i32 = arith.constant 0 : i32
    %c0_i32_0 = arith.constant 0 : i32
    %c0_i32_1 = arith.constant 0 : i32
    return %c0_i32, %c0_i32_0 : i32, i32
  }
  func.func @transform_5(%arg0: i32) -> (i32, i32) {
    %c0_i32 = arith.constant 0 : i32
    %c0_i32_0 = arith.constant 0 : i32
    return %arg0, %c0_i32 : i32, i32
  }
}

</mosaic_0001>

<llo_original>
// kernel: mnist_forward.3
$region0: #{mnist_forward.3}
  #allocation0 [shape = 'u32[]', space=smem, size = 0x4, offset = 0x4, fixed_abs, tag = 'smem constant byte address 0x4 - core index']
  #allocation1 [shape = 'u32[144,128]{1,0:T(1,128)}', space=vmem, size = 0x12000, scoped, tag = 'internal scratch']
  %s0 = inlined_call_operand.vmem [shape: bf16[1152,32], index: 0, kind: input, shape index: {}]
  %s1 = inlined_call_operand.vmem [shape: bf16[32,128], index: 1, kind: input, shape index: {}]
  %s2 = inlined_call_operand.vmem [shape: f32[1,128], index: 2, kind: input, shape index: {}]
  %s3 = inlined_call_operand.vmem [shape: bf16[288,128], index: 3, kind: output, shape index: {}]
  %s4 = sld [smem:[#allocation0]]
  $region45: #{mnist_forward.3} parent=0
    _
  %s6 = ssub.s32 1, %s4
  %s7 = scalar_select 0, %s6, %s4
  loop: start=0, step=1, limit=4
  $region2: #{mnist_forward.3} parent=0 // loop_pre_header
    _
  $region3: #{mnist_forward.3} parent=0 // loop_header
    %s9 = sphi 0, %s13
    %p10 = scmp.ge.s32.totalorder %s9, 4
    %s19 = sphi 0, %s21
    %s22 = sphi 0, %s19
    %s23 = sphi 0, %s22
    %s39 = sphi 0, %s23
    %s43 = sphi 0, %s43
    %s45 = sphi 0, %s43
    %s46 = sphi 0, %s45
    %s60 = sphi 0, %s46
    %s64 = sphi 0, %s64
    %s66 = sphi 0, %s64
    %s67 = sphi 0, %s66
    %s81 = sphi 0, %s67
    %s87 = sphi 0, %s89
    %s90 = sphi 0, %s87
    %s91 = sphi 0, %s90
    %s107 = sphi 0, %s91
  $region4: #{mnist_forward.3} parent=0 // loop_header_branch
    %12 = sbr.rel (%p10) target = $region8
  $region5: #{mnist_forward.3} parent=0 // loop_body
    %s14 = ssub.s32 %s9, 1
    %s15 = ssub.s32 %s9, 2
    %s16 = sadd.s32 %s9, 1
    %s17 = ssub.s32 %s9, %s16
    %p18 = scmp.eq.s32.totalorder %s17, 0
    %s20 = sadd.s32 %s19, 1
    %s21 = scalar_select %p18, %s19, %s20
    %p24 = pneg %p18
    %p25 = scmp.eq.s32.totalorder %s9, 1
    %p26 = por %p24, %p25
    %p27 = scmp.ne.s32.totalorder %s19, %s22
    %p28 = scmp.eq.s32.totalorder %s9, 0
    %p29 = por %p27, %p28
    %p30 = scmp.ne.s32.totalorder %s19, %s22
    %p31 = scmp.eq.s32.totalorder %s14, 1
    %p32 = por %p30, %p31
    %p33 = scmp.ne.s32.totalorder %s22, %s23
    %p34 = scmp.eq.s32.totalorder %s14, 0
    %p35 = por %p33, %p34
    %p36 = scmp.ne.s32.totalorder %s22, %s23
    %p37 = scmp.eq.s32.totalorder %s15, 1
    %p38 = por %p36, %p37
    %p40 = scmp.ne.s32.totalorder %s23, %s39
    %p41 = scmp.eq.s32.totalorder %s15, 0
    %p42 = por %p40, %p41
    %s44 = sadd.s32 %s43, 1
    %p47 = scmp.eq.s32.totalorder %s9, 1
    %p48 = scmp.ne.s32.totalorder %s43, %s45
    %p49 = scmp.eq.s32.totalorder %s9, 0
    %p50 = por %p48, %p49
    %p51 = scmp.ne.s32.totalorder %s43, %s45
    %p52 = scmp.eq.s32.totalorder %s14, 1
    %p53 = por %p51, %p52
    %p54 = scmp.ne.s32.totalorder %s45, %s46
    %p55 = scmp.eq.s32.totalorder %s14, 0
    %p56 = por %p54, %p55
    %p57 = scmp.ne.s32.totalorder %s45, %s46
    %p58 = scmp.eq.s32.totalorder %s15, 1
    %p59 = por %p57, %p58
    %p61 = scmp.ne.s32.totalorder %s46, %s60
    %p62 = scmp.eq.s32.totalorder %s15, 0
    %p63 = por %p61, %p62
    %s65 = sadd.s32 %s64, 1
    %p68 = scmp.eq.s32.totalorder %s9, 1
    %p69 = scmp.ne.s32.totalorder %s64, %s66
    %p70 = scmp.eq.s32.totalorder %s9, 0
    %p71 = por %p69, %p70
    %p72 = scmp.ne.s32.totalorder %s64, %s66
    %p73 = scmp.eq.s32.totalorder %s14, 1
    %p74 = por %p72, %p73
    %p75 = scmp.ne.s32.totalorder %s66, %s67
    %p76 = scmp.eq.s32.totalorder %s14, 0
    %p77 = por %p75, %p76
    %p78 = scmp.ne.s32.totalorder %s66, %s67
    %p79 = scmp.eq.s32.totalorder %s15, 1
    %p80 = por %p78, %p79
    %p82 = scmp.ne.s32.totalorder %s67, %s81
    %p83 = scmp.eq.s32.totalorder %s15, 0
    %p84 = por %p82, %p83
    %s85 = ssub.s32 %s9, %s16
    %p86 = scmp.eq.s32.totalorder %s85, 0
    %s88 = sadd.s32 %s87, 1
    %s89 = scalar_select %p86, %s87, %s88
    %p92 = pneg %p86
    %p93 = scmp.eq.s32.totalorder %s9, 1
    %p94 = por %p92, %p93
    %p95 = scmp.ne.s32.totalorder %s87, %s90
    %p96 = scmp.eq.s32.totalorder %s9, 0
    %p97 = por %p95, %p96
    %p98 = scmp.ne.s32.totalorder %s87, %s90
    %p99 = scmp.eq.s32.totalorder %s14, 1
    %p100 = por %p98, %p99
    %p101 = scmp.ne.s32.totalorder %s90, %s91
    %p102 = scmp.eq.s32.totalorder %s14, 0
    %p103 = por %p101, %p102
    %p104 = scmp.ne.s32.totalorder %s90, %s91
    %p105 = scmp.eq.s32.totalorder %s15, 1
    %p106 = por %p104, %p105
    %p108 = scmp.ne.s32.totalorder %s91, %s107
    %p109 = scmp.eq.s32.totalorder %s15, 0
    %p110 = por %p108, %p109
    %p111 = scmp.le.s32.totalorder 1, %s9
    %p112 = scmp.lt.s32.totalorder %s9, 3
    %p113 = pnand %p111, %p112
    %p114 = pneg %p113
    // Predicated region
    $region9: #{mnist_forward.3} parent=5 // pred_check
      _
    $region10: #{mnist_forward.3} parent=5 // pred_check_branch
      %116 = sbr.rel (%p113) target = $region12
    $region11: #{mnist_forward.3} parent=5 // pred_region
      %s117 = ssub.s32 %s9, 1
      // Predicated region
      $region13: #{mnist_forward.3} parent=11 // pred_check
        %p118 = pneg %p56
      $region14: #{mnist_forward.3} parent=11 // pred_check_branch
        %120 = sbr.rel (%p118) target = $region16
      $region15: #{mnist_forward.3} parent=11 // pred_region
        _
      $region16: #{mnist_forward.3} parent=11 // pred_fallthru
        _
      // Predicated region
      $region17: #{mnist_forward.3} parent=11 // pred_check
        %p121 = pneg %p77
      $region18: #{mnist_forward.3} parent=11 // pred_check_branch
        %123 = sbr.rel (%p121) target = $region20
      $region19: #{mnist_forward.3} parent=11 // pred_region
        _
      $region20: #{mnist_forward.3} parent=11 // pred_fallthru
        _
    $region12: #{mnist_forward.3} parent=5 // pred_fallthru
      _
    %p124 = scmp.lt.s32.totalorder %s9, 2
    // Predicated region
    $region21: #{mnist_forward.3} parent=5 // pred_check
      %p125 = pneg %p124
    $region22: #{mnist_forward.3} parent=5 // pred_check_branch
      %127 = sbr.rel (%p125) target = $region24
    $region23: #{mnist_forward.3} parent=5 // pred_region
      // Predicated region
      $region25: #{mnist_forward.3} parent=23 // pred_check
        %p128 = pneg %p29
      $region26: #{mnist_forward.3} parent=23 // pred_check_branch
        %130 = sbr.rel (%p128) target = $region28
      $region27: #{mnist_forward.3} parent=23 // pred_region
        %s131 = smul.u32 72, %s9
        %p132 = scmp.lt.s32.totalorder %s131, 143
        %s133 = scalar_select %p132, %s131, 143
        %s134 = smul.addr %s133, 4
        %s135 = scalar_lea.vmem %s0, %s134
        %s136 = smul.u32 72, %s9
      $region28: #{mnist_forward.3} parent=23 // pred_fallthru
        _
    $region24: #{mnist_forward.3} parent=5 // pred_fallthru
      _
    %p137 = scmp.le.s32.totalorder 1, %s9
    %p138 = scmp.lt.s32.totalorder %s9, 3
    %p139 = pnand %p137, %p138
    %p140 = pneg %p139
    // Predicated region
    $region29: #{mnist_forward.3} parent=5 // pred_check
      _
    $region30: #{mnist_forward.3} parent=5 // pred_check_branch
      %142 = sbr.rel (%p139) target = $region32
    $region31: #{mnist_forward.3} parent=5 // pred_region
      %s143 = ssub.s32 %s9, 1
      %s144 = smul.u32 72, %s14
      %p145 = scmp.lt.s32.totalorder %s144, 143
      %s146 = scalar_select %p145, %s144, 143
      %s147 = smul.addr %s146, 4
      %s148 = scalar_lea.vmem %s0, %s147
      %p149 = pneg %p35
      %p150 = pneg %p32
      %p151 = pneg %p56
      %p152 = pneg %p53
      %p153 = pneg %p77
      %p154 = pneg %p74
      %p155 = pneg %p103
      %p156 = pneg %p100
      %s157 = smul.u32 18, %s14
      %p158 = scmp.lt.s32.totalorder %s157, 35
      %s159 = scalar_select %p158, %s157, 35
      %s160 = smul.addr %s159, 4
      %s161 = scalar_lea.vmem %s3, %s160
      %s162 = smul.u32 72, %s14
      %p163 = scmp.lt.s32.totalorder %s162, 143
      %s164 = scalar_select %p163, %s162, 143
      %s165 = smul.addr %s164, 4
      %s166 = scalar_lea.vmem %s0, %s165
      %s167 = smul.u32 72, %s14
      %s168 = smul.u32 18, %s14
      %p169 = scmp.lt.s32.totalorder %s168, 35
      %s170 = scalar_select %p169, %s168, 35
      %s171 = smul.addr %s170, 4
      %s172 = scalar_lea.vmem %s3, %s171
      %s173 = smul.u32 18, %s14
      %v175 = vld [vmem:[%s166] sm:$0xf]
      %v176 = vld [vmem:[%s166 + $0x4] sm:$0xf]
      %v177 = vld [vmem:[%s166 + $0x8] sm:$0xf]
      %v178 = vld [vmem:[%s166 + $0xc] sm:$0xf]
      %v179 = vld [vmem:[%s166 + $0x10] sm:$0xf]
      %v180 = vld [vmem:[%s166 + $0x14] sm:$0xf]
      %v181 = vld [vmem:[%s166 + $0x18] sm:$0xf]
      %v182 = vld [vmem:[%s166 + $0x1c] sm:$0xf]
      %v183 = vld [vmem:[%s166 + $0x20] sm:$0xf]
      %v184 = vld [vmem:[%s166 + $0x24] sm:$0xf]
      %v185 = vld [vmem:[%s166 + $0x28] sm:$0xf]
      %v186 = vld [vmem:[%s166 + $0x2c] sm:$0xf]
      %v187 = vld [vmem:[%s166 + $0x30] sm:$0xf]
      %v188 = vld [vmem:[%s166 + $0x34] sm:$0xf]
      %v189 = vld [vmem:[%s166 + $0x38] sm:$0xf]
      %v190 = vld [vmem:[%s166 + $0x3c] sm:$0xf]
      %v191 = vld [vmem:[%s166 + $0x40] sm:$0xf]
      %v192 = vld [vmem:[%s166 + $0x44] sm:$0xf]
      %v193 = vld [vmem:[%s166 + $0x48] sm:$0xf]
      %v194 = vld [vmem:[%s166 + $0x4c] sm:$0xf]
      %v195 = vld [vmem:[%s166 + $0x50] sm:$0xf]
      %v196 = vld [vmem:[%s166 + $0x54] sm:$0xf]
      %v197 = vld [vmem:[%s166 + $0x58] sm:$0xf]
      %v198 = vld [vmem:[%s166 + $0x5c] sm:$0xf]
      %v199 = vld [vmem:[%s166 + $0x60] sm:$0xf]
      %v200 = vld [vmem:[%s166 + $0x64] sm:$0xf]
      %v201 = vld [vmem:[%s166 + $0x68] sm:$0xf]
      %v202 = vld [vmem:[%s166 + $0x6c] sm:$0xf]
      %v203 = vld [vmem:[%s166 + $0x70] sm:$0xf]
      %v204 = vld [vmem:[%s166 + $0x74] sm:$0xf]
      %v205 = vld [vmem:[%s166 + $0x78] sm:$0xf]
      %v206 = vld [vmem:[%s166 + $0x7c] sm:$0xf]
      %v207 = vld [vmem:[%s166 + $0x80] sm:$0xf]
      %v208 = vld [vmem:[%s166 + $0x84] sm:$0xf]
      %v209 = vld [vmem:[%s166 + $0x88] sm:$0xf]
      %v210 = vld [vmem:[%s166 + $0x8c] sm:$0xf]
      %v211 = vld [vmem:[%s166 + $0x90] sm:$0xf]
      %v212 = vld [vmem:[%s166 + $0x94] sm:$0xf]
      %v213 = vld [vmem:[%s166 + $0x98] sm:$0xf]
      %v214 = vld [vmem:[%s166 + $0x9c] sm:$0xf]
      %v215 = vld [vmem:[%s166 + $0xa0] sm:$0xf]
      %v216 = vld [vmem:[%s166 + $0xa4] sm:$0xf]
      %v217 = vld [vmem:[%s166 + $0xa8] sm:$0xf]
      %v218 = vld [vmem:[%s166 + $0xac] sm:$0xf]
      %v219 = vld [vmem:[%s166 + $0xb0] sm:$0xf]
      %v220 = vld [vmem:[%s166 + $0xb4] sm:$0xf]
      %v221 = vld [vmem:[%s166 + $0xb8] sm:$0xf]
      %v222 = vld [vmem:[%s166 + $0xbc] sm:$0xf]
      %v223 = vld [vmem:[%s166 + $0xc0] sm:$0xf]
      %v224 = vld [vmem:[%s166 + $0xc4] sm:$0xf]
      %v225 = vld [vmem:[%s166 + $0xc8] sm:$0xf]
      %v226 = vld [vmem:[%s166 + $0xcc] sm:$0xf]
      %v227 = vld [vmem:[%s166 + $0xd0] sm:$0xf]
      %v228 = vld [vmem:[%s166 + $0xd4] sm:$0xf]
      %v229 = vld [vmem:[%s166 + $0xd8] sm:$0xf]
      %v230 = vld [vmem:[%s166 + $0xdc] sm:$0xf]
      %v231 = vld [vmem:[%s166 + $0xe0] sm:$0xf]
      %v232 = vld [vmem:[%s166 + $0xe4] sm:$0xf]
      %v233 = vld [vmem:[%s166 + $0xe8] sm:$0xf]
      %v234 = vld [vmem:[%s166 + $0xec] sm:$0xf]
      %v235 = vld [vmem:[%s166 + $0xf0] sm:$0xf]
      %v236 = vld [vmem:[%s166 + $0xf4] sm:$0xf]
      %v237 = vld [vmem:[%s166 + $0xf8] sm:$0xf]
      %v238 = vld [vmem:[%s166 + $0xfc] sm:$0xf]
      %v239 = vld [vmem:[%s166 + $0x100] sm:$0xf]
      %v240 = vld [vmem:[%s166 + $0x104] sm:$0xf]
      %v241 = vld [vmem:[%s166 + $0x108] sm:$0xf]
      %v242 = vld [vmem:[%s166 + $0x10c] sm:$0xf]
      %v243 = vld [vmem:[%s166 + $0x110] sm:$0xf]
      %v244 = vld [vmem:[%s166 + $0x114] sm:$0xf]
      %v245 = vld [vmem:[%s166 + $0x118] sm:$0xf]
      %v246 = vld [vmem:[%s166 + $0x11c] sm:$0xf]
      %v247 = vld [vmem:[%s1] sm:$0xf]
      %v248 = vld [vmem:[%s1 + $0x4] sm:$0xf]
      %v249 = vld [vmem:[%s1 + $0x8] sm:$0xf]
      %v250 = vld [vmem:[%s1 + $0xc] sm:$0xf]
      %v251 = vld [vmem:[%s2] sm:$0x1]
      %v253 = vlaneseq
      %v254 = vshrl.u32 %v253, 7
      %v255 = vsub.s32 0, %v254
      %v256 = vrot.slane %v251, %v255
      %v330 = vunpack.c.l.b16 %v175
      %v331 = vunpack.c.l.b16 %v176
      %v332 = vunpack.c.l.b16 %v177
      %v333 = vunpack.c.l.b16 %v178
      %v334 = vunpack.c.l.b16 %v179
      %v335 = vunpack.c.l.b16 %v180
      %v336 = vunpack.c.l.b16 %v181
      %v337 = vunpack.c.l.b16 %v182
      %v338 = vunpack.c.l.b16 %v183
      %v339 = vunpack.c.l.b16 %v184
      %v340 = vunpack.c.l.b16 %v185
      %v341 = vunpack.c.l.b16 %v186
      %v342 = vunpack.c.l.b16 %v187
      %v343 = vunpack.c.l.b16 %v188
      %v344 = vunpack.c.l.b16 %v189
      %v345 = vunpack.c.l.b16 %v190
      %v346 = vunpack.c.l.b16 %v191
      %v347 = vunpack.c.l.b16 %v192
      %v348 = vunpack.c.l.b16 %v193
      %v349 = vunpack.c.l.b16 %v194
      %v350 = vunpack.c.l.b16 %v195
      %v351 = vunpack.c.l.b16 %v196
      %v352 = vunpack.c.l.b16 %v197
      %v353 = vunpack.c.l.b16 %v198
      %v354 = vunpack.c.l.b16 %v199
      %v355 = vunpack.c.l.b16 %v200
      %v356 = vunpack.c.l.b16 %v201
      %v357 = vunpack.c.l.b16 %v202
      %v358 = vunpack.c.l.b16 %v203
      %v359 = vunpack.c.l.b16 %v204
      %v360 = vunpack.c.l.b16 %v205
      %v361 = vunpack.c.l.b16 %v206
      %v362 = vunpack.c.l.b16 %v207
      %v363 = vunpack.c.l.b16 %v208
      %v364 = vunpack.c.l.b16 %v209
      %v365 = vunpack.c.l.b16 %v210
      %v366 = vunpack.c.l.b16 %v211
      %v367 = vunpack.c.l.b16 %v212
      %v368 = vunpack.c.l.b16 %v213
      %v369 = vunpack.c.l.b16 %v214
      %v370 = vunpack.c.l.b16 %v215
      %v371 = vunpack.c.l.b16 %v216
      %v372 = vunpack.c.l.b16 %v217
      %v373 = vunpack.c.l.b16 %v218
      %v374 = vunpack.c.l.b16 %v219
      %v375 = vunpack.c.l.b16 %v220
      %v376 = vunpack.c.l.b16 %v221
      %v377 = vunpack.c.l.b16 %v222
      %v378 = vunpack.c.l.b16 %v223
      %v379 = vunpack.c.l.b16 %v224
      %v380 = vunpack.c.l.b16 %v225
      %v381 = vunpack.c.l.b16 %v226
      %v382 = vunpack.c.l.b16 %v227
      %v383 = vunpack.c.l.b16 %v228
      %v384 = vunpack.c.l.b16 %v229
      %v385 = vunpack.c.l.b16 %v230
      %v386 = vunpack.c.l.b16 %v231
      %v387 = vunpack.c.l.b16 %v232
      %v388 = vunpack.c.l.b16 %v233
      %v389 = vunpack.c.l.b16 %v234
      %v390 = vunpack.c.l.b16 %v235
      %v391 = vunpack.c.l.b16 %v236
      %v392 = vunpack.c.l.b16 %v237
      %v393 = vunpack.c.l.b16 %v238
      %v394 = vunpack.c.l.b16 %v239
      %v395 = vunpack.c.l.b16 %v240
      %v396 = vunpack.c.l.b16 %v241
      %v397 = vunpack.c.l.b16 %v242
      %v398 = vunpack.c.l.b16 %v243
      %v399 = vunpack.c.l.b16 %v244
      %v400 = vunpack.c.l.b16 %v245
      %v401 = vunpack.c.l.b16 %v246
      %v402 = vpack.c.b16 %v331, %v330
      %v403 = vpack.c.b16 %v333, %v332
      %v404 = vpack.c.b16 %v335, %v334
      %v405 = vpack.c.b16 %v337, %v336
      %v406 = vpack.c.b16 %v339, %v338
      %v407 = vpack.c.b16 %v341, %v340
      %v408 = vpack.c.b16 %v343, %v342
      %v409 = vpack.c.b16 %v345, %v344
      %v410 = vpack.c.b16 %v347, %v346
      %v411 = vpack.c.b16 %v349, %v348
      %v412 = vpack.c.b16 %v351, %v350
      %v413 = vpack.c.b16 %v353, %v352
      %v414 = vpack.c.b16 %v355, %v354
      %v415 = vpack.c.b16 %v357, %v356
      %v416 = vpack.c.b16 %v359, %v358
      %v417 = vpack.c.b16 %v361, %v360
      %v418 = vpack.c.b16 %v363, %v362
      %v419 = vpack.c.b16 %v365, %v364
      %v420 = vpack.c.b16 %v367, %v366
      %v421 = vpack.c.b16 %v369, %v368
      %v422 = vpack.c.b16 %v371, %v370
      %v423 = vpack.c.b16 %v373, %v372
      %v424 = vpack.c.b16 %v375, %v374
      %v425 = vpack.c.b16 %v377, %v376
      %v426 = vpack.c.b16 %v379, %v378
      %v427 = vpack.c.b16 %v381, %v380
      %v428 = vpack.c.b16 %v383, %v382
      %v429 = vpack.c.b16 %v385, %v384
      %v430 = vpack.c.b16 %v387, %v386
      %v431 = vpack.c.b16 %v389, %v388
      %v432 = vpack.c.b16 %v391, %v390
      %v433 = vpack.c.b16 %v393, %v392
      %v434 = vpack.c.b16 %v395, %v394
      %v435 = vpack.c.b16 %v397, %v396
      %v436 = vpack.c.b16 %v399, %v398
      %v437 = vpack.c.b16 %v401, %v400
      %v442 = vunpack.c.l.b16 %v247
      %v443 = vunpack.c.l.b16 %v248
      %v444 = vunpack.c.l.b16 %v249
      %v445 = vunpack.c.l.b16 %v250
      %v446 = vpack.c.b16 %v443, %v442
      %v447 = vpack.c.b16 %v445, %v444
      %vm450 = vcmask 261120
      %v452 = vsel %vm450, %v402, 0
      %v455 = vsel %vm450, %v403, 0
      %v458 = vsel %vm450, %v404, 0
      %v461 = vsel %vm450, %v405, 0
      %v464 = vsel %vm450, %v406, 0
      %v467 = vsel %vm450, %v407, 0
      %v470 = vsel %vm450, %v408, 0
      %v473 = vsel %vm450, %v409, 0
      %v476 = vsel %vm450, %v410, 0
      %v479 = vsel %vm450, %v411, 0
      %v482 = vsel %vm450, %v412, 0
      %v485 = vsel %vm450, %v413, 0
      %v488 = vsel %vm450, %v414, 0
      %v491 = vsel %vm450, %v415, 0
      %v494 = vsel %vm450, %v416, 0
      %v497 = vsel %vm450, %v417, 0
      %v500 = vsel %vm450, %v418, 0
      %v503 = vsel %vm450, %v419, 0
      %v506 = vsel %vm450, %v420, 0
      %v509 = vsel %vm450, %v421, 0
      %v512 = vsel %vm450, %v422, 0
      %v515 = vsel %vm450, %v423, 0
      %v518 = vsel %vm450, %v424, 0
      %v521 = vsel %vm450, %v425, 0
      %v524 = vsel %vm450, %v426, 0
      %v527 = vsel %vm450, %v427, 0
      %v530 = vsel %vm450, %v428, 0
      %v533 = vsel %vm450, %v429, 0
      %v536 = vsel %vm450, %v430, 0
      %v539 = vsel %vm450, %v431, 0
      %v542 = vsel %vm450, %v432, 0
      %v545 = vsel %vm450, %v433, 0
      %v548 = vsel %vm450, %v434, 0
      %v551 = vsel %vm450, %v435, 0
      %v554 = vsel %vm450, %v436, 0
      %v557 = vsel %vm450, %v437, 0
      %559 = vmatprep.subr.bf16.mxu0 0
      %560 = vmatpush1.bf16.msra.mxu0 %v446
      %561 = vmatprep.subr.bf16.mxu0 0
      %562 = vmatpush1.bf16.msra.mxu0 %v447
      %563 = vmatprep.subr.bf16.mxu0 0
      %564 = vmatpush1.bf16.msra.mxu0 0
      %565 = vmatprep.subr.bf16.mxu0 0
      %566 = vmatpush1.bf16.msra.mxu0 0
      %567 = vmatprep.subr.bf16.mxu0 0
      %568 = vmatpush1.bf16.msra.mxu0 0
      %569 = vmatprep.subr.bf16.mxu0 0
      %570 = vmatpush1.bf16.msra.mxu0 0
      %571 = vmatprep.subr.bf16.mxu0 0
      %572 = vmatpush1.bf16.msra.mxu0 0
      %573 = vmatprep.subr.bf16.mxu0 0
      %574 = vmatpush1.bf16.msra.mxu0 0
      %575 = vmatprep.subr.bf16.mxu0 0
      %576 = vmatpush1.bf16.msra.mxu0 0
      %577 = vmatprep.subr.bf16.mxu0 0
      %578 = vmatpush1.bf16.msra.mxu0 0
      %579 = vmatprep.subr.bf16.mxu0 0
      %580 = vmatpush1.bf16.msra.mxu0 0
      %581 = vmatprep.subr.bf16.mxu0 0
      %582 = vmatpush1.bf16.msra.mxu0 0
      %583 = vmatprep.subr.bf16.mxu0 0
      %584 = vmatpush1.bf16.msra.mxu0 0
      %585 = vmatprep.subr.bf16.mxu0 0
      %586 = vmatpush1.bf16.msra.mxu0 0
      %587 = vmatprep.subr.bf16.mxu0 0
      %588 = vmatpush1.bf16.msra.mxu0 0
      %589 = vmatprep.subr.bf16.mxu0 0
      %590 = vmatpush1.bf16.msra.mxu0 0
      %591 = vmatprep.mubr.bf16.mxu0 0
      %592 = vmatmul.mubr.bf16.gmra.mrb[0].mxu0 %v452
      %v593 = vpop.f32.mrb[0].mxu0
      %v594 = vadd.f32 %v256, %v593
      %v595 = vpop.f32.mrb[0].mxu0
      %v596 = vpop.f32.mrb[0].mxu0
      %v597 = vadd.f32 %v256, %v596
      %v598 = vpop.f32.mrb[0].mxu0
      %599 = vmatprep.mubr.bf16.mxu0 0
      %600 = vmatmul.mubr.bf16.gmra.mrb[0].mxu0 %v455
      %v601 = vpop.f32.mrb[0].mxu0
      %v602 = vadd.f32 %v256, %v601
      %v603 = vpop.f32.mrb[0].mxu0
      %v604 = vpop.f32.mrb[0].mxu0
      %v605 = vadd.f32 %v256, %v604
      %v606 = vpop.f32.mrb[0].mxu0
      %607 = vmatprep.mubr.bf16.mxu0 0
      %608 = vmatmul.mubr.bf16.gmra.mrb[0].mxu0 %v458
      %v609 = vpop.f32.mrb[0].mxu0
      %v610 = vadd.f32 %v256, %v609
      %v611 = vpop.f32.mrb[0].mxu0
      %v612 = vpop.f32.mrb[0].mxu0
      %v613 = vadd.f32 %v256, %v612
      %v614 = vpop.f32.mrb[0].mxu0
      %615 = vmatprep.mubr.bf16.mxu0 0
      %616 = vmatmul.mubr.bf16.gmra.mrb[0].mxu0 %v461
      %v617 = vpop.f32.mrb[0].mxu0
      %v618 = vadd.f32 %v256, %v617
      %v619 = vpop.f32.mrb[0].mxu0
      %v620 = vpop.f32.mrb[0].mxu0
      %v621 = vadd.f32 %v256, %v620
      %v622 = vpop.f32.mrb[0].mxu0
      %623 = vmatprep.mubr.bf16.mxu0 0
      %624 = vmatmul.mubr.bf16.gmra.mrb[0].mxu0 %v464
      %v625 = vpop.f32.mrb[0].mxu0
      %v626 = vadd.f32 %v256, %v625
      %v627 = vpop.f32.mrb[0].mxu0
      %v628 = vpop.f32.mrb[0].mxu0
      %v629 = vadd.f32 %v256, %v628
      %v630 = vpop.f32.mrb[0].mxu0
      %631 = vmatprep.mubr.bf16.mxu0 0
      %632 = vmatmul.mubr.bf16.gmra.mrb[0].mxu0 %v467
      %v633 = vpop.f32.mrb[0].mxu0
      %v634 = vadd.f32 %v256, %v633
      %v635 = vpop.f32.mrb[0].mxu0
      %v636 = vpop.f32.mrb[0].mxu0
      %v637 = vadd.f32 %v256, %v636
      %v638 = vpop.f32.mrb[0].mxu0
      %639 = vmatprep.mubr.bf16.mxu0 0
      %640 = vmatmul.mubr.bf16.gmra.mrb[0].mxu0 %v470
      %v641 = vpop.f32.mrb[0].mxu0
      %v642 = vadd.f32 %v256, %v641
      %v643 = vpop.f32.mrb[0].mxu0
      %v644 = vpop.f32.mrb[0].mxu0
      %v645 = vadd.f32 %v256, %v644
      %v646 = vpop.f32.mrb[0].mxu0
      %647 = vmatprep.mubr.bf16.mxu0 0
      %648 = vmatmul.mubr.bf16.gmra.mrb[0].mxu0 %v473
      %v649 = vpop.f32.mrb[0].mxu0
      %v650 = vadd.f32 %v256, %v649
      %v651 = vpop.f32.mrb[0].mxu0
      %v652 = vpop.f32.mrb[0].mxu0
      %v653 = vadd.f32 %v256, %v652
      %v654 = vpop.f32.mrb[0].mxu0
      %655 = vmatprep.mubr.bf16.mxu0 0
      %656 = vmatmul.mubr.bf16.gmra.mrb[0].mxu0 %v476
      %v657 = vpop.f32.mrb[0].mxu0
      %v658 = vadd.f32 %v256, %v657
      %v659 = vpop.f32.mrb[0].mxu0
      %v660 = vpop.f32.mrb[0].mxu0
      %v661 = vadd.f32 %v256, %v660
      %v662 = vpop.f32.mrb[0].mxu0
      %663 = vmatprep.mubr.bf16.mxu0 0
      %664 = vmatmul.mubr.bf16.gmra.mrb[0].mxu0 %v479
      %v665 = vpop.f32.mrb[0].mxu0
      %v666 = vadd.f32 %v256, %v665
      %v667 = vpop.f32.mrb[0].mxu0
      %v668 = vpop.f32.mrb[0].mxu0
      %v669 = vadd.f32 %v256, %v668
      %v670 = vpop.f32.mrb[0].mxu0
      %671 = vmatprep.mubr.bf16.mxu0 0
      %672 = vmatmul.mubr.bf16.gmra.mrb[0].mxu0 %v482
      %v673 = vpop.f32.mrb[0].mxu0
      %v674 = vadd.f32 %v256, %v673
      %v675 = vpop.f32.mrb[0].mxu0
      %v676 = vpop.f32.mrb[0].mxu0
      %v677 = vadd.f32 %v256, %v676
      %v678 = vpop.f32.mrb[0].mxu0
      %679 = vmatprep.mubr.bf16.mxu0 0
      %680 = vmatmul.mubr.bf16.gmra.mrb[0].mxu0 %v485
      %v681 = vpop.f32.mrb[0].mxu0
      %v682 = vadd.f32 %v256, %v681
      %v683 = vpop.f32.mrb[0].mxu0
      %v684 = vpop.f32.mrb[0].mxu0
      %v685 = vadd.f32 %v256, %v684
      %v686 = vpop.f32.mrb[0].mxu0
      %687 = vmatprep.mubr.bf16.mxu0 0
      %688 = vmatmul.mubr.bf16.gmra.mrb[0].mxu0 %v488
      %v689 = vpop.f32.mrb[0].mxu0
      %v690 = vadd.f32 %v256, %v689
      %v691 = vpop.f32.mrb[0].mxu0
      %v692 = vpop.f32.mrb[0].mxu0
      %v693 = vadd.f32 %v256, %v692
      %v694 = vpop.f32.mrb[0].mxu0
      %695 = vmatprep.mubr.bf16.mxu0 0
      %696 = vmatmul.mubr.bf16.gmra.mrb[0].mxu0 %v491
      %v697 = vpop.f32.mrb[0].mxu0
      %v698 = vadd.f32 %v256, %v697
      %v699 = vpop.f32.mrb[0].mxu0
      %v700 = vpop.f32.mrb[0].mxu0
      %v701 = vadd.f32 %v256, %v700
      %v702 = vpop.f32.mrb[0].mxu0
      %703 = vmatprep.mubr.bf16.mxu0 0
      %704 = vmatmul.mubr.bf16.gmra.mrb[0].mxu0 %v494
      %v705 = vpop.f32.mrb[0].mxu0
      %v706 = vadd.f32 %v256, %v705
      %v707 = vpop.f32.mrb[0].mxu0
      %v708 = vpop.f32.mrb[0].mxu0
      %v709 = vadd.f32 %v256, %v708
      %v710 = vpop.f32.mrb[0].mxu0
      %711 = vmatprep.mubr.bf16.mxu0 0
      %712 = vmatmul.mubr.bf16.gmra.mrb[0].mxu0 %v497
      %v713 = vpop.f32.mrb[0].mxu0
      %v714 = vadd.f32 %v256, %v713
      %v715 = vpop.f32.mrb[0].mxu0
      %v716 = vpop.f32.mrb[0].mxu0
      %v717 = vadd.f32 %v256, %v716
      %v718 = vpop.f32.mrb[0].mxu0
      %719 = vmatprep.mubr.bf16.mxu0 0
      %720 = vmatmul.mubr.bf16.gmra.mrb[0].mxu0 %v500
      %v721 = vpop.f32.mrb[0].mxu0
      %v722 = vadd.f32 %v256, %v721
      %v723 = vpop.f32.mrb[0].mxu0
      %v724 = vpop.f32.mrb[0].mxu0
      %v725 = vadd.f32 %v256, %v724
      %v726 = vpop.f32.mrb[0].mxu0
      %727 = vmatprep.mubr.bf16.mxu0 0
      %728 = vmatmul.mubr.bf16.gmra.mrb[0].mxu0 %v503
      %v729 = vpop.f32.mrb[0].mxu0
      %v730 = vadd.f32 %v256, %v729
      %v731 = vpop.f32.mrb[0].mxu0
      %v732 = vpop.f32.mrb[0].mxu0
      %v733 = vadd.f32 %v256, %v732
      %v734 = vpop.f32.mrb[0].mxu0
      %735 = vmatprep.mubr.bf16.mxu0 0
      %736 = vmatmul.mubr.bf16.gmra.mrb[0].mxu0 %v506
      %v737 = vpop.f32.mrb[0].mxu0
      %v738 = vadd.f32 %v256, %v737
      %v739 = vpop.f32.mrb[0].mxu0
      %v740 = vpop.f32.mrb[0].mxu0
      %v741 = vadd.f32 %v256, %v740
      %v742 = vpop.f32.mrb[0].mxu0
      %743 = vmatprep.mubr.bf16.mxu0 0
      %744 = vmatmul.mubr.bf16.gmra.mrb[0].mxu0 %v509
      %v745 = vpop.f32.mrb[0].mxu0
      %v746 = vadd.f32 %v256, %v745
      %v747 = vpop.f32.mrb[0].mxu0
      %v748 = vpop.f32.mrb[0].mxu0
      %v749 = vadd.f32 %v256, %v748
      %v750 = vpop.f32.mrb[0].mxu0
      %751 = vmatprep.mubr.bf16.mxu0 0
      %752 = vmatmul.mubr.bf16.gmra.mrb[0].mxu0 %v512
      %v753 = vpop.f32.mrb[0].mxu0
      %v754 = vadd.f32 %v256, %v753
      %v755 = vpop.f32.mrb[0].mxu0
      %v756 = vpop.f32.mrb[0].mxu0
      %v757 = vadd.f32 %v256, %v756
      %v758 = vpop.f32.mrb[0].mxu0
      %759 = vmatprep.mubr.bf16.mxu0 0
      %760 = vmatmul.mubr.bf16.gmra.mrb[0].mxu0 %v515
      %v761 = vpop.f32.mrb[0].mxu0
      %v762 = vadd.f32 %v256, %v761
      %v763 = vpop.f32.mrb[0].mxu0
      %v764 = vpop.f32.mrb[0].mxu0
      %v765 = vadd.f32 %v256, %v764
      %v766 = vpop.f32.mrb[0].mxu0
      %767 = vmatprep.mubr.bf16.mxu0 0
      %768 = vmatmul.mubr.bf16.gmra.mrb[0].mxu0 %v518
      %v769 = vpop.f32.mrb[0].mxu0
      %v770 = vadd.f32 %v256, %v769
      %v771 = vpop.f32.mrb[0].mxu0
      %v772 = vpop.f32.mrb[0].mxu0
      %v773 = vadd.f32 %v256, %v772
      %v774 = vpop.f32.mrb[0].mxu0
      %775 = vmatprep.mubr.bf16.mxu0 0
      %776 = vmatmul.mubr.bf16.gmra.mrb[0].mxu0 %v521
      %v777 = vpop.f32.mrb[0].mxu0
      %v778 = vadd.f32 %v256, %v777
      %v779 = vpop.f32.mrb[0].mxu0
      %v780 = vpop.f32.mrb[0].mxu0
      %v781 = vadd.f32 %v256, %v780
      %v782 = vpop.f32.mrb[0].mxu0
      %783 = vmatprep.mubr.bf16.mxu0 0
      %784 = vmatmul.mubr.bf16.gmra.mrb[0].mxu0 %v524
      %v785 = vpop.f32.mrb[0].mxu0
      %v786 = vadd.f32 %v256, %v785
      %v787 = vpop.f32.mrb[0].mxu0
      %v788 = vpop.f32.mrb[0].mxu0
      %v789 = vadd.f32 %v256, %v788
      %v790 = vpop.f32.mrb[0].mxu0
      %791 = vmatprep.mubr.bf16.mxu0 0
      %792 = vmatmul.mubr.bf16.gmra.mrb[0].mxu0 %v527
      %v793 = vpop.f32.mrb[0].mxu0
      %v794 = vadd.f32 %v256, %v793
      %v795 = vpop.f32.mrb[0].mxu0
      %v796 = vpop.f32.mrb[0].mxu0
      %v797 = vadd.f32 %v256, %v796
      %v798 = vpop.f32.mrb[0].mxu0
      %799 = vmatprep.mubr.bf16.mxu0 0
      %800 = vmatmul.mubr.bf16.gmra.mrb[0].mxu0 %v530
      %v801 = vpop.f32.mrb[0].mxu0
      %v802 = vadd.f32 %v256, %v801
      %v803 = vpop.f32.mrb[0].mxu0
      %v804 = vpop.f32.mrb[0].mxu0
      %v805 = vadd.f32 %v256, %v804
      %v806 = vpop.f32.mrb[0].mxu0
      %807 = vmatprep.mubr.bf16.mxu0 0
      %808 = vmatmul.mubr.bf16.gmra.mrb[0].mxu0 %v533
      %v809 = vpop.f32.mrb[0].mxu0
      %v810 = vadd.f32 %v256, %v809
      %v811 = vpop.f32.mrb[0].mxu0
      %v812 = vpop.f32.mrb[0].mxu0
      %v813 = vadd.f32 %v256, %v812
      %v814 = vpop.f32.mrb[0].mxu0
      %815 = vmatprep.mubr.bf16.mxu0 0
      %816 = vmatmul.mubr.bf16.gmra.mrb[0].mxu0 %v536
      %v817 = vpop.f32.mrb[0].mxu0
      %v818 = vadd.f32 %v256, %v817
      %v819 = vpop.f32.mrb[0].mxu0
      %v820 = vpop.f32.mrb[0].mxu0
      %v821 = vadd.f32 %v256, %v820
      %v822 = vpop.f32.mrb[0].mxu0
      %823 = vmatprep.mubr.bf16.mxu0 0
      %824 = vmatmul.mubr.bf16.gmra.mrb[0].mxu0 %v539
      %v825 = vpop.f32.mrb[0].mxu0
      %v826 = vadd.f32 %v256, %v825
      %v827 = vpop.f32.mrb[0].mxu0
      %v828 = vpop.f32.mrb[0].mxu0
      %v829 = vadd.f32 %v256, %v828
      %v830 = vpop.f32.mrb[0].mxu0
      %831 = vmatprep.mubr.bf16.mxu0 0
      %832 = vmatmul.mubr.bf16.gmra.mrb[0].mxu0 %v542
      %v833 = vpop.f32.mrb[0].mxu0
      %v834 = vadd.f32 %v256, %v833
      %v835 = vpop.f32.mrb[0].mxu0
      %v836 = vpop.f32.mrb[0].mxu0
      %v837 = vadd.f32 %v256, %v836
      %v838 = vpop.f32.mrb[0].mxu0
      %839 = vmatprep.mubr.bf16.mxu0 0
      %840 = vmatmul.mubr.bf16.gmra.mrb[0].mxu0 %v545
      %v841 = vpop.f32.mrb[0].mxu0
      %v842 = vadd.f32 %v256, %v841
      %v843 = vpop.f32.mrb[0].mxu0
      %v844 = vpop.f32.mrb[0].mxu0
      %v845 = vadd.f32 %v256, %v844
      %v846 = vpop.f32.mrb[0].mxu0
      %847 = vmatprep.mubr.bf16.mxu0 0
      %848 = vmatmul.mubr.bf16.gmra.mrb[0].mxu0 %v548
      %v849 = vpop.f32.mrb[0].mxu0
      %v850 = vadd.f32 %v256, %v849
      %v851 = vpop.f32.mrb[0].mxu0
      %v852 = vpop.f32.mrb[0].mxu0
      %v853 = vadd.f32 %v256, %v852
      %v854 = vpop.f32.mrb[0].mxu0
      %855 = vmatprep.mubr.bf16.mxu0 0
      %856 = vmatmul.mubr.bf16.gmra.mrb[0].mxu0 %v551
      %v857 = vpop.f32.mrb[0].mxu0
      %v858 = vadd.f32 %v256, %v857
      %v859 = vpop.f32.mrb[0].mxu0
      %v860 = vpop.f32.mrb[0].mxu0
      %v861 = vadd.f32 %v256, %v860
      %v862 = vpop.f32.mrb[0].mxu0
      %863 = vmatprep.mubr.bf16.mxu0 0
      %864 = vmatmul.mubr.bf16.gmra.mrb[0].mxu0 %v554
      %v865 = vpop.f32.mrb[0].mxu0
      %v866 = vadd.f32 %v256, %v865
      %v867 = vpop.f32.mrb[0].mxu0
      %v868 = vpop.f32.mrb[0].mxu0
      %v869 = vadd.f32 %v256, %v868
      %v870 = vpop.f32.mrb[0].mxu0
      %871 = vmatprep.mubr.bf16.mxu0 0
      %872 = vmatmul.mubr.bf16.gmra.mrb[0].mxu0 %v557
      %v873 = vpop.f32.mrb[0].mxu0
      %v874 = vadd.f32 %v256, %v873
      %v875 = vpop.f32.mrb[0].mxu0
      %v876 = vpop.f32.mrb[0].mxu0
      %v877 = vadd.f32 %v256, %v876
      %v878 = vpop.f32.mrb[0].mxu0
      %879 = vdwg.mxu0
      %v880 = vmax.f32 %v594, %v666
      %v881 = vmax.f32 %v597, %v669
      %v882 = vmax.f32 %v602, %v674
      %v883 = vmax.f32 %v605, %v677
      %v884 = vmax.f32 %v610, %v682
      %v885 = vmax.f32 %v613, %v685
      %v886 = vmax.f32 %v618, %v690
      %v887 = vmax.f32 %v621, %v693
      %v888 = vmax.f32 %v626, %v698
      %v889 = vmax.f32 %v629, %v701
      %v890 = vmax.f32 %v634, %v706
      %v891 = vmax.f32 %v637, %v709
      %v892 = vmax.f32 %v642, %v714
      %v893 = vmax.f32 %v645, %v717
      %v894 = vmax.f32 %v650, %v722
      %v895 = vmax.f32 %v653, %v725
      %v896 = vmax.f32 %v658, %v730
      %v897 = vmax.f32 %v661, %v733
      %v898 = vmax.f32 %v738, %v810
      %v899 = vmax.f32 %v741, %v813
      %v900 = vmax.f32 %v746, %v818
      %v901 = vmax.f32 %v749, %v821
      %v902 = vmax.f32 %v754, %v826
      %v903 = vmax.f32 %v757, %v829
      %v904 = vmax.f32 %v762, %v834
      %v905 = vmax.f32 %v765, %v837
      %v906 = vmax.f32 %v770, %v842
      %v907 = vmax.f32 %v773, %v845
      %v908 = vmax.f32 %v778, %v850
      %v909 = vmax.f32 %v781, %v853
      %v910 = vmax.f32 %v786, %v858
      %v911 = vmax.f32 %v789, %v861
      %v912 = vmax.f32 %v794, %v866
      %v913 = vmax.f32 %v797, %v869
      %v914 = vmax.f32 %v802, %v874
      %v915 = vmax.f32 %v805, %v877
      %v916 = vmax.f32 %v880, %v898
      %v917 = vmax.f32 %v881, %v899
      %v918 = vmax.f32 %v882, %v900
      %v919 = vmax.f32 %v883, %v901
      %v920 = vmax.f32 %v884, %v902
      %v921 = vmax.f32 %v885, %v903
      %v922 = vmax.f32 %v886, %v904
      %v923 = vmax.f32 %v887, %v905
      %v924 = vmax.f32 %v888, %v906
      %v925 = vmax.f32 %v889, %v907
      %v926 = vmax.f32 %v890, %v908
      %v927 = vmax.f32 %v891, %v909
      %v928 = vmax.f32 %v892, %v910
      %v929 = vmax.f32 %v893, %v911
      %v930 = vmax.f32 %v894, %v912
      %v931 = vmax.f32 %v895, %v913
      %v932 = vmax.f32 %v896, %v914
      %v933 = vmax.f32 %v897, %v915
      %v934 = vpack.c.bf16 %v917, %v916
      %v935 = vpack.c.bf16 %v919, %v918
      %v936 = vpack.c.bf16 %v921, %v920
      %v937 = vpack.c.bf16 %v923, %v922
      %v938 = vpack.c.bf16 %v925, %v924
      %v939 = vpack.c.bf16 %v927, %v926
      %v940 = vpack.c.bf16 %v929, %v928
      %v941 = vpack.c.bf16 %v931, %v930
      %v942 = vpack.c.bf16 %v933, %v932
      %v952 = vunpack.c.l.b16 %v934
      %v953 = vunpack.c.h.b16 %v934
      %v954 = vunpack.c.l.b16 %v935
      %v955 = vunpack.c.h.b16 %v935
      %v956 = vunpack.c.l.b16 %v936
      %v957 = vunpack.c.h.b16 %v936
      %v958 = vunpack.c.l.b16 %v937
      %v959 = vunpack.c.h.b16 %v937
      %v960 = vunpack.c.l.b16 %v938
      %v961 = vunpack.c.h.b16 %v938
      %v962 = vunpack.c.l.b16 %v939
      %v963 = vunpack.c.h.b16 %v939
      %v964 = vunpack.c.l.b16 %v940
      %v965 = vunpack.c.h.b16 %v940
      %v966 = vunpack.c.l.b16 %v941
      %v967 = vunpack.c.h.b16 %v941
      %v968 = vunpack.c.l.b16 %v942
      %v969 = vunpack.c.h.b16 %v942
      %v970 = vpack.c.b16 %v952, %v952
      %v971 = vpack.c.b16 %v953, %v953
      %v972 = vpack.c.b16 %v954, %v954
      %v973 = vpack.c.b16 %v955, %v955
      %v974 = vpack.c.b16 %v956, %v956
      %v975 = vpack.c.b16 %v957, %v957
      %v976 = vpack.c.b16 %v958, %v958
      %v977 = vpack.c.b16 %v959, %v959
      %v978 = vpack.c.b16 %v960, %v960
      %v979 = vpack.c.b16 %v961, %v961
      %v980 = vpack.c.b16 %v962, %v962
      %v981 = vpack.c.b16 %v963, %v963
      %v982 = vpack.c.b16 %v964, %v964
      %v983 = vpack.c.b16 %v965, %v965
      %v984 = vpack.c.b16 %v966, %v966
      %v985 = vpack.c.b16 %v967, %v967
      %v986 = vpack.c.b16 %v968, %v968
      %v987 = vpack.c.b16 %v969, %v969
      %1006 = vst [vmem:[%s172] sm:$0xf] %v970
      %1007 = vst [vmem:[%s172 + $0x4] sm:$0xf] %v971
      %1008 = vst [vmem:[%s172 + $0x8] sm:$0xf] %v972
      %1009 = vst [vmem:[%s172 + $0xc] sm:$0xf] %v973
      %1010 = vst [vmem:[%s172 + $0x10] sm:$0xf] %v974
      %1011 = vst [vmem:[%s172 + $0x14] sm:$0xf] %v975
      %1012 = vst [vmem:[%s172 + $0x18] sm:$0xf] %v976
      %1013 = vst [vmem:[%s172 + $0x1c] sm:$0xf] %v977
      %1014 = vst [vmem:[%s172 + $0x20] sm:$0xf] %v978
      %1015 = vst [vmem:[%s172 + $0x24] sm:$0xf] %v979
      %1016 = vst [vmem:[%s172 + $0x28] sm:$0xf] %v980
      %1017 = vst [vmem:[%s172 + $0x2c] sm:$0xf] %v981
      %1018 = vst [vmem:[%s172 + $0x30] sm:$0xf] %v982
      %1019 = vst [vmem:[%s172 + $0x34] sm:$0xf] %v983
      %1020 = vst [vmem:[%s172 + $0x38] sm:$0xf] %v984
      %1021 = vst [vmem:[%s172 + $0x3c] sm:$0xf] %v985
      %1022 = vst [vmem:[%s172 + $0x40] sm:$0xf] %v986
      %1023 = vst [vmem:[%s172 + $0x44] sm:$0xf] %v987
      %s1024 = smul.u32 18, %s14
      %p1025 = scmp.lt.s32.totalorder %s1024, 35
      %s1026 = scalar_select %p1025, %s1024, 35
      %s1027 = smul.addr %s1026, 4
      %s1028 = scalar_lea.vmem %s3, %s1027
      // Predicated region
      $region33: #{mnist_forward.3} parent=31 // pred_check
        %p1029 = pneg %p100
      $region34: #{mnist_forward.3} parent=31 // pred_check_branch
        %1031 = sbr.rel (%p1029) target = $region36
      $region35: #{mnist_forward.3} parent=31 // pred_region
        %s1032 = smul.u32 18, %s14
      $region36: #{mnist_forward.3} parent=31 // pred_fallthru
        _
    $region32: #{mnist_forward.3} parent=5 // pred_fallthru
      _
    %p1033 = scmp.le.s32.totalorder 2, %s9
    // Predicated region
    $region37: #{mnist_forward.3} parent=5 // pred_check
      %p1034 = pneg %p1033
    $region38: #{mnist_forward.3} parent=5 // pred_check_branch
      %1036 = sbr.rel (%p1034) target = $region40
    $region39: #{mnist_forward.3} parent=5 // pred_region
      %s1037 = ssub.s32 %s9, 2
      // Predicated region
      $region41: #{mnist_forward.3} parent=39 // pred_check
        %p1038 = pneg %p106
      $region42: #{mnist_forward.3} parent=39 // pred_check_branch
        %1040 = sbr.rel (%p1038) target = $region44
      $region43: #{mnist_forward.3} parent=39 // pred_region
        %s1041 = smul.u32 18, %s15
        %p1042 = scmp.lt.s32.totalorder %s1041, 35
        %s1043 = scalar_select %p1042, %s1041, 35
        %s1044 = smul.addr %s1043, 4
        %s1045 = scalar_lea.vmem %s3, %s1044
      $region44: #{mnist_forward.3} parent=39 // pred_fallthru
        _
    $region40: #{mnist_forward.3} parent=5 // pred_fallthru
      _
  $region6: #{mnist_forward.3} parent=0 // loop_footer
    %s13 = sadd.s32 1, %s9
  $region7: #{mnist_forward.3} parent=0 // loop_footer_branch
    %8 = sbr.rel target = $region3
  $region8: #{mnist_forward.3} parent=0 // loop_exit
    _

// kernel: mnist_forward.4
$region0: #{mnist_forward.4}
  #allocation0 [shape = 'u32[]', space=smem, size = 0x4, offset = 0x4, fixed_abs, tag = 'smem constant byte address 0x4 - core index']
  #allocation1 [shape = 'u32[144,128]{1,0:T(1,128)}', space=vmem, size = 0x12000, scoped, tag = 'internal scratch']
  %s0 = inlined_call_operand.vmem [shape: bf16[128,800], index: 0, kind: input, shape index: {}]
  %s1 = inlined_call_operand.vmem [shape: bf16[800,128], index: 1, kind: input, shape index: {}]
  %s2 = inlined_call_operand.vmem [shape: f32[1,128], index: 2, kind: input, shape index: {}]
  %s3 = inlined_call_operand.vmem [shape: bf16[32,128], index: 3, kind: output, shape index: {}]
  %s4 = sld [smem:[#allocation0]]
  $region22: #{mnist_forward.4} parent=0
    _
  %s6 = ssub.s32 1, %s4
  %s7 = scalar_select 0, %s6, %s4
  // Predicated region
  $region2: #{mnist_forward.4} parent=0 // pred_check
    _
  $region3: #{mnist_forward.4} parent=0 // pred_check_branch
    %9 = sbr.rel (0) target = $region5
  $region4: #{mnist_forward.4} parent=0 // pred_region
    _
  $region5: #{mnist_forward.4} parent=0 // pred_fallthru
    _
  // Predicated region
  $region6: #{mnist_forward.4} parent=0 // pred_check
    _
  $region7: #{mnist_forward.4} parent=0 // pred_check_branch
    %11 = sbr.rel (0) target = $region9
  $region8: #{mnist_forward.4} parent=0 // pred_region
    _
  $region9: #{mnist_forward.4} parent=0 // pred_fallthru
    _
  // Predicated region
  $region10: #{mnist_forward.4} parent=0 // pred_check
    _
  $region11: #{mnist_forward.4} parent=0 // pred_check_branch
    %13 = sbr.rel (0) target = $region13
  $region12: #{mnist_forward.4} parent=0 // pred_region
    _
  $region13: #{mnist_forward.4} parent=0 // pred_fallthru
    _
  %v15 = vld [vmem:[%s0] sm:$0xff]
  %v16 = vld [vmem:[%s0 + $0x8] sm:$0xff]
  %v17 = vld [vmem:[%s0 + $0x10] sm:$0xff]
  %v18 = vld [vmem:[%s0 + $0x18] sm:$0xf]
  %v19 = vld [vmem:[%s0 + $0x1c] sm:$0xff]
  %v20 = vld [vmem:[%s0 + $0x24] sm:$0xff]
  %v21 = vld [vmem:[%s0 + $0x2c] sm:$0xff]
  %v22 = vld [vmem:[%s0 + $0x34] sm:$0xf]
  %v23 = vld [vmem:[%s0 + $0x38] sm:$0xff]
  %v24 = vld [vmem:[%s0 + $0x40] sm:$0xff]
  %v25 = vld [vmem:[%s0 + $0x48] sm:$0xff]
  %v26 = vld [vmem:[%s0 + $0x50] sm:$0xf]
  %v27 = vld [vmem:[%s0 + $0x54] sm:$0xff]
  %v28 = vld [vmem:[%s0 + $0x5c] sm:$0xff]
  %v29 = vld [vmem:[%s0 + $0x64] sm:$0xff]
  %v30 = vld [vmem:[%s0 + $0x6c] sm:$0xf]
  %v31 = vld [vmem:[%s0 + $0x70] sm:$0xff]
  %v32 = vld [vmem:[%s0 + $0x78] sm:$0xff]
  %v33 = vld [vmem:[%s0 + $0x80] sm:$0xff]
  %v34 = vld [vmem:[%s0 + $0x88] sm:$0xf]
  %v35 = vld [vmem:[%s0 + $0x8c] sm:$0xff]
  %v36 = vld [vmem:[%s0 + $0x94] sm:$0xff]
  %v37 = vld [vmem:[%s0 + $0x9c] sm:$0xff]
  %v38 = vld [vmem:[%s0 + $0xa4] sm:$0xf]
  %v39 = vld [vmem:[%s0 + $0xa8] sm:$0xff]
  %v40 = vld [vmem:[%s0 + $0xb0] sm:$0xff]
  %v41 = vld [vmem:[%s0 + $0xb8] sm:$0xff]
  %v42 = vld [vmem:[%s0 + $0xc0] sm:$0xf]
  %v43 = vld [vmem:[%s0 + $0xc4] sm:$0xff]
  %v44 = vld [vmem:[%s0 + $0xcc] sm:$0xff]
  %v45 = vld [vmem:[%s0 + $0xd4] sm:$0xff]
  %v46 = vld [vmem:[%s0 + $0xdc] sm:$0xf]
  %v47 = vld [vmem:[%s0 + $0xe0] sm:$0xff]
  %v48 = vld [vmem:[%s0 + $0xe8] sm:$0xff]
  %v49 = vld [vmem:[%s0 + $0xf0] sm:$0xff]
  %v50 = vld [vmem:[%s0 + $0xf8] sm:$0xf]
  %v51 = vld [vmem:[%s0 + $0xfc] sm:$0xff]
  %v52 = vld [vmem:[%s0 + $0x104] sm:$0xff]
  %v53 = vld [vmem:[%s0 + $0x10c] sm:$0xff]
  %v54 = vld [vmem:[%s0 + $0x114] sm:$0xf]
  %v55 = vld [vmem:[%s0 + $0x118] sm:$0xff]
  %v56 = vld [vmem:[%s0 + $0x120] sm:$0xff]
  %v57 = vld [vmem:[%s0 + $0x128] sm:$0xff]
  %v58 = vld [vmem:[%s0 + $0x130] sm:$0xf]
  %v59 = vld [vmem:[%s0 + $0x134] sm:$0xff]
  %v60 = vld [vmem:[%s0 + $0x13c] sm:$0xff]
  %v61 = vld [vmem:[%s0 + $0x144] sm:$0xff]
  %v62 = vld [vmem:[%s0 + $0x14c] sm:$0xf]
  %v63 = vld [vmem:[%s0 + $0x150] sm:$0xff]
  %v64 = vld [vmem:[%s0 + $0x158] sm:$0xff]
  %v65 = vld [vmem:[%s0 + $0x160] sm:$0xff]
  %v66 = vld [vmem:[%s0 + $0x168] sm:$0xf]
  %v67 = vld [vmem:[%s0 + $0x16c] sm:$0xff]
  %v68 = vld [vmem:[%s0 + $0x174] sm:$0xff]
  %v69 = vld [vmem:[%s0 + $0x17c] sm:$0xff]
  %v70 = vld [vmem:[%s0 + $0x184] sm:$0xf]
  %v71 = vld [vmem:[%s0 + $0x188] sm:$0xff]
  %v72 = vld [vmem:[%s0 + $0x190] sm:$0xff]
  %v73 = vld [vmem:[%s0 + $0x198] sm:$0xff]
  %v74 = vld [vmem:[%s0 + $0x1a0] sm:$0xf]
  %v75 = vld [vmem:[%s0 + $0x1a4] sm:$0xff]
  %v76 = vld [vmem:[%s0 + $0x1ac] sm:$0xff]
  %v77 = vld [vmem:[%s0 + $0x1b4] sm:$0xff]
  %v78 = vld [vmem:[%s0 + $0x1bc] sm:$0xf]
  %v79 = vld [vmem:[%s1] sm:$0xf]
  %v80 = vld [vmem:[%s1 + $0x4] sm:$0xf]
  %v81 = vld [vmem:[%s1 + $0x8] sm:$0xf]
  %v82 = vld [vmem:[%s1 + $0xc] sm:$0xf]
  %v83 = vld [vmem:[%s1 + $0x10] sm:$0xf]
  %v84 = vld [vmem:[%s1 + $0x14] sm:$0xf]
  %v85 = vld [vmem:[%s1 + $0x18] sm:$0xf]
  %v86 = vld [vmem:[%s1 + $0x1c] sm:$0xf]
  %v87 = vld [vmem:[%s1 + $0x20] sm:$0xf]
  %v88 = vld [vmem:[%s1 + $0x24] sm:$0xf]
  %v89 = vld [vmem:[%s1 + $0x28] sm:$0xf]
  %v90 = vld [vmem:[%s1 + $0x2c] sm:$0xf]
  %v91 = vld [vmem:[%s1 + $0x30] sm:$0xf]
  %v92 = vld [vmem:[%s1 + $0x34] sm:$0xf]
  %v93 = vld [vmem:[%s1 + $0x38] sm:$0xf]
  %v94 = vld [vmem:[%s1 + $0x3c] sm:$0xf]
  %v95 = vld [vmem:[%s1 + $0x40] sm:$0xf]
  %v96 = vld [vmem:[%s1 + $0x44] sm:$0xf]
  %v97 = vld [vmem:[%s1 + $0x48] sm:$0xf]
  %v98 = vld [vmem:[%s1 + $0x4c] sm:$0xf]
  %v99 = vld [vmem:[%s1 + $0x50] sm:$0xf]
  %v100 = vld [vmem:[%s1 + $0x54] sm:$0xf]
  %v101 = vld [vmem:[%s1 + $0x58] sm:$0xf]
  %v102 = vld [vmem:[%s1 + $0x5c] sm:$0xf]
  %v103 = vld [vmem:[%s1 + $0x60] sm:$0xf]
  %v104 = vld [vmem:[%s1 + $0x64] sm:$0xf]
  %v105 = vld [vmem:[%s1 + $0x68] sm:$0xf]
  %v106 = vld [vmem:[%s1 + $0x6c] sm:$0xf]
  %v107 = vld [vmem:[%s1 + $0x70] sm:$0xf]
  %v108 = vld [vmem:[%s1 + $0x74] sm:$0xf]
  %v109 = vld [vmem:[%s1 + $0x78] sm:$0xf]
  %v110 = vld [vmem:[%s1 + $0x7c] sm:$0xf]
  %v111 = vld [vmem:[%s1 + $0x80] sm:$0xf]
  %v112 = vld [vmem:[%s1 + $0x84] sm:$0xf]
  %v113 = vld [vmem:[%s1 + $0x88] sm:$0xf]
  %v114 = vld [vmem:[%s1 + $0x8c] sm:$0xf]
  %v115 = vld [vmem:[%s1 + $0x90] sm:$0xf]
  %v116 = vld [vmem:[%s1 + $0x94] sm:$0xf]
  %v117 = vld [vmem:[%s1 + $0x98] sm:$0xf]
  %v118 = vld [vmem:[%s1 + $0x9c] sm:$0xf]
  %v119 = vld [vmem:[%s1 + $0xa0] sm:$0xf]
  %v120 = vld [vmem:[%s1 + $0xa4] sm:$0xf]
  %v121 = vld [vmem:[%s1 + $0xa8] sm:$0xf]
  %v122 = vld [vmem:[%s1 + $0xac] sm:$0xf]
  %v123 = vld [vmem:[%s1 + $0xb0] sm:$0xf]
  %v124 = vld [vmem:[%s1 + $0xb4] sm:$0xf]
  %v125 = vld [vmem:[%s1 + $0xb8] sm:$0xf]
  %v126 = vld [vmem:[%s1 + $0xbc] sm:$0xf]
  %v127 = vld [vmem:[%s1 + $0xc0] sm:$0xf]
  %v128 = vld [vmem:[%s1 + $0xc4] sm:$0xf]
  %v129 = vld [vmem:[%s1 + $0xc8] sm:$0xf]
  %v130 = vld [vmem:[%s1 + $0xcc] sm:$0xf]
  %v131 = vld [vmem:[%s1 + $0xd0] sm:$0xf]
  %v132 = vld [vmem:[%s1 + $0xd4] sm:$0xf]
  %v133 = vld [vmem:[%s1 + $0xd8] sm:$0xf]
  %v134 = vld [vmem:[%s1 + $0xdc] sm:$0xf]
  %v135 = vld [vmem:[%s1 + $0xe0] sm:$0xf]
  %v136 = vld [vmem:[%s1 + $0xe4] sm:$0xf]
  %v137 = vld [vmem:[%s1 + $0xe8] sm:$0xf]
  %v138 = vld [vmem:[%s1 + $0xec] sm:$0xf]
  %v139 = vld [vmem:[%s1 + $0xf0] sm:$0xf]
  %v140 = vld [vmem:[%s1 + $0xf4] sm:$0xf]
  %v141 = vld [vmem:[%s1 + $0xf8] sm:$0xf]
  %v142 = vld [vmem:[%s1 + $0xfc] sm:$0xf]
  %v143 = vld [vmem:[%s1 + $0x100] sm:$0xf]
  %v144 = vld [vmem:[%s1 + $0x104] sm:$0xf]
  %v145 = vld [vmem:[%s1 + $0x108] sm:$0xf]
  %v146 = vld [vmem:[%s1 + $0x10c] sm:$0xf]
  %v147 = vld [vmem:[%s1 + $0x110] sm:$0xf]
  %v148 = vld [vmem:[%s1 + $0x114] sm:$0xf]
  %v149 = vld [vmem:[%s1 + $0x118] sm:$0xf]
  %v150 = vld [vmem:[%s1 + $0x11c] sm:$0xf]
  %v151 = vld [vmem:[%s1 + $0x120] sm:$0xf]
  %v152 = vld [vmem:[%s1 + $0x124] sm:$0xf]
  %v153 = vld [vmem:[%s1 + $0x128] sm:$0xf]
  %v154 = vld [vmem:[%s1 + $0x12c] sm:$0xf]
  %v155 = vld [vmem:[%s1 + $0x130] sm:$0xf]
  %v156 = vld [vmem:[%s1 + $0x134] sm:$0xf]
  %v157 = vld [vmem:[%s1 + $0x138] sm:$0xf]
  %v158 = vld [vmem:[%s1 + $0x13c] sm:$0xf]
  %v159 = vld [vmem:[%s1 + $0x140] sm:$0xf]
  %v160 = vld [vmem:[%s1 + $0x144] sm:$0xf]
  %v161 = vld [vmem:[%s1 + $0x148] sm:$0xf]
  %v162 = vld [vmem:[%s1 + $0x14c] sm:$0xf]
  %v163 = vld [vmem:[%s1 + $0x150] sm:$0xf]
  %v164 = vld [vmem:[%s1 + $0x154] sm:$0xf]
  %v165 = vld [vmem:[%s1 + $0x158] sm:$0xf]
  %v166 = vld [vmem:[%s1 + $0x15c] sm:$0xf]
  %v167 = vld [vmem:[%s1 + $0x160] sm:$0xf]
  %v168 = vld [vmem:[%s1 + $0x164] sm:$0xf]
  %v169 = vld [vmem:[%s1 + $0x168] sm:$0xf]
  %v170 = vld [vmem:[%s1 + $0x16c] sm:$0xf]
  %v171 = vld [vmem:[%s1 + $0x170] sm:$0xf]
  %v172 = vld [vmem:[%s1 + $0x174] sm:$0xf]
  %v173 = vld [vmem:[%s1 + $0x178] sm:$0xf]
  %v174 = vld [vmem:[%s1 + $0x17c] sm:$0xf]
  %v175 = vld [vmem:[%s1 + $0x180] sm:$0xf]
  %v176 = vld [vmem:[%s1 + $0x184] sm:$0xf]
  %v177 = vld [vmem:[%s1 + $0x188] sm:$0xf]
  %v178 = vld [vmem:[%s1 + $0x18c] sm:$0xf]
  %v179 = vld [vmem:[%s2] sm:$0x1]
  %v181 = vlaneseq
  %v182 = vshrl.u32 %v181, 7
  %v183 = vsub.s32 0, %v182
  %v184 = vrot.slane %v179, %v183
  %v250 = vunpack.c.l.b16 %v15
  %v251 = vunpack.c.h.b16 %v15
  %v252 = vunpack.c.l.b16 %v16
  %v253 = vunpack.c.h.b16 %v16
  %v254 = vunpack.c.l.b16 %v17
  %v255 = vunpack.c.h.b16 %v17
  %v256 = vunpack.c.l.b16 %v18
  %v257 = vunpack.c.l.b16 %v19
  %v258 = vunpack.c.h.b16 %v19
  %v259 = vunpack.c.l.b16 %v20
  %v260 = vunpack.c.h.b16 %v20
  %v261 = vunpack.c.l.b16 %v21
  %v262 = vunpack.c.h.b16 %v21
  %v263 = vunpack.c.l.b16 %v22
  %v264 = vunpack.c.l.b16 %v23
  %v265 = vunpack.c.h.b16 %v23
  %v266 = vunpack.c.l.b16 %v24
  %v267 = vunpack.c.h.b16 %v24
  %v268 = vunpack.c.l.b16 %v25
  %v269 = vunpack.c.h.b16 %v25
  %v270 = vunpack.c.l.b16 %v26
  %v271 = vunpack.c.l.b16 %v27
  %v272 = vunpack.c.h.b16 %v27
  %v273 = vunpack.c.l.b16 %v28
  %v274 = vunpack.c.h.b16 %v28
  %v275 = vunpack.c.l.b16 %v29
  %v276 = vunpack.c.h.b16 %v29
  %v277 = vunpack.c.l.b16 %v30
  %v278 = vunpack.c.l.b16 %v31
  %v279 = vunpack.c.h.b16 %v31
  %v280 = vunpack.c.l.b16 %v32
  %v281 = vunpack.c.h.b16 %v32
  %v282 = vunpack.c.l.b16 %v33
  %v283 = vunpack.c.h.b16 %v33
  %v284 = vunpack.c.l.b16 %v34
  %v285 = vunpack.c.l.b16 %v35
  %v286 = vunpack.c.h.b16 %v35
  %v287 = vunpack.c.l.b16 %v36
  %v288 = vunpack.c.h.b16 %v36
  %v289 = vunpack.c.l.b16 %v37
  %v290 = vunpack.c.h.b16 %v37
  %v291 = vunpack.c.l.b16 %v38
  %v292 = vunpack.c.l.b16 %v39
  %v293 = vunpack.c.h.b16 %v39
  %v294 = vunpack.c.l.b16 %v40
  %v295 = vunpack.c.h.b16 %v40
  %v296 = vunpack.c.l.b16 %v41
  %v297 = vunpack.c.h.b16 %v41
  %v298 = vunpack.c.l.b16 %v42
  %v299 = vunpack.c.l.b16 %v43
  %v300 = vunpack.c.h.b16 %v43
  %v301 = vunpack.c.l.b16 %v44
  %v302 = vunpack.c.h.b16 %v44
  %v303 = vunpack.c.l.b16 %v45
  %v304 = vunpack.c.h.b16 %v45
  %v305 = vunpack.c.l.b16 %v46
  %v306 = vunpack.c.l.b16 %v47
  %v307 = vunpack.c.h.b16 %v47
  %v308 = vunpack.c.l.b16 %v48
  %v309 = vunpack.c.h.b16 %v48
  %v310 = vunpack.c.l.b16 %v49
  %v311 = vunpack.c.h.b16 %v49
  %v312 = vunpack.c.l.b16 %v50
  %v313 = vunpack.c.l.b16 %v51
  %v314 = vunpack.c.h.b16 %v51
  %v315 = vunpack.c.l.b16 %v52
  %v316 = vunpack.c.h.b16 %v52
  %v317 = vunpack.c.l.b16 %v53
  %v318 = vunpack.c.h.b16 %v53
  %v319 = vunpack.c.l.b16 %v54
  %v320 = vunpack.c.l.b16 %v55
  %v321 = vunpack.c.h.b16 %v55
  %v322 = vunpack.c.l.b16 %v56
  %v323 = vunpack.c.h.b16 %v56
  %v324 = vunpack.c.l.b16 %v57
  %v325 = vunpack.c.h.b16 %v57
  %v326 = vunpack.c.l.b16 %v58
  %v327 = vunpack.c.l.b16 %v59
  %v328 = vunpack.c.h.b16 %v59
  %v329 = vunpack.c.l.b16 %v60
  %v330 = vunpack.c.h.b16 %v60
  %v331 = vunpack.c.l.b16 %v61
  %v332 = vunpack.c.h.b16 %v61
  %v333 = vunpack.c.l.b16 %v62
  %v334 = vunpack.c.l.b16 %v63
  %v335 = vunpack.c.h.b16 %v63
  %v336 = vunpack.c.l.b16 %v64
  %v337 = vunpack.c.h.b16 %v64
  %v338 = vunpack.c.l.b16 %v65
  %v339 = vunpack.c.h.b16 %v65
  %v340 = vunpack.c.l.b16 %v66
  %v341 = vunpack.c.l.b16 %v67
  %v342 = vunpack.c.h.b16 %v67
  %v343 = vunpack.c.l.b16 %v68
  %v344 = vunpack.c.h.b16 %v68
  %v345 = vunpack.c.l.b16 %v69
  %v346 = vunpack.c.h.b16 %v69
  %v347 = vunpack.c.l.b16 %v70
  %v348 = vunpack.c.l.b16 %v71
  %v349 = vunpack.c.h.b16 %v71
  %v350 = vunpack.c.l.b16 %v72
  %v351 = vunpack.c.h.b16 %v72
  %v352 = vunpack.c.l.b16 %v73
  %v353 = vunpack.c.h.b16 %v73
  %v354 = vunpack.c.l.b16 %v74
  %v355 = vunpack.c.l.b16 %v75
  %v356 = vunpack.c.h.b16 %v75
  %v357 = vunpack.c.l.b16 %v76
  %v358 = vunpack.c.h.b16 %v76
  %v359 = vunpack.c.l.b16 %v77
  %v360 = vunpack.c.h.b16 %v77
  %v361 = vunpack.c.l.b16 %v78
  %v362 = vpack.c.b16 %v257, %v250
  %v363 = vpack.c.b16 %v258, %v251
  %v364 = vpack.c.b16 %v259, %v252
  %v365 = vpack.c.b16 %v260, %v253
  %v366 = vpack.c.b16 %v261, %v254
  %v367 = vpack.c.b16 %v262, %v255
  %v368 = vpack.c.b16 %v263, %v256
  %v369 = vpack.c.b16 %v271, %v264
  %v370 = vpack.c.b16 %v272, %v265
  %v371 = vpack.c.b16 %v273, %v266
  %v372 = vpack.c.b16 %v274, %v267
  %v373 = vpack.c.b16 %v275, %v268
  %v374 = vpack.c.b16 %v276, %v269
  %v375 = vpack.c.b16 %v277, %v270
  %v376 = vpack.c.b16 %v285, %v278
  %v377 = vpack.c.b16 %v286, %v279
  %v378 = vpack.c.b16 %v287, %v280
  %v379 = vpack.c.b16 %v288, %v281
  %v380 = vpack.c.b16 %v289, %v282
  %v381 = vpack.c.b16 %v290, %v283
  %v382 = vpack.c.b16 %v291, %v284
  %v383 = vpack.c.b16 %v299, %v292
  %v384 = vpack.c.b16 %v300, %v293
  %v385 = vpack.c.b16 %v301, %v294
  %v386 = vpack.c.b16 %v302, %v295
  %v387 = vpack.c.b16 %v303, %v296
  %v388 = vpack.c.b16 %v304, %v297
  %v389 = vpack.c.b16 %v305, %v298
  %v390 = vpack.c.b16 %v313, %v306
  %v391 = vpack.c.b16 %v314, %v307
  %v392 = vpack.c.b16 %v315, %v308
  %v393 = vpack.c.b16 %v316, %v309
  %v394 = vpack.c.b16 %v317, %v310
  %v395 = vpack.c.b16 %v318, %v311
  %v396 = vpack.c.b16 %v319, %v312
  %v397 = vpack.c.b16 %v327, %v320
  %v398 = vpack.c.b16 %v328, %v321
  %v399 = vpack.c.b16 %v329, %v322
  %v400 = vpack.c.b16 %v330, %v323
  %v401 = vpack.c.b16 %v331, %v324
  %v402 = vpack.c.b16 %v332, %v325
  %v403 = vpack.c.b16 %v333, %v326
  %v404 = vpack.c.b16 %v341, %v334
  %v405 = vpack.c.b16 %v342, %v335
  %v406 = vpack.c.b16 %v343, %v336
  %v407 = vpack.c.b16 %v344, %v337
  %v408 = vpack.c.b16 %v345, %v338
  %v409 = vpack.c.b16 %v346, %v339
  %v410 = vpack.c.b16 %v347, %v340
  %v411 = vpack.c.b16 %v355, %v348
  %v412 = vpack.c.b16 %v356, %v349
  %v413 = vpack.c.b16 %v357, %v350
  %v414 = vpack.c.b16 %v358, %v351
  %v415 = vpack.c.b16 %v359, %v352
  %v416 = vpack.c.b16 %v360, %v353
  %v417 = vpack.c.b16 %v361, %v354
  %v566 = vunpack.c.l.b16 %v79
  %v567 = vunpack.c.l.b16 %v80
  %v568 = vunpack.c.l.b16 %v81
  %v569 = vunpack.c.l.b16 %v82
  %v570 = vunpack.c.l.b16 %v83
  %v571 = vunpack.c.l.b16 %v84
  %v572 = vunpack.c.l.b16 %v85
  %v573 = vunpack.c.l.b16 %v86
  %v574 = vunpack.c.l.b16 %v87
  %v575 = vunpack.c.l.b16 %v88
  %v576 = vunpack.c.l.b16 %v89
  %v577 = vunpack.c.l.b16 %v90
  %v578 = vunpack.c.l.b16 %v91
  %v579 = vunpack.c.l.b16 %v92
  %v580 = vunpack.c.l.b16 %v93
  %v581 = vunpack.c.l.b16 %v94
  %v582 = vunpack.c.l.b16 %v95
  %v583 = vunpack.c.l.b16 %v96
  %v584 = vunpack.c.l.b16 %v97
  %v585 = vunpack.c.l.b16 %v98
  %v586 = vunpack.c.l.b16 %v99
  %v587 = vunpack.c.l.b16 %v100
  %v588 = vunpack.c.l.b16 %v101
  %v589 = vunpack.c.l.b16 %v102
  %v590 = vunpack.c.l.b16 %v103
  %v591 = vunpack.c.l.b16 %v104
  %v592 = vunpack.c.l.b16 %v105
  %v593 = vunpack.c.l.b16 %v106
  %v594 = vunpack.c.l.b16 %v107
  %v595 = vunpack.c.l.b16 %v108
  %v596 = vunpack.c.l.b16 %v109
  %v597 = vunpack.c.l.b16 %v110
  %v598 = vunpack.c.l.b16 %v111
  %v599 = vunpack.c.l.b16 %v112
  %v600 = vunpack.c.l.b16 %v113
  %v601 = vunpack.c.l.b16 %v114
  %v602 = vunpack.c.l.b16 %v115
  %v603 = vunpack.c.l.b16 %v116
  %v604 = vunpack.c.l.b16 %v117
  %v605 = vunpack.c.l.b16 %v118
  %v606 = vunpack.c.l.b16 %v119
  %v607 = vunpack.c.l.b16 %v120
  %v608 = vunpack.c.l.b16 %v121
  %v609 = vunpack.c.l.b16 %v122
  %v610 = vunpack.c.l.b16 %v123
  %v611 = vunpack.c.l.b16 %v124
  %v612 = vunpack.c.l.b16 %v125
  %v613 = vunpack.c.l.b16 %v126
  %v614 = vunpack.c.l.b16 %v127
  %v615 = vunpack.c.l.b16 %v128
  %v616 = vunpack.c.l.b16 %v129
  %v617 = vunpack.c.l.b16 %v130
  %v618 = vunpack.c.l.b16 %v131
  %v619 = vunpack.c.l.b16 %v132
  %v620 = vunpack.c.l.b16 %v133
  %v621 = vunpack.c.l.b16 %v134
  %v622 = vunpack.c.l.b16 %v135
  %v623 = vunpack.c.l.b16 %v136
  %v624 = vunpack.c.l.b16 %v137
  %v625 = vunpack.c.l.b16 %v138
  %v626 = vunpack.c.l.b16 %v139
  %v627 = vunpack.c.l.b16 %v140
  %v628 = vunpack.c.l.b16 %v141
  %v629 = vunpack.c.l.b16 %v142
  %v630 = vunpack.c.l.b16 %v143
  %v631 = vunpack.c.l.b16 %v144
  %v632 = vunpack.c.l.b16 %v145
  %v633 = vunpack.c.l.b16 %v146
  %v634 = vunpack.c.l.b16 %v147
  %v635 = vunpack.c.l.b16 %v148
  %v636 = vunpack.c.l.b16 %v149
  %v637 = vunpack.c.l.b16 %v150
  %v638 = vunpack.c.l.b16 %v151
  %v639 = vunpack.c.l.b16 %v152
  %v640 = vunpack.c.l.b16 %v153
  %v641 = vunpack.c.l.b16 %v154
  %v642 = vunpack.c.l.b16 %v155
  %v643 = vunpack.c.l.b16 %v156
  %v644 = vunpack.c.l.b16 %v157
  %v645 = vunpack.c.l.b16 %v158
  %v646 = vunpack.c.l.b16 %v159
  %v647 = vunpack.c.l.b16 %v160
  %v648 = vunpack.c.l.b16 %v161
  %v649 = vunpack.c.l.b16 %v162
  %v650 = vunpack.c.l.b16 %v163
  %v651 = vunpack.c.l.b16 %v164
  %v652 = vunpack.c.l.b16 %v165
  %v653 = vunpack.c.l.b16 %v166
  %v654 = vunpack.c.l.b16 %v167
  %v655 = vunpack.c.l.b16 %v168
  %v656 = vunpack.c.l.b16 %v169
  %v657 = vunpack.c.l.b16 %v170
  %v658 = vunpack.c.l.b16 %v171
  %v659 = vunpack.c.l.b16 %v172
  %v660 = vunpack.c.l.b16 %v173
  %v661 = vunpack.c.l.b16 %v174
  %v662 = vunpack.c.l.b16 %v175
  %v663 = vunpack.c.l.b16 %v176
  %v664 = vunpack.c.l.b16 %v177
  %v665 = vunpack.c.l.b16 %v178
  %v666 = vpack.c.b16 %v567, %v566
  %v667 = vpack.c.b16 %v569, %v568
  %v668 = vpack.c.b16 %v571, %v570
  %v669 = vpack.c.b16 %v573, %v572
  %v670 = vpack.c.b16 %v575, %v574
  %v671 = vpack.c.b16 %v577, %v576
  %v672 = vpack.c.b16 %v579, %v578
  %v673 = vpack.c.b16 %v581, %v580
  %v674 = vpack.c.b16 %v583, %v582
  %v675 = vpack.c.b16 %v585, %v584
  %v676 = vpack.c.b16 %v587, %v586
  %v677 = vpack.c.b16 %v589, %v588
  %v678 = vpack.c.b16 %v591, %v590
  %v679 = vpack.c.b16 %v593, %v592
  %v680 = vpack.c.b16 %v595, %v594
  %v681 = vpack.c.b16 %v597, %v596
  %v682 = vpack.c.b16 %v599, %v598
  %v683 = vpack.c.b16 %v601, %v600
  %v684 = vpack.c.b16 %v603, %v602
  %v685 = vpack.c.b16 %v605, %v604
  %v686 = vpack.c.b16 %v607, %v606
  %v687 = vpack.c.b16 %v609, %v608
  %v688 = vpack.c.b16 %v611, %v610
  %v689 = vpack.c.b16 %v613, %v612
  %v690 = vpack.c.b16 %v615, %v614
  %v691 = vpack.c.b16 %v617, %v616
  %v692 = vpack.c.b16 %v619, %v618
  %v693 = vpack.c.b16 %v621, %v620
  %v694 = vpack.c.b16 %v623, %v622
  %v695 = vpack.c.b16 %v625, %v624
  %v696 = vpack.c.b16 %v627, %v626
  %v697 = vpack.c.b16 %v629, %v628
  %v698 = vpack.c.b16 %v631, %v630
  %v699 = vpack.c.b16 %v633, %v632
  %v700 = vpack.c.b16 %v635, %v634
  %v701 = vpack.c.b16 %v637, %v636
  %v702 = vpack.c.b16 %v639, %v638
  %v703 = vpack.c.b16 %v641, %v640
  %v704 = vpack.c.b16 %v643, %v642
  %v705 = vpack.c.b16 %v645, %v644
  %v706 = vpack.c.b16 %v647, %v646
  %v707 = vpack.c.b16 %v649, %v648
  %v708 = vpack.c.b16 %v651, %v650
  %v709 = vpack.c.b16 %v653, %v652
  %v710 = vpack.c.b16 %v655, %v654
  %v711 = vpack.c.b16 %v657, %v656
  %v712 = vpack.c.b16 %v659, %v658
  %v713 = vpack.c.b16 %v661, %v660
  %v714 = vpack.c.b16 %v663, %v662
  %v715 = vpack.c.b16 %v665, %v664
  %vm766 = vcmask 261120
  %v768 = vsel %vm766, %v368, 0
  %v771 = vsel %vm766, %v375, 0
  %v774 = vsel %vm766, %v382, 0
  %v777 = vsel %vm766, %v389, 0
  %v780 = vsel %vm766, %v396, 0
  %v783 = vsel %vm766, %v403, 0
  %v786 = vsel %vm766, %v410, 0
  %v789 = vsel %vm766, %v417, 0
  %791 = vmatprep.subr.bf16.mxu0 0
  %792 = vmatpush1.bf16.msra.mxu0 %v666
  %793 = vmatprep.subr.bf16.mxu0 0
  %794 = vmatpush1.bf16.msra.mxu0 %v667
  %795 = vmatprep.subr.bf16.mxu0 0
  %796 = vmatpush1.bf16.msra.mxu0 %v668
  %797 = vmatprep.subr.bf16.mxu0 0
  %798 = vmatpush1.bf16.msra.mxu0 %v669
  %799 = vmatprep.subr.bf16.mxu0 0
  %800 = vmatpush1.bf16.msra.mxu0 %v670
  %801 = vmatprep.subr.bf16.mxu0 0
  %802 = vmatpush1.bf16.msra.mxu0 %v671
  %803 = vmatprep.subr.bf16.mxu0 0
  %804 = vmatpush1.bf16.msra.mxu0 %v672
  %805 = vmatprep.subr.bf16.mxu0 0
  %806 = vmatpush1.bf16.msra.mxu0 %v673
  %807 = vmatprep.subr.bf16.mxu0 0
  %808 = vmatpush1.bf16.msra.mxu0 %v674
  %809 = vmatprep.subr.bf16.mxu0 0
  %810 = vmatpush1.bf16.msra.mxu0 %v675
  %811 = vmatprep.subr.bf16.mxu0 0
  %812 = vmatpush1.bf16.msra.mxu0 %v676
  %813 = vmatprep.subr.bf16.mxu0 0
  %814 = vmatpush1.bf16.msra.mxu0 %v677
  %815 = vmatprep.subr.bf16.mxu0 0
  %816 = vmatpush1.bf16.msra.mxu0 %v678
  %817 = vmatprep.subr.bf16.mxu0 0
  %818 = vmatpush1.bf16.msra.mxu0 %v679
  %819 = vmatprep.subr.bf16.mxu0 0
  %820 = vmatpush1.bf16.msra.mxu0 %v680
  %821 = vmatprep.subr.bf16.mxu0 0
  %822 = vmatpush1.bf16.msra.mxu0 %v681
  %823 = vmatprep.mubr.bf16.mxu0 %v363
  %824 = vmatmul.mubr.bf16.gmra.mrb[0].mxu0 %v362
  %v825 = vpop.f32.mrb[0].mxu0
  %v826 = vadd.f32 %v184, %v825
  %v827 = vpop.f32.mrb[0].mxu0
  %v828 = vpop.f32.mrb[0].mxu0
  %v829 = vadd.f32 %v184, %v828
  %v830 = vpop.f32.mrb[0].mxu0
  %831 = vmatprep.mubr.bf16.mxu0 %v370
  %832 = vmatmul.mubr.bf16.gmra.mrb[0].mxu0 %v369
  %v833 = vpop.f32.mrb[0].mxu0
  %v834 = vadd.f32 %v184, %v833
  %v835 = vpop.f32.mrb[0].mxu0
  %v836 = vpop.f32.mrb[0].mxu0
  %v837 = vadd.f32 %v184, %v836
  %v838 = vpop.f32.mrb[0].mxu0
  %839 = vmatprep.mubr.bf16.mxu0 %v377
  %840 = vmatmul.mubr.bf16.gmra.mrb[0].mxu0 %v376
  %v841 = vpop.f32.mrb[0].mxu0
  %v842 = vadd.f32 %v184, %v841
  %v843 = vpop.f32.mrb[0].mxu0
  %v844 = vpop.f32.mrb[0].mxu0
  %v845 = vadd.f32 %v184, %v844
  %v846 = vpop.f32.mrb[0].mxu0
  %847 = vmatprep.mubr.bf16.mxu0 %v384
  %848 = vmatmul.mubr.bf16.gmra.mrb[0].mxu0 %v383
  %v849 = vpop.f32.mrb[0].mxu0
  %v850 = vadd.f32 %v184, %v849
  %v851 = vpop.f32.mrb[0].mxu0
  %v852 = vpop.f32.mrb[0].mxu0
  %v853 = vadd.f32 %v184, %v852
  %v854 = vpop.f32.mrb[0].mxu0
  %855 = vmatprep.mubr.bf16.mxu0 %v391
  %856 = vmatmul.mubr.bf16.gmra.mrb[0].mxu0 %v390
  %v857 = vpop.f32.mrb[0].mxu0
  %v858 = vadd.f32 %v184, %v857
  %v859 = vpop.f32.mrb[0].mxu0
  %v860 = vpop.f32.mrb[0].mxu0
  %v861 = vadd.f32 %v184, %v860
  %v862 = vpop.f32.mrb[0].mxu0
  %863 = vmatprep.mubr.bf16.mxu0 %v398
  %864 = vmatmul.mubr.bf16.gmra.mrb[0].mxu0 %v397
  %v865 = vpop.f32.mrb[0].mxu0
  %v866 = vadd.f32 %v184, %v865
  %v867 = vpop.f32.mrb[0].mxu0
  %v868 = vpop.f32.mrb[0].mxu0
  %v869 = vadd.f32 %v184, %v868
  %v870 = vpop.f32.mrb[0].mxu0
  %871 = vmatprep.mubr.bf16.mxu0 %v405
  %872 = vmatmul.mubr.bf16.gmra.mrb[0].mxu0 %v404
  %v873 = vpop.f32.mrb[0].mxu0
  %v874 = vadd.f32 %v184, %v873
  %v875 = vpop.f32.mrb[0].mxu0
  %v876 = vpop.f32.mrb[0].mxu0
  %v877 = vadd.f32 %v184, %v876
  %v878 = vpop.f32.mrb[0].mxu0
  %879 = vmatprep.mubr.bf16.mxu0 %v412
  %880 = vmatmul.mubr.bf16.gmra.mrb[0].mxu0 %v411
  %v881 = vpop.f32.mrb[0].mxu0
  %v882 = vadd.f32 %v184, %v881
  %v883 = vpop.f32.mrb[0].mxu0
  %v884 = vpop.f32.mrb[0].mxu0
  %v885 = vadd.f32 %v184, %v884
  %v886 = vpop.f32.mrb[0].mxu0
  %887 = vdwg.mxu0
  %888 = vmatprep.subr.bf16.mxu0 0
  %889 = vmatpush1.bf16.msra.mxu0 %v682
  %890 = vmatprep.subr.bf16.mxu0 0
  %891 = vmatpush1.bf16.msra.mxu0 %v683
  %892 = vmatprep.subr.bf16.mxu0 0
  %893 = vmatpush1.bf16.msra.mxu0 %v684
  %894 = vmatprep.subr.bf16.mxu0 0
  %895 = vmatpush1.bf16.msra.mxu0 %v685
  %896 = vmatprep.subr.bf16.mxu0 0
  %897 = vmatpush1.bf16.msra.mxu0 %v686
  %898 = vmatprep.subr.bf16.mxu0 0
  %899 = vmatpush1.bf16.msra.mxu0 %v687
  %900 = vmatprep.subr.bf16.mxu0 0
  %901 = vmatpush1.bf16.msra.mxu0 %v688
  %902 = vmatprep.subr.bf16.mxu0 0
  %903 = vmatpush1.bf16.msra.mxu0 %v689
  %904 = vmatprep.subr.bf16.mxu0 0
  %905 = vmatpush1.bf16.msra.mxu0 %v690
  %906 = vmatprep.subr.bf16.mxu0 0
  %907 = vmatpush1.bf16.msra.mxu0 %v691
  %908 = vmatprep.subr.bf16.mxu0 0
  %909 = vmatpush1.bf16.msra.mxu0 %v692
  %910 = vmatprep.subr.bf16.mxu0 0
  %911 = vmatpush1.bf16.msra.mxu0 %v693
  %912 = vmatprep.subr.bf16.mxu0 0
  %913 = vmatpush1.bf16.msra.mxu0 %v694
  %914 = vmatprep.subr.bf16.mxu0 0
  %915 = vmatpush1.bf16.msra.mxu0 %v695
  %916 = vmatprep.subr.bf16.mxu0 0
  %917 = vmatpush1.bf16.msra.mxu0 %v696
  %918 = vmatprep.subr.bf16.mxu0 0
  %919 = vmatpush1.bf16.msra.mxu0 %v697
  %920 = vmatprep.mubr.bf16.mxu0 %v365
  %921 = vmatmul.mubr.bf16.gmra.mrb[0].mxu0 %v364
  %v922 = vpop.f32.mrb[0].mxu0
  %v923 = vadd.f32 %v826, %v922
  %v924 = vpop.f32.mrb[0].mxu0
  %v925 = vpop.f32.mrb[0].mxu0
  %v926 = vadd.f32 %v829, %v925
  %v927 = vpop.f32.mrb[0].mxu0
  %928 = vmatprep.mubr.bf16.mxu0 %v372
  %929 = vmatmul.mubr.bf16.gmra.mrb[0].mxu0 %v371
  %v930 = vpop.f32.mrb[0].mxu0
  %v931 = vadd.f32 %v834, %v930
  %v932 = vpop.f32.mrb[0].mxu0
  %v933 = vpop.f32.mrb[0].mxu0
  %v934 = vadd.f32 %v837, %v933
  %v935 = vpop.f32.mrb[0].mxu0
  %936 = vmatprep.mubr.bf16.mxu0 %v379
  %937 = vmatmul.mubr.bf16.gmra.mrb[0].mxu0 %v378
  %v938 = vpop.f32.mrb[0].mxu0
  %v939 = vadd.f32 %v842, %v938
  %v940 = vpop.f32.mrb[0].mxu0
  %v941 = vpop.f32.mrb[0].mxu0
  %v942 = vadd.f32 %v845, %v941
  %v943 = vpop.f32.mrb[0].mxu0
  %944 = vmatprep.mubr.bf16.mxu0 %v386
  %945 = vmatmul.mubr.bf16.gmra.mrb[0].mxu0 %v385
  %v946 = vpop.f32.mrb[0].mxu0
  %v947 = vadd.f32 %v850, %v946
  %v948 = vpop.f32.mrb[0].mxu0
  %v949 = vpop.f32.mrb[0].mxu0
  %v950 = vadd.f32 %v853, %v949
  %v951 = vpop.f32.mrb[0].mxu0
  %952 = vmatprep.mubr.bf16.mxu0 %v393
  %953 = vmatmul.mubr.bf16.gmra.mrb[0].mxu0 %v392
  %v954 = vpop.f32.mrb[0].mxu0
  %v955 = vadd.f32 %v858, %v954
  %v956 = vpop.f32.mrb[0].mxu0
  %v957 = vpop.f32.mrb[0].mxu0
  %v958 = vadd.f32 %v861, %v957
  %v959 = vpop.f32.mrb[0].mxu0
  %960 = vmatprep.mubr.bf16.mxu0 %v400
  %961 = vmatmul.mubr.bf16.gmra.mrb[0].mxu0 %v399
  %v962 = vpop.f32.mrb[0].mxu0
  %v963 = vadd.f32 %v866, %v962
  %v964 = vpop.f32.mrb[0].mxu0
  %v965 = vpop.f32.mrb[0].mxu0
  %v966 = vadd.f32 %v869, %v965
  %v967 = vpop.f32.mrb[0].mxu0
  %968 = vmatprep.mubr.bf16.mxu0 %v407
  %969 = vmatmul.mubr.bf16.gmra.mrb[0].mxu0 %v406
  %v970 = vpop.f32.mrb[0].mxu0
  %v971 = vadd.f32 %v874, %v970
  %v972 = vpop.f32.mrb[0].mxu0
  %v973 = vpop.f32.mrb[0].mxu0
  %v974 = vadd.f32 %v877, %v973
  %v975 = vpop.f32.mrb[0].mxu0
  %976 = vmatprep.mubr.bf16.mxu0 %v414
  %977 = vmatmul.mubr.bf16.gmra.mrb[0].mxu0 %v413
  %v978 = vpop.f32.mrb[0].mxu0
  %v979 = vadd.f32 %v882, %v978
  %v980 = vpop.f32.mrb[0].mxu0
  %v981 = vpop.f32.mrb[0].mxu0
  %v982 = vadd.f32 %v885, %v981
  %v983 = vpop.f32.mrb[0].mxu0
  %984 = vdwg.mxu0
  %985 = vmatprep.subr.bf16.mxu0 0
  %986 = vmatpush1.bf16.msra.mxu0 %v698
  %987 = vmatprep.subr.bf16.mxu0 0
  %988 = vmatpush1.bf16.msra.mxu0 %v699
  %989 = vmatprep.subr.bf16.mxu0 0
  %990 = vmatpush1.bf16.msra.mxu0 %v700
  %991 = vmatprep.subr.bf16.mxu0 0
  %992 = vmatpush1.bf16.msra.mxu0 %v701
  %993 = vmatprep.subr.bf16.mxu0 0
  %994 = vmatpush1.bf16.msra.mxu0 %v702
  %995 = vmatprep.subr.bf16.mxu0 0
  %996 = vmatpush1.bf16.msra.mxu0 %v703
  %997 = vmatprep.subr.bf16.mxu0 0
  %998 = vmatpush1.bf16.msra.mxu0 %v704
  %999 = vmatprep.subr.bf16.mxu0 0
  %1000 = vmatpush1.bf16.msra.mxu0 %v705
  %1001 = vmatprep.subr.bf16.mxu0 0
  %1002 = vmatpush1.bf16.msra.mxu0 %v706
  %1003 = vmatprep.subr.bf16.mxu0 0
  %1004 = vmatpush1.bf16.msra.mxu0 %v707
  %1005 = vmatprep.subr.bf16.mxu0 0
  %1006 = vmatpush1.bf16.msra.mxu0 %v708
  %1007 = vmatprep.subr.bf16.mxu0 0
  %1008 = vmatpush1.bf16.msra.mxu0 %v709
  %1009 = vmatprep.subr.bf16.mxu0 0
  %1010 = vmatpush1.bf16.msra.mxu0 %v710
  %1011 = vmatprep.subr.bf16.mxu0 0
  %1012 = vmatpush1.bf16.msra.mxu0 %v711
  %1013 = vmatprep.subr.bf16.mxu0 0
  %1014 = vmatpush1.bf16.msra.mxu0 %v712
  %1015 = vmatprep.subr.bf16.mxu0 0
  %1016 = vmatpush1.bf16.msra.mxu0 %v713
  %1017 = vmatprep.mubr.bf16.mxu0 %v367
  %1018 = vmatmul.mubr.bf16.gmra.mrb[0].mxu0 %v366
  %v1019 = vpop.f32.mrb[0].mxu0
  %v1020 = vadd.f32 %v923, %v1019
  %v1021 = vpop.f32.mrb[0].mxu0
  %v1022 = vpop.f32.mrb[0].mxu0
  %v1023 = vadd.f32 %v926, %v1022
  %v1024 = vpop.f32.mrb[0].mxu0
  %1025 = vmatprep.mubr.bf16.mxu0 %v374
  %1026 = vmatmul.mubr.bf16.gmra.mrb[0].mxu0 %v373
  %v1027 = vpop.f32.mrb[0].mxu0
  %v1028 = vadd.f32 %v931, %v1027
  %v1029 = vpop.f32.mrb[0].mxu0
  %v1030 = vpop.f32.mrb[0].mxu0
  %v1031 = vadd.f32 %v934, %v1030
  %v1032 = vpop.f32.mrb[0].mxu0
  %1033 = vmatprep.mubr.bf16.mxu0 %v381
  %1034 = vmatmul.mubr.bf16.gmra.mrb[0].mxu0 %v380
  %v1035 = vpop.f32.mrb[0].mxu0
  %v1036 = vadd.f32 %v939, %v1035
  %v1037 = vpop.f32.mrb[0].mxu0
  %v1038 = vpop.f32.mrb[0].mxu0
  %v1039 = vadd.f32 %v942, %v1038
  %v1040 = vpop.f32.mrb[0].mxu0
  %1041 = vmatprep.mubr.bf16.mxu0 %v388
  %1042 = vmatmul.mubr.bf16.gmra.mrb[0].mxu0 %v387
  %v1043 = vpop.f32.mrb[0].mxu0
  %v1044 = vadd.f32 %v947, %v1043
  %v1045 = vpop.f32.mrb[0].mxu0
  %v1046 = vpop.f32.mrb[0].mxu0
  %v1047 = vadd.f32 %v950, %v1046
  %v1048 = vpop.f32.mrb[0].mxu0
  %1049 = vmatprep.mubr.bf16.mxu0 %v395
  %1050 = vmatmul.mubr.bf16.gmra.mrb[0].mxu0 %v394
  %v1051 = vpop.f32.mrb[0].mxu0
  %v1052 = vadd.f32 %v955, %v1051
  %v1053 = vpop.f32.mrb[0].mxu0
  %v1054 = vpop.f32.mrb[0].mxu0
  %v1055 = vadd.f32 %v958, %v1054
  %v1056 = vpop.f32.mrb[0].mxu0
  %1057 = vmatprep.mubr.bf16.mxu0 %v402
  %1058 = vmatmul.mubr.bf16.gmra.mrb[0].mxu0 %v401
  %v1059 = vpop.f32.mrb[0].mxu0
  %v1060 = vadd.f32 %v963, %v1059
  %v1061 = vpop.f32.mrb[0].mxu0
  %v1062 = vpop.f32.mrb[0].mxu0
  %v1063 = vadd.f32 %v966, %v1062
  %v1064 = vpop.f32.mrb[0].mxu0
  %1065 = vmatprep.mubr.bf16.mxu0 %v409
  %1066 = vmatmul.mubr.bf16.gmra.mrb[0].mxu0 %v408
  %v1067 = vpop.f32.mrb[0].mxu0
  %v1068 = vadd.f32 %v971, %v1067
  %v1069 = vpop.f32.mrb[0].mxu0
  %v1070 = vpop.f32.mrb[0].mxu0
  %v1071 = vadd.f32 %v974, %v1070
  %v1072 = vpop.f32.mrb[0].mxu0
  %1073 = vmatprep.mubr.bf16.mxu0 %v416
  %1074 = vmatmul.mubr.bf16.gmra.mrb[0].mxu0 %v415
  %v1075 = vpop.f32.mrb[0].mxu0
  %v1076 = vadd.f32 %v979, %v1075
  %v1077 = vpop.f32.mrb[0].mxu0
  %v1078 = vpop.f32.mrb[0].mxu0
  %v1079 = vadd.f32 %v982, %v1078
  %v1080 = vpop.f32.mrb[0].mxu0
  %1081 = vdwg.mxu0
  %1082 = vmatprep.subr.bf16.mxu0 0
  %1083 = vmatpush1.bf16.msra.mxu0 %v714
  %1084 = vmatprep.subr.bf16.mxu0 0
  %1085 = vmatpush1.bf16.msra.mxu0 %v715
  %1086 = vmatprep.subr.bf16.mxu0 0
  %1087 = vmatpush1.bf16.msra.mxu0 0
  %1088 = vmatprep.subr.bf16.mxu0 0
  %1089 = vmatpush1.bf16.msra.mxu0 0
  %1090 = vmatprep.subr.bf16.mxu0 0
  %1091 = vmatpush1.bf16.msra.mxu0 0
  %1092 = vmatprep.subr.bf16.mxu0 0
  %1093 = vmatpush1.bf16.msra.mxu0 0
  %1094 = vmatprep.subr.bf16.mxu0 0
  %1095 = vmatpush1.bf16.msra.mxu0 0
  %1096 = vmatprep.subr.bf16.mxu0 0
  %1097 = vmatpush1.bf16.msra.mxu0 0
  %1098 = vmatprep.subr.bf16.mxu0 0
  %1099 = vmatpush1.bf16.msra.mxu0 0
  %1100 = vmatprep.subr.bf16.mxu0 0
  %1101 = vmatpush1.bf16.msra.mxu0 0
  %1102 = vmatprep.subr.bf16.mxu0 0
  %1103 = vmatpush1.bf16.msra.mxu0 0
  %1104 = vmatprep.subr.bf16.mxu0 0
  %1105 = vmatpush1.bf16.msra.mxu0 0
  %1106 = vmatprep.subr.bf16.mxu0 0
  %1107 = vmatpush1.bf16.msra.mxu0 0
  %1108 = vmatprep.subr.bf16.mxu0 0
  %1109 = vmatpush1.bf16.msra.mxu0 0
  %1110 = vmatprep.subr.bf16.mxu0 0
  %1111 = vmatpush1.bf16.msra.mxu0 0
  %1112 = vmatprep.subr.bf16.mxu0 0
  %1113 = vmatpush1.bf16.msra.mxu0 0
  %1114 = vmatprep.mubr.bf16.mxu0 0
  %1115 = vmatmul.mubr.bf16.gmra.mrb[0].mxu0 %v768
  %v1116 = vpop.f32.mrb[0].mxu0
  %v1117 = vadd.f32 %v1020, %v1116
  %v1118 = vpop.f32.mrb[0].mxu0
  %v1119 = vpop.f32.mrb[0].mxu0
  %v1120 = vadd.f32 %v1023, %v1119
  %v1121 = vpop.f32.mrb[0].mxu0
  %1122 = vmatprep.mubr.bf16.mxu0 0
  %1123 = vmatmul.mubr.bf16.gmra.mrb[0].mxu0 %v771
  %v1124 = vpop.f32.mrb[0].mxu0
  %v1125 = vadd.f32 %v1028, %v1124
  %v1126 = vpop.f32.mrb[0].mxu0
  %v1127 = vpop.f32.mrb[0].mxu0
  %v1128 = vadd.f32 %v1031, %v1127
  %v1129 = vpop.f32.mrb[0].mxu0
  %1130 = vmatprep.mubr.bf16.mxu0 0
  %1131 = vmatmul.mubr.bf16.gmra.mrb[0].mxu0 %v774
  %v1132 = vpop.f32.mrb[0].mxu0
  %v1133 = vadd.f32 %v1036, %v1132
  %v1134 = vpop.f32.mrb[0].mxu0
  %v1135 = vpop.f32.mrb[0].mxu0
  %v1136 = vadd.f32 %v1039, %v1135
  %v1137 = vpop.f32.mrb[0].mxu0
  %1138 = vmatprep.mubr.bf16.mxu0 0
  %1139 = vmatmul.mubr.bf16.gmra.mrb[0].mxu0 %v777
  %v1140 = vpop.f32.mrb[0].mxu0
  %v1141 = vadd.f32 %v1044, %v1140
  %v1142 = vpop.f32.mrb[0].mxu0
  %v1143 = vpop.f32.mrb[0].mxu0
  %v1144 = vadd.f32 %v1047, %v1143
  %v1145 = vpop.f32.mrb[0].mxu0
  %1146 = vmatprep.mubr.bf16.mxu0 0
  %1147 = vmatmul.mubr.bf16.gmra.mrb[0].mxu0 %v780
  %v1148 = vpop.f32.mrb[0].mxu0
  %v1149 = vadd.f32 %v1052, %v1148
  %v1150 = vpop.f32.mrb[0].mxu0
  %v1151 = vpop.f32.mrb[0].mxu0
  %v1152 = vadd.f32 %v1055, %v1151
  %v1153 = vpop.f32.mrb[0].mxu0
  %1154 = vmatprep.mubr.bf16.mxu0 0
  %1155 = vmatmul.mubr.bf16.gmra.mrb[0].mxu0 %v783
  %v1156 = vpop.f32.mrb[0].mxu0
  %v1157 = vadd.f32 %v1060, %v1156
  %v1158 = vpop.f32.mrb[0].mxu0
  %v1159 = vpop.f32.mrb[0].mxu0
  %v1160 = vadd.f32 %v1063, %v1159
  %v1161 = vpop.f32.mrb[0].mxu0
  %1162 = vmatprep.mubr.bf16.mxu0 0
  %1163 = vmatmul.mubr.bf16.gmra.mrb[0].mxu0 %v786
  %v1164 = vpop.f32.mrb[0].mxu0
  %v1165 = vadd.f32 %v1068, %v1164
  %v1166 = vpop.f32.mrb[0].mxu0
  %v1167 = vpop.f32.mrb[0].mxu0
  %v1168 = vadd.f32 %v1071, %v1167
  %v1169 = vpop.f32.mrb[0].mxu0
  %1170 = vmatprep.mubr.bf16.mxu0 0
  %1171 = vmatmul.mubr.bf16.gmra.mrb[0].mxu0 %v789
  %v1172 = vpop.f32.mrb[0].mxu0
  %v1173 = vadd.f32 %v1076, %v1172
  %v1174 = vpop.f32.mrb[0].mxu0
  %v1175 = vpop.f32.mrb[0].mxu0
  %v1176 = vadd.f32 %v1079, %v1175
  %v1177 = vpop.f32.mrb[0].mxu0
  %1178 = vdwg.mxu0
  %v1179 = vmax.f32 %v1117, %v1125
  %v1180 = vmax.f32 %v1120, %v1128
  %v1181 = vmax.f32 %v1149, %v1157
  %v1182 = vmax.f32 %v1152, %v1160
  %v1183 = vmax.f32 %v1133, %v1141
  %v1184 = vmax.f32 %v1136, %v1144
  %v1185 = vmax.f32 %v1165, %v1173
  %v1186 = vmax.f32 %v1168, %v1176
  %v1187 = vmax.f32 %v1179, %v1183
  %v1188 = vmax.f32 %v1180, %v1184
  %v1189 = vmax.f32 %v1181, %v1185
  %v1190 = vmax.f32 %v1182, %v1186
  %v1191 = vpack.c.bf16 %v1188, %v1187
  %v1192 = vpack.c.bf16 %v1190, %v1189
  %v1195 = vunpack.c.l.b16 %v1191
  %v1196 = vunpack.c.h.b16 %v1191
  %v1197 = vunpack.c.l.b16 %v1192
  %v1198 = vunpack.c.h.b16 %v1192
  %v1199 = vpack.c.b16 %v1195, %v1195
  %v1200 = vpack.c.b16 %v1196, %v1196
  %v1201 = vpack.c.b16 %v1197, %v1197
  %v1202 = vpack.c.b16 %v1198, %v1198
  %1207 = vst [vmem:[%s3] sm:$0xf] %v1199
  %1208 = vst [vmem:[%s3 + $0x4] sm:$0xf] %v1200
  %1209 = vst [vmem:[%s3 + $0x8] sm:$0xf] %v1201
  %1210 = vst [vmem:[%s3 + $0xc] sm:$0xf] %v1202
  // Predicated region
  $region14: #{mnist_forward.4} parent=0 // pred_check
    _
  $region15: #{mnist_forward.4} parent=0 // pred_check_branch
    %1212 = sbr.rel (0) target = $region17
  $region16: #{mnist_forward.4} parent=0 // pred_region
    _
  $region17: #{mnist_forward.4} parent=0 // pred_fallthru
    _
  // Predicated region
  $region18: #{mnist_forward.4} parent=0 // pred_check
    _
  $region19: #{mnist_forward.4} parent=0 // pred_check_branch
    %1214 = sbr.rel (0) target = $region21
  $region20: #{mnist_forward.4} parent=0 // pred_region
    _
  $region21: #{mnist_forward.4} parent=0 // pred_fallthru
    _

// kernel: mnist_forward.5
$region0: #{mnist_forward.5}
  #allocation0 [shape = 'u32[]', space=smem, size = 0x4, offset = 0x4, fixed_abs, tag = 'smem constant byte address 0x4 - core index']
  #allocation1 [shape = 'u32[144,128]{1,0:T(1,128)}', space=vmem, size = 0x12000, scoped, tag = 'internal scratch']
  %s0 = inlined_call_operand.vmem [shape: bf16[8,1024], index: 0, kind: input, shape index: {}]
  %s1 = inlined_call_operand.vmem [shape: bf16[1024,1024], index: 1, kind: input, shape index: {}]
  %s2 = inlined_call_operand.vmem [shape: f32[1,1024], index: 2, kind: input, shape index: {}]
  %s3 = inlined_call_operand.vmem [shape: bf16[1024,128], index: 3, kind: input, shape index: {}]
  %s4 = inlined_call_operand.vmem [shape: f32[1,128], index: 4, kind: input, shape index: {}]
  %s5 = inlined_call_operand.vmem [shape: f32[8,128], index: 5, kind: output, shape index: {}]
  %s6 = sld [smem:[#allocation0]]
  $region30: #{mnist_forward.5} parent=0
    _
  %s8 = ssub.s32 1, %s6
  %s9 = scalar_select 0, %s8, %s6
  // Predicated region
  $region2: #{mnist_forward.5} parent=0 // pred_check
    _
  $region3: #{mnist_forward.5} parent=0 // pred_check_branch
    %11 = sbr.rel (0) target = $region5
  $region4: #{mnist_forward.5} parent=0 // pred_region
    _
  $region5: #{mnist_forward.5} parent=0 // pred_fallthru
    _
  // Predicated region
  $region6: #{mnist_forward.5} parent=0 // pred_check
    _
  $region7: #{mnist_forward.5} parent=0 // pred_check_branch
    %13 = sbr.rel (0) target = $region9
  $region8: #{mnist_forward.5} parent=0 // pred_region
    _
  $region9: #{mnist_forward.5} parent=0 // pred_fallthru
    _
  // Predicated region
  $region10: #{mnist_forward.5} parent=0 // pred_check
    _
  $region11: #{mnist_forward.5} parent=0 // pred_check_branch
    %15 = sbr.rel (0) target = $region13
  $region12: #{mnist_forward.5} parent=0 // pred_region
    _
  $region13: #{mnist_forward.5} parent=0 // pred_fallthru
    _
  // Predicated region
  $region14: #{mnist_forward.5} parent=0 // pred_check
    _
  $region15: #{mnist_forward.5} parent=0 // pred_check_branch
    %17 = sbr.rel (0) target = $region17
  $region16: #{mnist_forward.5} parent=0 // pred_region
    _
  $region17: #{mnist_forward.5} parent=0 // pred_fallthru
    _
  // Predicated region
  $region18: #{mnist_forward.5} parent=0 // pred_check
    _
  $region19: #{mnist_forward.5} parent=0 // pred_check_branch
    %19 = sbr.rel (0) target = $region21
  $region20: #{mnist_forward.5} parent=0 // pred_region
    _
  $region21: #{mnist_forward.5} parent=0 // pred_fallthru
    _
  %v21 = vld [vmem:[%s0] sm:$0xff]
  %v22 = vld [vmem:[%s0 + $0x8] sm:$0xff]
  %v23 = vld [vmem:[%s0 + $0x10] sm:$0xff]
  %v24 = vld [vmem:[%s0 + $0x18] sm:$0xff]
  %v25 = vld [vmem:[%s1] sm:$0xff]
  %v26 = vld [vmem:[%s1 + $0x8] sm:$0xff]
  %v27 = vld [vmem:[%s1 + $0x10] sm:$0xff]
  %v28 = vld [vmem:[%s1 + $0x18] sm:$0xff]
  %v29 = vld [vmem:[%s1 + $0x20] sm:$0xff]
  %v30 = vld [vmem:[%s1 + $0x28] sm:$0xff]
  %v31 = vld [vmem:[%s1 + $0x30] sm:$0xff]
  %v32 = vld [vmem:[%s1 + $0x38] sm:$0xff]
  %v33 = vld [vmem:[%s1 + $0x40] sm:$0xff]
  %v34 = vld [vmem:[%s1 + $0x48] sm:$0xff]
  %v35 = vld [vmem:[%s1 + $0x50] sm:$0xff]
  %v36 = vld [vmem:[%s1 + $0x58] sm:$0xff]
  %v37 = vld [vmem:[%s1 + $0x60] sm:$0xff]
  %v38 = vld [vmem:[%s1 + $0x68] sm:$0xff]
  %v39 = vld [vmem:[%s1 + $0x70] sm:$0xff]
  %v40 = vld [vmem:[%s1 + $0x78] sm:$0xff]
  %v41 = vld [vmem:[%s1 + $0x80] sm:$0xff]
  %v42 = vld [vmem:[%s1 + $0x88] sm:$0xff]
  %v43 = vld [vmem:[%s1 + $0x90] sm:$0xff]
  %v44 = vld [vmem:[%s1 + $0x98] sm:$0xff]
  %v45 = vld [vmem:[%s1 + $0xa0] sm:$0xff]
  %v46 = vld [vmem:[%s1 + $0xa8] sm:$0xff]
  %v47 = vld [vmem:[%s1 + $0xb0] sm:$0xff]
  %v48 = vld [vmem:[%s1 + $0xb8] sm:$0xff]
  %v49 = vld [vmem:[%s1 + $0xc0] sm:$0xff]
  %v50 = vld [vmem:[%s1 + $0xc8] sm:$0xff]
  %v51 = vld [vmem:[%s1 + $0xd0] sm:$0xff]
  %v52 = vld [vmem:[%s1 + $0xd8] sm:$0xff]
  %v53 = vld [vmem:[%s1 + $0xe0] sm:$0xff]
  %v54 = vld [vmem:[%s1 + $0xe8] sm:$0xff]
  %v55 = vld [vmem:[%s1 + $0xf0] sm:$0xff]
  %v56 = vld [vmem:[%s1 + $0xf8] sm:$0xff]
  %v57 = vld [vmem:[%s1 + $0x100] sm:$0xff]
  %v58 = vld [vmem:[%s1 + $0x108] sm:$0xff]
  %v59 = vld [vmem:[%s1 + $0x110] sm:$0xff]
  %v60 = vld [vmem:[%s1 + $0x118] sm:$0xff]
  %v61 = vld [vmem:[%s1 + $0x120] sm:$0xff]
  %v62 = vld [vmem:[%s1 + $0x128] sm:$0xff]
  %v63 = vld [vmem:[%s1 + $0x130] sm:$0xff]
  %v64 = vld [vmem:[%s1 + $0x138] sm:$0xff]
  %v65 = vld [vmem:[%s1 + $0x140] sm:$0xff]
  %v66 = vld [vmem:[%s1 + $0x148] sm:$0xff]
  %v67 = vld [vmem:[%s1 + $0x150] sm:$0xff]
  %v68 = vld [vmem:[%s1 + $0x158] sm:$0xff]
  %v69 = vld [vmem:[%s1 + $0x160] sm:$0xff]
  %v70 = vld [vmem:[%s1 + $0x168] sm:$0xff]
  %v71 = vld [vmem:[%s1 + $0x170] sm:$0xff]
  %v72 = vld [vmem:[%s1 + $0x178] sm:$0xff]
  %v73 = vld [vmem:[%s1 + $0x180] sm:$0xff]
  %v74 = vld [vmem:[%s1 + $0x188] sm:$0xff]
  %v75 = vld [vmem:[%s1 + $0x190] sm:$0xff]
  %v76 = vld [vmem:[%s1 + $0x198] sm:$0xff]
  %v77 = vld [vmem:[%s1 + $0x1a0] sm:$0xff]
  %v78 = vld [vmem:[%s1 + $0x1a8] sm:$0xff]
  %v79 = vld [vmem:[%s1 + $0x1b0] sm:$0xff]
  %v80 = vld [vmem:[%s1 + $0x1b8] sm:$0xff]
  %v81 = vld [vmem:[%s1 + $0x1c0] sm:$0xff]
  %v82 = vld [vmem:[%s1 + $0x1c8] sm:$0xff]
  %v83 = vld [vmem:[%s1 + $0x1d0] sm:$0xff]
  %v84 = vld [vmem:[%s1 + $0x1d8] sm:$0xff]
  %v85 = vld [vmem:[%s1 + $0x1e0] sm:$0xff]
  %v86 = vld [vmem:[%s1 + $0x1e8] sm:$0xff]
  %v87 = vld [vmem:[%s1 + $0x1f0] sm:$0xff]
  %v88 = vld [vmem:[%s1 + $0x1f8] sm:$0xff]
  %v89 = vld [vmem:[%s1 + $0x200] sm:$0xff]
  %v90 = vld [vmem:[%s1 + $0x208] sm:$0xff]
  %v91 = vld [vmem:[%s1 + $0x210] sm:$0xff]
  %v92 = vld [vmem:[%s1 + $0x218] sm:$0xff]
  %v93 = vld [vmem:[%s1 + $0x220] sm:$0xff]
  %v94 = vld [vmem:[%s1 + $0x228] sm:$0xff]
  %v95 = vld [vmem:[%s1 + $0x230] sm:$0xff]
  %v96 = vld [vmem:[%s1 + $0x238] sm:$0xff]
  %v97 = vld [vmem:[%s1 + $0x240] sm:$0xff]
  %v98 = vld [vmem:[%s1 + $0x248] sm:$0xff]
  %v99 = vld [vmem:[%s1 + $0x250] sm:$0xff]
  %v100 = vld [vmem:[%s1 + $0x258] sm:$0xff]
  %v101 = vld [vmem:[%s1 + $0x260] sm:$0xff]
  %v102 = vld [vmem:[%s1 + $0x268] sm:$0xff]
  %v103 = vld [vmem:[%s1 + $0x270] sm:$0xff]
  %v104 = vld [vmem:[%s1 + $0x278] sm:$0xff]
  %v105 = vld [vmem:[%s1 + $0x280] sm:$0xff]
  %v106 = vld [vmem:[%s1 + $0x288] sm:$0xff]
  %v107 = vld [vmem:[%s1 + $0x290] sm:$0xff]
  %v108 = vld [vmem:[%s1 + $0x298] sm:$0xff]
  %v109 = vld [vmem:[%s1 + $0x2a0] sm:$0xff]
  %v110 = vld [vmem:[%s1 + $0x2a8] sm:$0xff]
  %v111 = vld [vmem:[%s1 + $0x2b0] sm:$0xff]
  %v112 = vld [vmem:[%s1 + $0x2b8] sm:$0xff]
  %v113 = vld [vmem:[%s1 + $0x2c0] sm:$0xff]
  %v114 = vld [vmem:[%s1 + $0x2c8] sm:$0xff]
  %v115 = vld [vmem:[%s1 + $0x2d0] sm:$0xff]
  %v116 = vld [vmem:[%s1 + $0x2d8] sm:$0xff]
  %v117 = vld [vmem:[%s1 + $0x2e0] sm:$0xff]
  %v118 = vld [vmem:[%s1 + $0x2e8] sm:$0xff]
  %v119 = vld [vmem:[%s1 + $0x2f0] sm:$0xff]
  %v120 = vld [vmem:[%s1 + $0x2f8] sm:$0xff]
  %v121 = vld [vmem:[%s1 + $0x300] sm:$0xff]
  %v122 = vld [vmem:[%s1 + $0x308] sm:$0xff]
  %v123 = vld [vmem:[%s1 + $0x310] sm:$0xff]
  %v124 = vld [vmem:[%s1 + $0x318] sm:$0xff]
  %v125 = vld [vmem:[%s1 + $0x320] sm:$0xff]
  %v126 = vld [vmem:[%s1 + $0x328] sm:$0xff]
  %v127 = vld [vmem:[%s1 + $0x330] sm:$0xff]
  %v128 = vld [vmem:[%s1 + $0x338] sm:$0xff]
  %v129 = vld [vmem:[%s1 + $0x340] sm:$0xff]
  %v130 = vld [vmem:[%s1 + $0x348] sm:$0xff]
  %v131 = vld [vmem:[%s1 + $0x350] sm:$0xff]
  %v132 = vld [vmem:[%s1 + $0x358] sm:$0xff]
  %v133 = vld [vmem:[%s1 + $0x360] sm:$0xff]
  %v134 = vld [vmem:[%s1 + $0x368] sm:$0xff]
  %v135 = vld [vmem:[%s1 + $0x370] sm:$0xff]
  %v136 = vld [vmem:[%s1 + $0x378] sm:$0xff]
  %v137 = vld [vmem:[%s1 + $0x380] sm:$0xff]
  %v138 = vld [vmem:[%s1 + $0x388] sm:$0xff]
  %v139 = vld [vmem:[%s1 + $0x390] sm:$0xff]
  %v140 = vld [vmem:[%s1 + $0x398] sm:$0xff]
  %v141 = vld [vmem:[%s1 + $0x3a0] sm:$0xff]
  %v142 = vld [vmem:[%s1 + $0x3a8] sm:$0xff]
  %v143 = vld [vmem:[%s1 + $0x3b0] sm:$0xff]
  %v144 = vld [vmem:[%s1 + $0x3b8] sm:$0xff]
  %v145 = vld [vmem:[%s1 + $0x3c0] sm:$0xff]
  %v146 = vld [vmem:[%s1 + $0x3c8] sm:$0xff]
  %v147 = vld [vmem:[%s1 + $0x3d0] sm:$0xff]
  %v148 = vld [vmem:[%s1 + $0x3d8] sm:$0xff]
  %v149 = vld [vmem:[%s1 + $0x3e0] sm:$0xff]
  %v150 = vld [vmem:[%s1 + $0x3e8] sm:$0xff]
  %v151 = vld [vmem:[%s1 + $0x3f0] sm:$0xff]
  %v152 = vld [vmem:[%s1 + $0x3f8] sm:$0xff]
  %v153 = vld [vmem:[%s1 + $0x400] sm:$0xff]
  %v154 = vld [vmem:[%s1 + $0x408] sm:$0xff]
  %v155 = vld [vmem:[%s1 + $0x410] sm:$0xff]
  %v156 = vld [vmem:[%s1 + $0x418] sm:$0xff]
  %v157 = vld [vmem:[%s1 + $0x420] sm:$0xff]
  %v158 = vld [vmem:[%s1 + $0x428] sm:$0xff]
  %v159 = vld [vmem:[%s1 + $0x430] sm:$0xff]
  %v160 = vld [vmem:[%s1 + $0x438] sm:$0xff]
  %v161 = vld [vmem:[%s1 + $0x440] sm:$0xff]
  %v162 = vld [vmem:[%s1 + $0x448] sm:$0xff]
  %v163 = vld [vmem:[%s1 + $0x450] sm:$0xff]
  %v164 = vld [vmem:[%s1 + $0x458] sm:$0xff]
  %v165 = vld [vmem:[%s1 + $0x460] sm:$0xff]
  %v166 = vld [vmem:[%s1 + $0x468] sm:$0xff]
  %v167 = vld [vmem:[%s1 + $0x470] sm:$0xff]
  %v168 = vld [vmem:[%s1 + $0x478] sm:$0xff]
  %v169 = vld [vmem:[%s1 + $0x480] sm:$0xff]
  %v170 = vld [vmem:[%s1 + $0x488] sm:$0xff]
  %v171 = vld [vmem:[%s1 + $0x490] sm:$0xff]
  %v172 = vld [vmem:[%s1 + $0x498] sm:$0xff]
  %v173 = vld [vmem:[%s1 + $0x4a0] sm:$0xff]
  %v174 = vld [vmem:[%s1 + $0x4a8] sm:$0xff]
  %v175 = vld [vmem:[%s1 + $0x4b0] sm:$0xff]
  %v176 = vld [vmem:[%s1 + $0x4b8] sm:$0xff]
  %v177 = vld [vmem:[%s1 + $0x4c0] sm:$0xff]
  %v178 = vld [vmem:[%s1 + $0x4c8] sm:$0xff]
  %v179 = vld [vmem:[%s1 + $0x4d0] sm:$0xff]
  %v180 = vld [vmem:[%s1 + $0x4d8] sm:$0xff]
  %v181 = vld [vmem:[%s1 + $0x4e0] sm:$0xff]
  %v182 = vld [vmem:[%s1 + $0x4e8] sm:$0xff]
  %v183 = vld [vmem:[%s1 + $0x4f0] sm:$0xff]
  %v184 = vld [vmem:[%s1 + $0x4f8] sm:$0xff]
  %v185 = vld [vmem:[%s1 + $0x500] sm:$0xff]
  %v186 = vld [vmem:[%s1 + $0x508] sm:$0xff]
  %v187 = vld [vmem:[%s1 + $0x510] sm:$0xff]
  %v188 = vld [vmem:[%s1 + $0x518] sm:$0xff]
  %v189 = vld [vmem:[%s1 + $0x520] sm:$0xff]
  %v190 = vld [vmem:[%s1 + $0x528] sm:$0xff]
  %v191 = vld [vmem:[%s1 + $0x530] sm:$0xff]
  %v192 = vld [vmem:[%s1 + $0x538] sm:$0xff]
  %v193 = vld [vmem:[%s1 + $0x540] sm:$0xff]
  %v194 = vld [vmem:[%s1 + $0x548] sm:$0xff]
  %v195 = vld [vmem:[%s1 + $0x550] sm:$0xff]
  %v196 = vld [vmem:[%s1 + $0x558] sm:$0xff]
  %v197 = vld [vmem:[%s1 + $0x560] sm:$0xff]
  %v198 = vld [vmem:[%s1 + $0x568] sm:$0xff]
  %v199 = vld [vmem:[%s1 + $0x570] sm:$0xff]
  %v200 = vld [vmem:[%s1 + $0x578] sm:$0xff]
  %v201 = vld [vmem:[%s1 + $0x580] sm:$0xff]
  %v202 = vld [vmem:[%s1 + $0x588] sm:$0xff]
  %v203 = vld [vmem:[%s1 + $0x590] sm:$0xff]
  %v204 = vld [vmem:[%s1 + $0x598] sm:$0xff]
  %v205 = vld [vmem:[%s1 + $0x5a0] sm:$0xff]
  %v206 = vld [vmem:[%s1 + $0x5a8] sm:$0xff]
  %v207 = vld [vmem:[%s1 + $0x5b0] sm:$0xff]
  %v208 = vld [vmem:[%s1 + $0x5b8] sm:$0xff]
  %v209 = vld [vmem:[%s1 + $0x5c0] sm:$0xff]
  %v210 = vld [vmem:[%s1 + $0x5c8] sm:$0xff]
  %v211 = vld [vmem:[%s1 + $0x5d0] sm:$0xff]
  %v212 = vld [vmem:[%s1 + $0x5d8] sm:$0xff]
  %v213 = vld [vmem:[%s1 + $0x5e0] sm:$0xff]
  %v214 = vld [vmem:[%s1 + $0x5e8] sm:$0xff]
  %v215 = vld [vmem:[%s1 + $0x5f0] sm:$0xff]
  %v216 = vld [vmem:[%s1 + $0x5f8] sm:$0xff]
  %v217 = vld [vmem:[%s1 + $0x600] sm:$0xff]
  %v218 = vld [vmem:[%s1 + $0x608] sm:$0xff]
  %v219 = vld [vmem:[%s1 + $0x610] sm:$0xff]
  %v220 = vld [vmem:[%s1 + $0x618] sm:$0xff]
  %v221 = vld [vmem:[%s1 + $0x620] sm:$0xff]
  %v222 = vld [vmem:[%s1 + $0x628] sm:$0xff]
  %v223 = vld [vmem:[%s1 + $0x630] sm:$0xff]
  %v224 = vld [vmem:[%s1 + $0x638] sm:$0xff]
  %v225 = vld [vmem:[%s1 + $0x640] sm:$0xff]
  %v226 = vld [vmem:[%s1 + $0x648] sm:$0xff]
  %v227 = vld [vmem:[%s1 + $0x650] sm:$0xff]
  %v228 = vld [vmem:[%s1 + $0x658] sm:$0xff]
  %v229 = vld [vmem:[%s1 + $0x660] sm:$0xff]
  %v230 = vld [vmem:[%s1 + $0x668] sm:$0xff]
  %v231 = vld [vmem:[%s1 + $0x670] sm:$0xff]
  %v232 = vld [vmem:[%s1 + $0x678] sm:$0xff]
  %v233 = vld [vmem:[%s1 + $0x680] sm:$0xff]
  %v234 = vld [vmem:[%s1 + $0x688] sm:$0xff]
  %v235 = vld [vmem:[%s1 + $0x690] sm:$0xff]
  %v236 = vld [vmem:[%s1 + $0x698] sm:$0xff]
  %v237 = vld [vmem:[%s1 + $0x6a0] sm:$0xff]
  %v238 = vld [vmem:[%s1 + $0x6a8] sm:$0xff]
  %v239 = vld [vmem:[%s1 + $0x6b0] sm:$0xff]
  %v240 = vld [vmem:[%s1 + $0x6b8] sm:$0xff]
  %v241 = vld [vmem:[%s1 + $0x6c0] sm:$0xff]
  %v242 = vld [vmem:[%s1 + $0x6c8] sm:$0xff]
  %v243 = vld [vmem:[%s1 + $0x6d0] sm:$0xff]
  %v244 = vld [vmem:[%s1 + $0x6d8] sm:$0xff]
  %v245 = vld [vmem:[%s1 + $0x6e0] sm:$0xff]
  %v246 = vld [vmem:[%s1 + $0x6e8] sm:$0xff]
  %v247 = vld [vmem:[%s1 + $0x6f0] sm:$0xff]
  %v248 = vld [vmem:[%s1 + $0x6f8] sm:$0xff]
  %v249 = vld [vmem:[%s1 + $0x700] sm:$0xff]
  %v250 = vld [vmem:[%s1 + $0x708] sm:$0xff]
  %v251 = vld [vmem:[%s1 + $0x710] sm:$0xff]
  %v252 = vld [vmem:[%s1 + $0x718] sm:$0xff]
  %v253 = vld [vmem:[%s1 + $0x720] sm:$0xff]
  %v254 = vld [vmem:[%s1 + $0x728] sm:$0xff]
  %v255 = vld [vmem:[%s1 + $0x730] sm:$0xff]
  %v256 = vld [vmem:[%s1 + $0x738] sm:$0xff]
  %v257 = vld [vmem:[%s1 + $0x740] sm:$0xff]
  %v258 = vld [vmem:[%s1 + $0x748] sm:$0xff]
  %v259 = vld [vmem:[%s1 + $0x750] sm:$0xff]
  %v260 = vld [vmem:[%s1 + $0x758] sm:$0xff]
  %v261 = vld [vmem:[%s1 + $0x760] sm:$0xff]
  %v262 = vld [vmem:[%s1 + $0x768] sm:$0xff]
  %v263 = vld [vmem:[%s1 + $0x770] sm:$0xff]
  %v264 = vld [vmem:[%s1 + $0x778] sm:$0xff]
  %v265 = vld [vmem:[%s1 + $0x780] sm:$0xff]
  %v266 = vld [vmem:[%s1 + $0x788] sm:$0xff]
  %v267 = vld [vmem:[%s1 + $0x790] sm:$0xff]
  %v268 = vld [vmem:[%s1 + $0x798] sm:$0xff]
  %v269 = vld [vmem:[%s1 + $0x7a0] sm:$0xff]
  %v270 = vld [vmem:[%s1 + $0x7a8] sm:$0xff]
  %v271 = vld [vmem:[%s1 + $0x7b0] sm:$0xff]
  %v272 = vld [vmem:[%s1 + $0x7b8] sm:$0xff]
  %v273 = vld [vmem:[%s1 + $0x7c0] sm:$0xff]
  %v274 = vld [vmem:[%s1 + $0x7c8] sm:$0xff]
  %v275 = vld [vmem:[%s1 + $0x7d0] sm:$0xff]
  %v276 = vld [vmem:[%s1 + $0x7d8] sm:$0xff]
  %v277 = vld [vmem:[%s1 + $0x7e0] sm:$0xff]
  %v278 = vld [vmem:[%s1 + $0x7e8] sm:$0xff]
  %v279 = vld [vmem:[%s1 + $0x7f0] sm:$0xff]
  %v280 = vld [vmem:[%s1 + $0x7f8] sm:$0xff]
  %v281 = vld [vmem:[%s1 + $0x800] sm:$0xff]
  %v282 = vld [vmem:[%s1 + $0x808] sm:$0xff]
  %v283 = vld [vmem:[%s1 + $0x810] sm:$0xff]
  %v284 = vld [vmem:[%s1 + $0x818] sm:$0xff]
  %v285 = vld [vmem:[%s1 + $0x820] sm:$0xff]
  %v286 = vld [vmem:[%s1 + $0x828] sm:$0xff]
  %v287 = vld [vmem:[%s1 + $0x830] sm:$0xff]
  %v288 = vld [vmem:[%s1 + $0x838] sm:$0xff]
  %v289 = vld [vmem:[%s1 + $0x840] sm:$0xff]
  %v290 = vld [vmem:[%s1 + $0x848] sm:$0xff]
  %v291 = vld [vmem:[%s1 + $0x850] sm:$0xff]
  %v292 = vld [vmem:[%s1 + $0x858] sm:$0xff]
  %v293 = vld [vmem:[%s1 + $0x860] sm:$0xff]
  %v294 = vld [vmem:[%s1 + $0x868] sm:$0xff]
  %v295 = vld [vmem:[%s1 + $0x870] sm:$0xff]
  %v296 = vld [vmem:[%s1 + $0x878] sm:$0xff]
  %v297 = vld [vmem:[%s1 + $0x880] sm:$0xff]
  %v298 = vld [vmem:[%s1 + $0x888] sm:$0xff]
  %v299 = vld [vmem:[%s1 + $0x890] sm:$0xff]
  %v300 = vld [vmem:[%s1 + $0x898] sm:$0xff]
  %v301 = vld [vmem:[%s1 + $0x8a0] sm:$0xff]
  %v302 = vld [vmem:[%s1 + $0x8a8] sm:$0xff]
  %v303 = vld [vmem:[%s1 + $0x8b0] sm:$0xff]
  %v304 = vld [vmem:[%s1 + $0x8b8] sm:$0xff]
  %v305 = vld [vmem:[%s1 + $0x8c0] sm:$0xff]
  %v306 = vld [vmem:[%s1 + $0x8c8] sm:$0xff]
  %v307 = vld [vmem:[%s1 + $0x8d0] sm:$0xff]
  %v308 = vld [vmem:[%s1 + $0x8d8] sm:$0xff]
  %v309 = vld [vmem:[%s1 + $0x8e0] sm:$0xff]
  %v310 = vld [vmem:[%s1 + $0x8e8] sm:$0xff]
  %v311 = vld [vmem:[%s1 + $0x8f0] sm:$0xff]
  %v312 = vld [vmem:[%s1 + $0x8f8] sm:$0xff]
  %v313 = vld [vmem:[%s1 + $0x900] sm:$0xff]
  %v314 = vld [vmem:[%s1 + $0x908] sm:$0xff]
  %v315 = vld [vmem:[%s1 + $0x910] sm:$0xff]
  %v316 = vld [vmem:[%s1 + $0x918] sm:$0xff]
  %v317 = vld [vmem:[%s1 + $0x920] sm:$0xff]
  %v318 = vld [vmem:[%s1 + $0x928] sm:$0xff]
  %v319 = vld [vmem:[%s1 + $0x930] sm:$0xff]
  %v320 = vld [vmem:[%s1 + $0x938] sm:$0xff]
  %v321 = vld [vmem:[%s1 + $0x940] sm:$0xff]
  %v322 = vld [vmem:[%s1 + $0x948] sm:$0xff]
  %v323 = vld [vmem:[%s1 + $0x950] sm:$0xff]
  %v324 = vld [vmem:[%s1 + $0x958] sm:$0xff]
  %v325 = vld [vmem:[%s1 + $0x960] sm:$0xff]
  %v326 = vld [vmem:[%s1 + $0x968] sm:$0xff]
  %v327 = vld [vmem:[%s1 + $0x970] sm:$0xff]
  %v328 = vld [vmem:[%s1 + $0x978] sm:$0xff]
  %v329 = vld [vmem:[%s1 + $0x980] sm:$0xff]
  %v330 = vld [vmem:[%s1 + $0x988] sm:$0xff]
  %v331 = vld [vmem:[%s1 + $0x990] sm:$0xff]
  %v332 = vld [vmem:[%s1 + $0x998] sm:$0xff]
  %v333 = vld [vmem:[%s1 + $0x9a0] sm:$0xff]
  %v334 = vld [vmem:[%s1 + $0x9a8] sm:$0xff]
  %v335 = vld [vmem:[%s1 + $0x9b0] sm:$0xff]
  %v336 = vld [vmem:[%s1 + $0x9b8] sm:$0xff]
  %v337 = vld [vmem:[%s1 + $0x9c0] sm:$0xff]
  %v338 = vld [vmem:[%s1 + $0x9c8] sm:$0xff]
  %v339 = vld [vmem:[%s1 + $0x9d0] sm:$0xff]
  %v340 = vld [vmem:[%s1 + $0x9d8] sm:$0xff]
  %v341 = vld [vmem:[%s1 + $0x9e0] sm:$0xff]
  %v342 = vld [vmem:[%s1 + $0x9e8] sm:$0xff]
  %v343 = vld [vmem:[%s1 + $0x9f0] sm:$0xff]
  %v344 = vld [vmem:[%s1 + $0x9f8] sm:$0xff]
  %v345 = vld [vmem:[%s1 + $0xa00] sm:$0xff]
  %v346 = vld [vmem:[%s1 + $0xa08] sm:$0xff]
  %v347 = vld [vmem:[%s1 + $0xa10] sm:$0xff]
  %v348 = vld [vmem:[%s1 + $0xa18] sm:$0xff]
  %v349 = vld [vmem:[%s1 + $0xa20] sm:$0xff]
  %v350 = vld [vmem:[%s1 + $0xa28] sm:$0xff]
  %v351 = vld [vmem:[%s1 + $0xa30] sm:$0xff]
  %v352 = vld [vmem:[%s1 + $0xa38] sm:$0xff]
  %v353 = vld [vmem:[%s1 + $0xa40] sm:$0xff]
  %v354 = vld [vmem:[%s1 + $0xa48] sm:$0xff]
  %v355 = vld [vmem:[%s1 + $0xa50] sm:$0xff]
  %v356 = vld [vmem:[%s1 + $0xa58] sm:$0xff]
  %v357 = vld [vmem:[%s1 + $0xa60] sm:$0xff]
  %v358 = vld [vmem:[%s1 + $0xa68] sm:$0xff]
  %v359 = vld [vmem:[%s1 + $0xa70] sm:$0xff]
  %v360 = vld [vmem:[%s1 + $0xa78] sm:$0xff]
  %v361 = vld [vmem:[%s1 + $0xa80] sm:$0xff]
  %v362 = vld [vmem:[%s1 + $0xa88] sm:$0xff]
  %v363 = vld [vmem:[%s1 + $0xa90] sm:$0xff]
  %v364 = vld [vmem:[%s1 + $0xa98] sm:$0xff]
  %v365 = vld [vmem:[%s1 + $0xaa0] sm:$0xff]
  %v366 = vld [vmem:[%s1 + $0xaa8] sm:$0xff]
  %v367 = vld [vmem:[%s1 + $0xab0] sm:$0xff]
  %v368 = vld [vmem:[%s1 + $0xab8] sm:$0xff]
  %v369 = vld [vmem:[%s1 + $0xac0] sm:$0xff]
  %v370 = vld [vmem:[%s1 + $0xac8] sm:$0xff]
  %v371 = vld [vmem:[%s1 + $0xad0] sm:$0xff]
  %v372 = vld [vmem:[%s1 + $0xad8] sm:$0xff]
  %v373 = vld [vmem:[%s1 + $0xae0] sm:$0xff]
  %v374 = vld [vmem:[%s1 + $0xae8] sm:$0xff]
  %v375 = vld [vmem:[%s1 + $0xaf0] sm:$0xff]
  %v376 = vld [vmem:[%s1 + $0xaf8] sm:$0xff]
  %v377 = vld [vmem:[%s1 + $0xb00] sm:$0xff]
  %v378 = vld [vmem:[%s1 + $0xb08] sm:$0xff]
  %v379 = vld [vmem:[%s1 + $0xb10] sm:$0xff]
  %v380 = vld [vmem:[%s1 + $0xb18] sm:$0xff]
  %v381 = vld [vmem:[%s1 + $0xb20] sm:$0xff]
  %v382 = vld [vmem:[%s1 + $0xb28] sm:$0xff]
  %v383 = vld [vmem:[%s1 + $0xb30] sm:$0xff]
  %v384 = vld [vmem:[%s1 + $0xb38] sm:$0xff]
  %v385 = vld [vmem:[%s1 + $0xb40] sm:$0xff]
  %v386 = vld [vmem:[%s1 + $0xb48] sm:$0xff]
  %v387 = vld [vmem:[%s1 + $0xb50] sm:$0xff]
  %v388 = vld [vmem:[%s1 + $0xb58] sm:$0xff]
  %v389 = vld [vmem:[%s1 + $0xb60] sm:$0xff]
  %v390 = vld [vmem:[%s1 + $0xb68] sm:$0xff]
  %v391 = vld [vmem:[%s1 + $0xb70] sm:$0xff]
  %v392 = vld [vmem:[%s1 + $0xb78] sm:$0xff]
  %v393 = vld [vmem:[%s1 + $0xb80] sm:$0xff]
  %v394 = vld [vmem:[%s1 + $0xb88] sm:$0xff]
  %v395 = vld [vmem:[%s1 + $0xb90] sm:$0xff]
  %v396 = vld [vmem:[%s1 + $0xb98] sm:$0xff]
  %v397 = vld [vmem:[%s1 + $0xba0] sm:$0xff]
  %v398 = vld [vmem:[%s1 + $0xba8] sm:$0xff]
  %v399 = vld [vmem:[%s1 + $0xbb0] sm:$0xff]
  %v400 = vld [vmem:[%s1 + $0xbb8] sm:$0xff]
  %v401 = vld [vmem:[%s1 + $0xbc0] sm:$0xff]
  %v402 = vld [vmem:[%s1 + $0xbc8] sm:$0xff]
  %v403 = vld [vmem:[%s1 + $0xbd0] sm:$0xff]
  %v404 = vld [vmem:[%s1 + $0xbd8] sm:$0xff]
  %v405 = vld [vmem:[%s1 + $0xbe0] sm:$0xff]
  %v406 = vld [vmem:[%s1 + $0xbe8] sm:$0xff]
  %v407 = vld [vmem:[%s1 + $0xbf0] sm:$0xff]
  %v408 = vld [vmem:[%s1 + $0xbf8] sm:$0xff]
  %v409 = vld [vmem:[%s1 + $0xc00] sm:$0xff]
  %v410 = vld [vmem:[%s1 + $0xc08] sm:$0xff]
  %v411 = vld [vmem:[%s1 + $0xc10] sm:$0xff]
  %v412 = vld [vmem:[%s1 + $0xc18] sm:$0xff]
  %v413 = vld [vmem:[%s1 + $0xc20] sm:$0xff]
  %v414 = vld [vmem:[%s1 + $0xc28] sm:$0xff]
  %v415 = vld [vmem:[%s1 + $0xc30] sm:$0xff]
  %v416 = vld [vmem:[%s1 + $0xc38] sm:$0xff]
  %v417 = vld [vmem:[%s1 + $0xc40] sm:$0xff]
  %v418 = vld [vmem:[%s1 + $0xc48] sm:$0xff]
  %v419 = vld [vmem:[%s1 + $0xc50] sm:$0xff]
  %v420 = vld [vmem:[%s1 + $0xc58] sm:$0xff]
  %v421 = vld [vmem:[%s1 + $0xc60] sm:$0xff]
  %v422 = vld [vmem:[%s1 + $0xc68] sm:$0xff]
  %v423 = vld [vmem:[%s1 + $0xc70] sm:$0xff]
  %v424 = vld [vmem:[%s1 + $0xc78] sm:$0xff]
  %v425 = vld [vmem:[%s1 + $0xc80] sm:$0xff]
  %v426 = vld [vmem:[%s1 + $0xc88] sm:$0xff]
  %v427 = vld [vmem:[%s1 + $0xc90] sm:$0xff]
  %v428 = vld [vmem:[%s1 + $0xc98] sm:$0xff]
  %v429 = vld [vmem:[%s1 + $0xca0] sm:$0xff]
  %v430 = vld [vmem:[%s1 + $0xca8] sm:$0xff]
  %v431 = vld [vmem:[%s1 + $0xcb0] sm:$0xff]
  %v432 = vld [vmem:[%s1 + $0xcb8] sm:$0xff]
  %v433 = vld [vmem:[%s1 + $0xcc0] sm:$0xff]
  %v434 = vld [vmem:[%s1 + $0xcc8] sm:$0xff]
  %v435 = vld [vmem:[%s1 + $0xcd0] sm:$0xff]
  %v436 = vld [vmem:[%s1 + $0xcd8] sm:$0xff]
  %v437 = vld [vmem:[%s1 + $0xce0] sm:$0xff]
  %v438 = vld [vmem:[%s1 + $0xce8] sm:$0xff]
  %v439 = vld [vmem:[%s1 + $0xcf0] sm:$0xff]
  %v440 = vld [vmem:[%s1 + $0xcf8] sm:$0xff]
  %v441 = vld [vmem:[%s1 + $0xd00] sm:$0xff]
  %v442 = vld [vmem:[%s1 + $0xd08] sm:$0xff]
  %v443 = vld [vmem:[%s1 + $0xd10] sm:$0xff]
  %v444 = vld [vmem:[%s1 + $0xd18] sm:$0xff]
  %v445 = vld [vmem:[%s1 + $0xd20] sm:$0xff]
  %v446 = vld [vmem:[%s1 + $0xd28] sm:$0xff]
  %v447 = vld [vmem:[%s1 + $0xd30] sm:$0xff]
  %v448 = vld [vmem:[%s1 + $0xd38] sm:$0xff]
  %v449 = vld [vmem:[%s1 + $0xd40] sm:$0xff]
  %v450 = vld [vmem:[%s1 + $0xd48] sm:$0xff]
  %v451 = vld [vmem:[%s1 + $0xd50] sm:$0xff]
  %v452 = vld [vmem:[%s1 + $0xd58] sm:$0xff]
  %v453 = vld [vmem:[%s1 + $0xd60] sm:$0xff]
  %v454 = vld [vmem:[%s1 + $0xd68] sm:$0xff]
  %v455 = vld [vmem:[%s1 + $0xd70] sm:$0xff]
  %v456 = vld [vmem:[%s1 + $0xd78] sm:$0xff]
  %v457 = vld [vmem:[%s1 + $0xd80] sm:$0xff]
  %v458 = vld [vmem:[%s1 + $0xd88] sm:$0xff]
  %v459 = vld [vmem:[%s1 + $0xd90] sm:$0xff]
  %v460 = vld [vmem:[%s1 + $0xd98] sm:$0xff]
  %v461 = vld [vmem:[%s1 + $0xda0] sm:$0xff]
  %v462 = vld [vmem:[%s1 + $0xda8] sm:$0xff]
  %v463 = vld [vmem:[%s1 + $0xdb0] sm:$0xff]
  %v464 = vld [vmem:[%s1 + $0xdb8] sm:$0xff]
  %v465 = vld [vmem:[%s1 + $0xdc0] sm:$0xff]
  %v466 = vld [vmem:[%s1 + $0xdc8] sm:$0xff]
  %v467 = vld [vmem:[%s1 + $0xdd0] sm:$0xff]
  %v468 = vld [vmem:[%s1 + $0xdd8] sm:$0xff]
  %v469 = vld [vmem:[%s1 + $0xde0] sm:$0xff]
  %v470 = vld [vmem:[%s1 + $0xde8] sm:$0xff]
  %v471 = vld [vmem:[%s1 + $0xdf0] sm:$0xff]
  %v472 = vld [vmem:[%s1 + $0xdf8] sm:$0xff]
  %v473 = vld [vmem:[%s1 + $0xe00] sm:$0xff]
  %v474 = vld [vmem:[%s1 + $0xe08] sm:$0xff]
  %v475 = vld [vmem:[%s1 + $0xe10] sm:$0xff]
  %v476 = vld [vmem:[%s1 + $0xe18] sm:$0xff]
  %v477 = vld [vmem:[%s1 + $0xe20] sm:$0xff]
  %v478 = vld [vmem:[%s1 + $0xe28] sm:$0xff]
  %v479 = vld [vmem:[%s1 + $0xe30] sm:$0xff]
  %v480 = vld [vmem:[%s1 + $0xe38] sm:$0xff]
  %v481 = vld [vmem:[%s1 + $0xe40] sm:$0xff]
  %v482 = vld [vmem:[%s1 + $0xe48] sm:$0xff]
  %v483 = vld [vmem:[%s1 + $0xe50] sm:$0xff]
  %v484 = vld [vmem:[%s1 + $0xe58] sm:$0xff]
  %v485 = vld [vmem:[%s1 + $0xe60] sm:$0xff]
  %v486 = vld [vmem:[%s1 + $0xe68] sm:$0xff]
  %v487 = vld [vmem:[%s1 + $0xe70] sm:$0xff]
  %v488 = vld [vmem:[%s1 + $0xe78] sm:$0xff]
  %v489 = vld [vmem:[%s1 + $0xe80] sm:$0xff]
  %v490 = vld [vmem:[%s1 + $0xe88] sm:$0xff]
  %v491 = vld [vmem:[%s1 + $0xe90] sm:$0xff]
  %v492 = vld [vmem:[%s1 + $0xe98] sm:$0xff]
  %v493 = vld [vmem:[%s1 + $0xea0] sm:$0xff]
  %v494 = vld [vmem:[%s1 + $0xea8] sm:$0xff]
  %v495 = vld [vmem:[%s1 + $0xeb0] sm:$0xff]
  %v496 = vld [vmem:[%s1 + $0xeb8] sm:$0xff]
  %v497 = vld [vmem:[%s1 + $0xec0] sm:$0xff]
  %v498 = vld [vmem:[%s1 + $0xec8] sm:$0xff]
  %v499 = vld [vmem:[%s1 + $0xed0] sm:$0xff]
  %v500 = vld [vmem:[%s1 + $0xed8] sm:$0xff]
  %v501 = vld [vmem:[%s1 + $0xee0] sm:$0xff]
  %v502 = vld [vmem:[%s1 + $0xee8] sm:$0xff]
  %v503 = vld [vmem:[%s1 + $0xef0] sm:$0xff]
  %v504 = vld [vmem:[%s1 + $0xef8] sm:$0xff]
  %v505 = vld [vmem:[%s1 + $0xf00] sm:$0xff]
  %v506 = vld [vmem:[%s1 + $0xf08] sm:$0xff]
  %v507 = vld [vmem:[%s1 + $0xf10] sm:$0xff]
  %v508 = vld [vmem:[%s1 + $0xf18] sm:$0xff]
  %v509 = vld [vmem:[%s1 + $0xf20] sm:$0xff]
  %v510 = vld [vmem:[%s1 + $0xf28] sm:$0xff]
  %v511 = vld [vmem:[%s1 + $0xf30] sm:$0xff]
  %v512 = vld [vmem:[%s1 + $0xf38] sm:$0xff]
  %v513 = vld [vmem:[%s1 + $0xf40] sm:$0xff]
  %v514 = vld [vmem:[%s1 + $0xf48] sm:$0xff]
  %v515 = vld [vmem:[%s1 + $0xf50] sm:$0xff]
  %v516 = vld [vmem:[%s1 + $0xf58] sm:$0xff]
  %v517 = vld [vmem:[%s1 + $0xf60] sm:$0xff]
  %v518 = vld [vmem:[%s1 + $0xf68] sm:$0xff]
  %v519 = vld [vmem:[%s1 + $0xf70] sm:$0xff]
  %v520 = vld [vmem:[%s1 + $0xf78] sm:$0xff]
  %v521 = vld [vmem:[%s1 + $0xf80] sm:$0xff]
  %v522 = vld [vmem:[%s1 + $0xf88] sm:$0xff]
  %v523 = vld [vmem:[%s1 + $0xf90] sm:$0xff]
  %v524 = vld [vmem:[%s1 + $0xf98] sm:$0xff]
  %v525 = vld [vmem:[%s1 + $0xfa0] sm:$0xff]
  %v526 = vld [vmem:[%s1 + $0xfa8] sm:$0xff]
  %v527 = vld [vmem:[%s1 + $0xfb0] sm:$0xff]
  %v528 = vld [vmem:[%s1 + $0xfb8] sm:$0xff]
  %v529 = vld [vmem:[%s1 + $0xfc0] sm:$0xff]
  %v530 = vld [vmem:[%s1 + $0xfc8] sm:$0xff]
  %v531 = vld [vmem:[%s1 + $0xfd0] sm:$0xff]
  %v532 = vld [vmem:[%s1 + $0xfd8] sm:$0xff]
  %v533 = vld [vmem:[%s1 + $0xfe0] sm:$0xff]
  %v534 = vld [vmem:[%s1 + $0xfe8] sm:$0xff]
  %v535 = vld [vmem:[%s1 + $0xff0] sm:$0xff]
  %v536 = vld [vmem:[%s1 + $0xff8] sm:$0xff]
  %v537 = vld [vmem:[%s2] sm:$0xff]
  %v539 = vlaneseq
  %v540 = vshrl.u32 %v539, 7
  %v541 = vsub.s32 0, %v540
  %v542 = vrot.slane %v537, %v541
  %v543 = vlaneseq
  %v544 = vshrl.u32 %v543, 7
  %v545 = vsub.s32 1, %v544
  %v546 = vrot.slane %v537, %v545
  %v547 = vlaneseq
  %v548 = vshrl.u32 %v547, 7
  %v549 = vsub.s32 2, %v548
  %v550 = vrot.slane %v537, %v549
  %v551 = vlaneseq
  %v552 = vshrl.u32 %v551, 7
  %v553 = vsub.s32 3, %v552
  %v554 = vrot.slane %v537, %v553
  %v555 = vlaneseq
  %v556 = vshrl.u32 %v555, 7
  %v557 = vsub.s32 4, %v556
  %v558 = vrot.slane %v537, %v557
  %v559 = vlaneseq
  %v560 = vshrl.u32 %v559, 7
  %v561 = vsub.s32 5, %v560
  %v562 = vrot.slane %v537, %v561
  %v563 = vlaneseq
  %v564 = vshrl.u32 %v563, 7
  %v565 = vsub.s32 6, %v564
  %v566 = vrot.slane %v537, %v565
  %v567 = vlaneseq
  %v568 = vshrl.u32 %v567, 7
  %v569 = vsub.s32 7, %v568
  %v570 = vrot.slane %v537, %v569
  %v583 = vunpack.c.l.b16 %v21
  %v584 = vunpack.c.h.b16 %v21
  %v585 = vunpack.c.l.b16 %v22
  %v586 = vunpack.c.h.b16 %v22
  %v587 = vunpack.c.l.b16 %v23
  %v588 = vunpack.c.h.b16 %v23
  %v589 = vunpack.c.l.b16 %v24
  %v590 = vunpack.c.h.b16 %v24
  %v591 = vpack.c.b16 %v583, %v583
  %v592 = vpack.c.b16 %v584, %v584
  %v593 = vpack.c.b16 %v585, %v585
  %v594 = vpack.c.b16 %v586, %v586
  %v595 = vpack.c.b16 %v587, %v587
  %v596 = vpack.c.b16 %v588, %v588
  %v597 = vpack.c.b16 %v589, %v589
  %v598 = vpack.c.b16 %v590, %v590
  %v1119 = vunpack.c.l.b16 %v25
  %v1120 = vunpack.c.h.b16 %v25
  %v1121 = vunpack.c.l.b16 %v26
  %v1122 = vunpack.c.h.b16 %v26
  %v1123 = vunpack.c.l.b16 %v27
  %v1124 = vunpack.c.h.b16 %v27
  %v1125 = vunpack.c.l.b16 %v28
  %v1126 = vunpack.c.h.b16 %v28
  %v1127 = vunpack.c.l.b16 %v29
  %v1128 = vunpack.c.h.b16 %v29
  %v1129 = vunpack.c.l.b16 %v30
  %v1130 = vunpack.c.h.b16 %v30
  %v1131 = vunpack.c.l.b16 %v31
  %v1132 = vunpack.c.h.b16 %v31
  %v1133 = vunpack.c.l.b16 %v32
  %v1134 = vunpack.c.h.b16 %v32
  %v1135 = vunpack.c.l.b16 %v33
  %v1136 = vunpack.c.h.b16 %v33
  %v1137 = vunpack.c.l.b16 %v34
  %v1138 = vunpack.c.h.b16 %v34
  %v1139 = vunpack.c.l.b16 %v35
  %v1140 = vunpack.c.h.b16 %v35
  %v1141 = vunpack.c.l.b16 %v36
  %v1142 = vunpack.c.h.b16 %v36
  %v1143 = vunpack.c.l.b16 %v37
  %v1144 = vunpack.c.h.b16 %v37
  %v1145 = vunpack.c.l.b16 %v38
  %v1146 = vunpack.c.h.b16 %v38
  %v1147 = vunpack.c.l.b16 %v39
  %v1148 = vunpack.c.h.b16 %v39
  %v1149 = vunpack.c.l.b16 %v40
  %v1150 = vunpack.c.h.b16 %v40
  %v1151 = vunpack.c.l.b16 %v41
  %v1152 = vunpack.c.h.b16 %v41
  %v1153 = vunpack.c.l.b16 %v42
  %v1154 = vunpack.c.h.b16 %v42
  %v1155 = vunpack.c.l.b16 %v43
  %v1156 = vunpack.c.h.b16 %v43
  %v1157 = vunpack.c.l.b16 %v44
  %v1158 = vunpack.c.h.b16 %v44
  %v1159 = vunpack.c.l.b16 %v45
  %v1160 = vunpack.c.h.b16 %v45
  %v1161 = vunpack.c.l.b16 %v46
  %v1162 = vunpack.c.h.b16 %v46
  %v1163 = vunpack.c.l.b16 %v47
  %v1164 = vunpack.c.h.b16 %v47
  %v1165 = vunpack.c.l.b16 %v48
  %v1166 = vunpack.c.h.b16 %v48
  %v1167 = vunpack.c.l.b16 %v49
  %v1168 = vunpack.c.h.b16 %v49
  %v1169 = vunpack.c.l.b16 %v50
  %v1170 = vunpack.c.h.b16 %v50
  %v1171 = vunpack.c.l.b16 %v51
  %v1172 = vunpack.c.h.b16 %v51
  %v1173 = vunpack.c.l.b16 %v52
  %v1174 = vunpack.c.h.b16 %v52
  %v1175 = vunpack.c.l.b16 %v53
  %v1176 = vunpack.c.h.b16 %v53
  %v1177 = vunpack.c.l.b16 %v54
  %v1178 = vunpack.c.h.b16 %v54
  %v1179 = vunpack.c.l.b16 %v55
  %v1180 = vunpack.c.h.b16 %v55
  %v1181 = vunpack.c.l.b16 %v56
  %v1182 = vunpack.c.h.b16 %v56
  %v1183 = vunpack.c.l.b16 %v57
  %v1184 = vunpack.c.h.b16 %v57
  %v1185 = vunpack.c.l.b16 %v58
  %v1186 = vunpack.c.h.b16 %v58
  %v1187 = vunpack.c.l.b16 %v59
  %v1188 = vunpack.c.h.b16 %v59
  %v1189 = vunpack.c.l.b16 %v60
  %v1190 = vunpack.c.h.b16 %v60
  %v1191 = vunpack.c.l.b16 %v61
  %v1192 = vunpack.c.h.b16 %v61
  %v1193 = vunpack.c.l.b16 %v62
  %v1194 = vunpack.c.h.b16 %v62
  %v1195 = vunpack.c.l.b16 %v63
  %v1196 = vunpack.c.h.b16 %v63
  %v1197 = vunpack.c.l.b16 %v64
  %v1198 = vunpack.c.h.b16 %v64
  %v1199 = vunpack.c.l.b16 %v65
  %v1200 = vunpack.c.h.b16 %v65
  %v1201 = vunpack.c.l.b16 %v66
  %v1202 = vunpack.c.h.b16 %v66
  %v1203 = vunpack.c.l.b16 %v67
  %v1204 = vunpack.c.h.b16 %v67
  %v1205 = vunpack.c.l.b16 %v68
  %v1206 = vunpack.c.h.b16 %v68
  %v1207 = vunpack.c.l.b16 %v69
  %v1208 = vunpack.c.h.b16 %v69
  %v1209 = vunpack.c.l.b16 %v70
  %v1210 = vunpack.c.h.b16 %v70
  %v1211 = vunpack.c.l.b16 %v71
  %v1212 = vunpack.c.h.b16 %v71
  %v1213 = vunpack.c.l.b16 %v72
  %v1214 = vunpack.c.h.b16 %v72
  %v1215 = vunpack.c.l.b16 %v73
  %v1216 = vunpack.c.h.b16 %v73
  %v1217 = vunpack.c.l.b16 %v74
  %v1218 = vunpack.c.h.b16 %v74
  %v1219 = vunpack.c.l.b16 %v75
  %v1220 = vunpack.c.h.b16 %v75
  %v1221 = vunpack.c.l.b16 %v76
  %v1222 = vunpack.c.h.b16 %v76
  %v1223 = vunpack.c.l.b16 %v77
  %v1224 = vunpack.c.h.b16 %v77
  %v1225 = vunpack.c.l.b16 %v78
  %v1226 = vunpack.c.h.b16 %v78
  %v1227 = vunpack.c.l.b16 %v79
  %v1228 = vunpack.c.h.b16 %v79
  %v1229 = vunpack.c.l.b16 %v80
  %v1230 = vunpack.c.h.b16 %v80
  %v1231 = vunpack.c.l.b16 %v81
  %v1232 = vunpack.c.h.b16 %v81
  %v1233 = vunpack.c.l.b16 %v82
  %v1234 = vunpack.c.h.b16 %v82
  %v1235 = vunpack.c.l.b16 %v83
  %v1236 = vunpack.c.h.b16 %v83
  %v1237 = vunpack.c.l.b16 %v84
  %v1238 = vunpack.c.h.b16 %v84
  %v1239 = vunpack.c.l.b16 %v85
  %v1240 = vunpack.c.h.b16 %v85
  %v1241 = vunpack.c.l.b16 %v86
  %v1242 = vunpack.c.h.b16 %v86
  %v1243 = vunpack.c.l.b16 %v87
  %v1244 = vunpack.c.h.b16 %v87
  %v1245 = vunpack.c.l.b16 %v88
  %v1246 = vunpack.c.h.b16 %v88
  %v1247 = vunpack.c.l.b16 %v89
  %v1248 = vunpack.c.h.b16 %v89
  %v1249 = vunpack.c.l.b16 %v90
  %v1250 = vunpack.c.h.b16 %v90
  %v1251 = vunpack.c.l.b16 %v91
  %v1252 = vunpack.c.h.b16 %v91
  %v1253 = vunpack.c.l.b16 %v92
  %v1254 = vunpack.c.h.b16 %v92
  %v1255 = vunpack.c.l.b16 %v93
  %v1256 = vunpack.c.h.b16 %v93
  %v1257 = vunpack.c.l.b16 %v94
  %v1258 = vunpack.c.h.b16 %v94
  %v1259 = vunpack.c.l.b16 %v95
  %v1260 = vunpack.c.h.b16 %v95
  %v1261 = vunpack.c.l.b16 %v96
  %v1262 = vunpack.c.h.b16 %v96
  %v1263 = vunpack.c.l.b16 %v97
  %v1264 = vunpack.c.h.b16 %v97
  %v1265 = vunpack.c.l.b16 %v98
  %v1266 = vunpack.c.h.b16 %v98
  %v1267 = vunpack.c.l.b16 %v99
  %v1268 = vunpack.c.h.b16 %v99
  %v1269 = vunpack.c.l.b16 %v100
  %v1270 = vunpack.c.h.b16 %v100
  %v1271 = vunpack.c.l.b16 %v101
  %v1272 = vunpack.c.h.b16 %v101
  %v1273 = vunpack.c.l.b16 %v102
  %v1274 = vunpack.c.h.b16 %v102
  %v1275 = vunpack.c.l.b16 %v103
  %v1276 = vunpack.c.h.b16 %v103
  %v1277 = vunpack.c.l.b16 %v104
  %v1278 = vunpack.c.h.b16 %v104
  %v1279 = vunpack.c.l.b16 %v105
  %v1280 = vunpack.c.h.b16 %v105
  %v1281 = vunpack.c.l.b16 %v106
  %v1282 = vunpack.c.h.b16 %v106
  %v1283 = vunpack.c.l.b16 %v107
  %v1284 = vunpack.c.h.b16 %v107
  %v1285 = vunpack.c.l.b16 %v108
  %v1286 = vunpack.c.h.b16 %v108
  %v1287 = vunpack.c.l.b16 %v109
  %v1288 = vunpack.c.h.b16 %v109
  %v1289 = vunpack.c.l.b16 %v110
  %v1290 = vunpack.c.h.b16 %v110
  %v1291 = vunpack.c.l.b16 %v111
  %v1292 = vunpack.c.h.b16 %v111
  %v1293 = vunpack.c.l.b16 %v112
  %v1294 = vunpack.c.h.b16 %v112
  %v1295 = vunpack.c.l.b16 %v113
  %v1296 = vunpack.c.h.b16 %v113
  %v1297 = vunpack.c.l.b16 %v114
  %v1298 = vunpack.c.h.b16 %v114
  %v1299 = vunpack.c.l.b16 %v115
  %v1300 = vunpack.c.h.b16 %v115
  %v1301 = vunpack.c.l.b16 %v116
  %v1302 = vunpack.c.h.b16 %v116
  %v1303 = vunpack.c.l.b16 %v117
  %v1304 = vunpack.c.h.b16 %v117
  %v1305 = vunpack.c.l.b16 %v118
  %v1306 = vunpack.c.h.b16 %v118
  %v1307 = vunpack.c.l.b16 %v119
  %v1308 = vunpack.c.h.b16 %v119
  %v1309 = vunpack.c.l.b16 %v120
  %v1310 = vunpack.c.h.b16 %v120
  %v1311 = vunpack.c.l.b16 %v121
  %v1312 = vunpack.c.h.b16 %v121
  %v1313 = vunpack.c.l.b16 %v122
  %v1314 = vunpack.c.h.b16 %v122
  %v1315 = vunpack.c.l.b16 %v123
  %v1316 = vunpack.c.h.b16 %v123
  %v1317 = vunpack.c.l.b16 %v124
  %v1318 = vunpack.c.h.b16 %v124
  %v1319 = vunpack.c.l.b16 %v125
  %v1320 = vunpack.c.h.b16 %v125
  %v1321 = vunpack.c.l.b16 %v126
  %v1322 = vunpack.c.h.b16 %v126
  %v1323 = vunpack.c.l.b16 %v127
  %v1324 = vunpack.c.h.b16 %v127
  %v1325 = vunpack.c.l.b16 %v128
  %v1326 = vunpack.c.h.b16 %v128
  %v1327 = vunpack.c.l.b16 %v129
  %v1328 = vunpack.c.h.b16 %v129
  %v1329 = vunpack.c.l.b16 %v130
  %v1330 = vunpack.c.h.b16 %v130
  %v1331 = vunpack.c.l.b16 %v131
  %v1332 = vunpack.c.h.b16 %v131
  %v1333 = vunpack.c.l.b16 %v132
  %v1334 = vunpack.c.h.b16 %v132
  %v1335 = vunpack.c.l.b16 %v133
  %v1336 = vunpack.c.h.b16 %v133
  %v1337 = vunpack.c.l.b16 %v134
  %v1338 = vunpack.c.h.b16 %v134
  %v1339 = vunpack.c.l.b16 %v135
  %v1340 = vunpack.c.h.b16 %v135
  %v1341 = vunpack.c.l.b16 %v136
  %v1342 = vunpack.c.h.b16 %v136
  %v1343 = vunpack.c.l.b16 %v137
  %v1344 = vunpack.c.h.b16 %v137
  %v1345 = vunpack.c.l.b16 %v138
  %v1346 = vunpack.c.h.b16 %v138
  %v1347 = vunpack.c.l.b16 %v139
  %v1348 = vunpack.c.h.b16 %v139
  %v1349 = vunpack.c.l.b16 %v140
  %v1350 = vunpack.c.h.b16 %v140
  %v1351 = vunpack.c.l.b16 %v141
  %v1352 = vunpack.c.h.b16 %v141
  %v1353 = vunpack.c.l.b16 %v142
  %v1354 = vunpack.c.h.b16 %v142
  %v1355 = vunpack.c.l.b16 %v143
  %v1356 = vunpack.c.h.b16 %v143
  %v1357 = vunpack.c.l.b16 %v144
  %v1358 = vunpack.c.h.b16 %v144
  %v1359 = vunpack.c.l.b16 %v145
  %v1360 = vunpack.c.h.b16 %v145
  %v1361 = vunpack.c.l.b16 %v146
  %v1362 = vunpack.c.h.b16 %v146
  %v1363 = vunpack.c.l.b16 %v147
  %v1364 = vunpack.c.h.b16 %v147
  %v1365 = vunpack.c.l.b16 %v148
  %v1366 = vunpack.c.h.b16 %v148
  %v1367 = vunpack.c.l.b16 %v149
  %v1368 = vunpack.c.h.b16 %v149
  %v1369 = vunpack.c.l.b16 %v150
  %v1370 = vunpack.c.h.b16 %v150
  %v1371 = vunpack.c.l.b16 %v151
  %v1372 = vunpack.c.h.b16 %v151
  %v1373 = vunpack.c.l.b16 %v152
  %v1374 = vunpack.c.h.b16 %v152
  %v1375 = vunpack.c.l.b16 %v153
  %v1376 = vunpack.c.h.b16 %v153
  %v1377 = vunpack.c.l.b16 %v154
  %v1378 = vunpack.c.h.b16 %v154
  %v1379 = vunpack.c.l.b16 %v155
  %v1380 = vunpack.c.h.b16 %v155
  %v1381 = vunpack.c.l.b16 %v156
  %v1382 = vunpack.c.h.b16 %v156
  %v1383 = vunpack.c.l.b16 %v157
  %v1384 = vunpack.c.h.b16 %v157
  %v1385 = vunpack.c.l.b16 %v158
  %v1386 = vunpack.c.h.b16 %v158
  %v1387 = vunpack.c.l.b16 %v159
  %v1388 = vunpack.c.h.b16 %v159
  %v1389 = vunpack.c.l.b16 %v160
  %v1390 = vunpack.c.h.b16 %v160
  %v1391 = vunpack.c.l.b16 %v161
  %v1392 = vunpack.c.h.b16 %v161
  %v1393 = vunpack.c.l.b16 %v162
  %v1394 = vunpack.c.h.b16 %v162
  %v1395 = vunpack.c.l.b16 %v163
  %v1396 = vunpack.c.h.b16 %v163
  %v1397 = vunpack.c.l.b16 %v164
  %v1398 = vunpack.c.h.b16 %v164
  %v1399 = vunpack.c.l.b16 %v165
  %v1400 = vunpack.c.h.b16 %v165
  %v1401 = vunpack.c.l.b16 %v166
  %v1402 = vunpack.c.h.b16 %v166
  %v1403 = vunpack.c.l.b16 %v167
  %v1404 = vunpack.c.h.b16 %v167
  %v1405 = vunpack.c.l.b16 %v168
  %v1406 = vunpack.c.h.b16 %v168
  %v1407 = vunpack.c.l.b16 %v169
  %v1408 = vunpack.c.h.b16 %v169
  %v1409 = vunpack.c.l.b16 %v170
  %v1410 = vunpack.c.h.b16 %v170
  %v1411 = vunpack.c.l.b16 %v171
  %v1412 = vunpack.c.h.b16 %v171
  %v1413 = vunpack.c.l.b16 %v172
  %v1414 = vunpack.c.h.b16 %v172
  %v1415 = vunpack.c.l.b16 %v173
  %v1416 = vunpack.c.h.b16 %v173
  %v1417 = vunpack.c.l.b16 %v174
  %v1418 = vunpack.c.h.b16 %v174
  %v1419 = vunpack.c.l.b16 %v175
  %v1420 = vunpack.c.h.b16 %v175
  %v1421 = vunpack.c.l.b16 %v176
  %v1422 = vunpack.c.h.b16 %v176
  %v1423 = vunpack.c.l.b16 %v177
  %v1424 = vunpack.c.h.b16 %v177
  %v1425 = vunpack.c.l.b16 %v178
  %v1426 = vunpack.c.h.b16 %v178
  %v1427 = vunpack.c.l.b16 %v179
  %v1428 = vunpack.c.h.b16 %v179
  %v1429 = vunpack.c.l.b16 %v180
  %v1430 = vunpack.c.h.b16 %v180
  %v1431 = vunpack.c.l.b16 %v181
  %v1432 = vunpack.c.h.b16 %v181
  %v1433 = vunpack.c.l.b16 %v182
  %v1434 = vunpack.c.h.b16 %v182
  %v1435 = vunpack.c.l.b16 %v183
  %v1436 = vunpack.c.h.b16 %v183
  %v1437 = vunpack.c.l.b16 %v184
  %v1438 = vunpack.c.h.b16 %v184
  %v1439 = vunpack.c.l.b16 %v185
  %v1440 = vunpack.c.h.b16 %v185
  %v1441 = vunpack.c.l.b16 %v186
  %v1442 = vunpack.c.h.b16 %v186
  %v1443 = vunpack.c.l.b16 %v187
  %v1444 = vunpack.c.h.b16 %v187
  %v1445 = vunpack.c.l.b16 %v188
  %v1446 = vunpack.c.h.b16 %v188
  %v1447 = vunpack.c.l.b16 %v189
  %v1448 = vunpack.c.h.b16 %v189
  %v1449 = vunpack.c.l.b16 %v190
  %v1450 = vunpack.c.h.b16 %v190
  %v1451 = vunpack.c.l.b16 %v191
  %v1452 = vunpack.c.h.b16 %v191
  %v1453 = vunpack.c.l.b16 %v192
  %v1454 = vunpack.c.h.b16 %v192
  %v1455 = vunpack.c.l.b16 %v193
  %v1456 = vunpack.c.h.b16 %v193
  %v1457 = vunpack.c.l.b16 %v194
  %v1458 = vunpack.c.h.b16 %v194
  %v1459 = vunpack.c.l.b16 %v195
  %v1460 = vunpack.c.h.b16 %v195
  %v1461 = vunpack.c.l.b16 %v196
  %v1462 = vunpack.c.h.b16 %v196
  %v1463 = vunpack.c.l.b16 %v197
  %v1464 = vunpack.c.h.b16 %v197
  %v1465 = vunpack.c.l.b16 %v198
  %v1466 = vunpack.c.h.b16 %v198
  %v1467 = vunpack.c.l.b16 %v199
  %v1468 = vunpack.c.h.b16 %v199
  %v1469 = vunpack.c.l.b16 %v200
  %v1470 = vunpack.c.h.b16 %v200
  %v1471 = vunpack.c.l.b16 %v201
  %v1472 = vunpack.c.h.b16 %v201
  %v1473 = vunpack.c.l.b16 %v202
  %v1474 = vunpack.c.h.b16 %v202
  %v1475 = vunpack.c.l.b16 %v203
  %v1476 = vunpack.c.h.b16 %v203
  %v1477 = vunpack.c.l.b16 %v204
  %v1478 = vunpack.c.h.b16 %v204
  %v1479 = vunpack.c.l.b16 %v205
  %v1480 = vunpack.c.h.b16 %v205
  %v1481 = vunpack.c.l.b16 %v206
  %v1482 = vunpack.c.h.b16 %v206
  %v1483 = vunpack.c.l.b16 %v207
  %v1484 = vunpack.c.h.b16 %v207
  %v1485 = vunpack.c.l.b16 %v208
  %v1486 = vunpack.c.h.b16 %v208
  %v1487 = vunpack.c.l.b16 %v209
  %v1488 = vunpack.c.h.b16 %v209
  %v1489 = vunpack.c.l.b16 %v210
  %v1490 = vunpack.c.h.b16 %v210
  %v1491 = vunpack.c.l.b16 %v211
  %v1492 = vunpack.c.h.b16 %v211
  %v1493 = vunpack.c.l.b16 %v212
  %v1494 = vunpack.c.h.b16 %v212
  %v1495 = vunpack.c.l.b16 %v213
  %v1496 = vunpack.c.h.b16 %v213
  %v1497 = vunpack.c.l.b16 %v214
  %v1498 = vunpack.c.h.b16 %v214
  %v1499 = vunpack.c.l.b16 %v215
  %v1500 = vunpack.c.h.b16 %v215
  %v1501 = vunpack.c.l.b16 %v216
  %v1502 = vunpack.c.h.b16 %v216
  %v1503 = vunpack.c.l.b16 %v217
  %v1504 = vunpack.c.h.b16 %v217
  %v1505 = vunpack.c.l.b16 %v218
  %v1506 = vunpack.c.h.b16 %v218
  %v1507 = vunpack.c.l.b16 %v219
  %v1508 = vunpack.c.h.b16 %v219
  %v1509 = vunpack.c.l.b16 %v220
  %v1510 = vunpack.c.h.b16 %v220
  %v1511 = vunpack.c.l.b16 %v221
  %v1512 = vunpack.c.h.b16 %v221
  %v1513 = vunpack.c.l.b16 %v222
  %v1514 = vunpack.c.h.b16 %v222
  %v1515 = vunpack.c.l.b16 %v223
  %v1516 = vunpack.c.h.b16 %v223
  %v1517 = vunpack.c.l.b16 %v224
  %v1518 = vunpack.c.h.b16 %v224
  %v1519 = vunpack.c.l.b16 %v225
  %v1520 = vunpack.c.h.b16 %v225
  %v1521 = vunpack.c.l.b16 %v226
  %v1522 = vunpack.c.h.b16 %v226
  %v1523 = vunpack.c.l.b16 %v227
  %v1524 = vunpack.c.h.b16 %v227
  %v1525 = vunpack.c.l.b16 %v228
  %v1526 = vunpack.c.h.b16 %v228
  %v1527 = vunpack.c.l.b16 %v229
  %v1528 = vunpack.c.h.b16 %v229
  %v1529 = vunpack.c.l.b16 %v230
  %v1530 = vunpack.c.h.b16 %v230
  %v1531 = vunpack.c.l.b16 %v231
  %v1532 = vunpack.c.h.b16 %v231
  %v1533 = vunpack.c.l.b16 %v232
  %v1534 = vunpack.c.h.b16 %v232
  %v1535 = vunpack.c.l.b16 %v233
  %v1536 = vunpack.c.h.b16 %v233
  %v1537 = vunpack.c.l.b16 %v234
  %v1538 = vunpack.c.h.b16 %v234
  %v1539 = vunpack.c.l.b16 %v235
  %v1540 = vunpack.c.h.b16 %v235
  %v1541 = vunpack.c.l.b16 %v236
  %v1542 = vunpack.c.h.b16 %v236
  %v1543 = vunpack.c.l.b16 %v237
  %v1544 = vunpack.c.h.b16 %v237
  %v1545 = vunpack.c.l.b16 %v238
  %v1546 = vunpack.c.h.b16 %v238
  %v1547 = vunpack.c.l.b16 %v239
  %v1548 = vunpack.c.h.b16 %v239
  %v1549 = vunpack.c.l.b16 %v240
  %v1550 = vunpack.c.h.b16 %v240
  %v1551 = vunpack.c.l.b16 %v241
  %v1552 = vunpack.c.h.b16 %v241
  %v1553 = vunpack.c.l.b16 %v242
  %v1554 = vunpack.c.h.b16 %v242
  %v1555 = vunpack.c.l.b16 %v243
  %v1556 = vunpack.c.h.b16 %v243
  %v1557 = vunpack.c.l.b16 %v244
  %v1558 = vunpack.c.h.b16 %v244
  %v1559 = vunpack.c.l.b16 %v245
  %v1560 = vunpack.c.h.b16 %v245
  %v1561 = vunpack.c.l.b16 %v246
  %v1562 = vunpack.c.h.b16 %v246
  %v1563 = vunpack.c.l.b16 %v247
  %v1564 = vunpack.c.h.b16 %v247
  %v1565 = vunpack.c.l.b16 %v248
  %v1566 = vunpack.c.h.b16 %v248
  %v1567 = vunpack.c.l.b16 %v249
  %v1568 = vunpack.c.h.b16 %v249
  %v1569 = vunpack.c.l.b16 %v250
  %v1570 = vunpack.c.h.b16 %v250
  %v1571 = vunpack.c.l.b16 %v251
  %v1572 = vunpack.c.h.b16 %v251
  %v1573 = vunpack.c.l.b16 %v252
  %v1574 = vunpack.c.h.b16 %v252
  %v1575 = vunpack.c.l.b16 %v253
  %v1576 = vunpack.c.h.b16 %v253
  %v1577 = vunpack.c.l.b16 %v254
  %v1578 = vunpack.c.h.b16 %v254
  %v1579 = vunpack.c.l.b16 %v255
  %v1580 = vunpack.c.h.b16 %v255
  %v1581 = vunpack.c.l.b16 %v256
  %v1582 = vunpack.c.h.b16 %v256
  %v1583 = vunpack.c.l.b16 %v257
  %v1584 = vunpack.c.h.b16 %v257
  %v1585 = vunpack.c.l.b16 %v258
  %v1586 = vunpack.c.h.b16 %v258
  %v1587 = vunpack.c.l.b16 %v259
  %v1588 = vunpack.c.h.b16 %v259
  %v1589 = vunpack.c.l.b16 %v260
  %v1590 = vunpack.c.h.b16 %v260
  %v1591 = vunpack.c.l.b16 %v261
  %v1592 = vunpack.c.h.b16 %v261
  %v1593 = vunpack.c.l.b16 %v262
  %v1594 = vunpack.c.h.b16 %v262
  %v1595 = vunpack.c.l.b16 %v263
  %v1596 = vunpack.c.h.b16 %v263
  %v1597 = vunpack.c.l.b16 %v264
  %v1598 = vunpack.c.h.b16 %v264
  %v1599 = vunpack.c.l.b16 %v265
  %v1600 = vunpack.c.h.b16 %v265
  %v1601 = vunpack.c.l.b16 %v266
  %v1602 = vunpack.c.h.b16 %v266
  %v1603 = vunpack.c.l.b16 %v267
  %v1604 = vunpack.c.h.b16 %v267
  %v1605 = vunpack.c.l.b16 %v268
  %v1606 = vunpack.c.h.b16 %v268
  %v1607 = vunpack.c.l.b16 %v269
  %v1608 = vunpack.c.h.b16 %v269
  %v1609 = vunpack.c.l.b16 %v270
  %v1610 = vunpack.c.h.b16 %v270
  %v1611 = vunpack.c.l.b16 %v271
  %v1612 = vunpack.c.h.b16 %v271
  %v1613 = vunpack.c.l.b16 %v272
  %v1614 = vunpack.c.h.b16 %v272
  %v1615 = vunpack.c.l.b16 %v273
  %v1616 = vunpack.c.h.b16 %v273
  %v1617 = vunpack.c.l.b16 %v274
  %v1618 = vunpack.c.h.b16 %v274
  %v1619 = vunpack.c.l.b16 %v275
  %v1620 = vunpack.c.h.b16 %v275
  %v1621 = vunpack.c.l.b16 %v276
  %v1622 = vunpack.c.h.b16 %v276
  %v1623 = vunpack.c.l.b16 %v277
  %v1624 = vunpack.c.h.b16 %v277
  %v1625 = vunpack.c.l.b16 %v278
  %v1626 = vunpack.c.h.b16 %v278
  %v1627 = vunpack.c.l.b16 %v279
  %v1628 = vunpack.c.h.b16 %v279
  %v1629 = vunpack.c.l.b16 %v280
  %v1630 = vunpack.c.h.b16 %v280
  %v1631 = vunpack.c.l.b16 %v281
  %v1632 = vunpack.c.h.b16 %v281
  %v1633 = vunpack.c.l.b16 %v282
  %v1634 = vunpack.c.h.b16 %v282
  %v1635 = vunpack.c.l.b16 %v283
  %v1636 = vunpack.c.h.b16 %v283
  %v1637 = vunpack.c.l.b16 %v284
  %v1638 = vunpack.c.h.b16 %v284
  %v1639 = vunpack.c.l.b16 %v285
  %v1640 = vunpack.c.h.b16 %v285
  %v1641 = vunpack.c.l.b16 %v286
  %v1642 = vunpack.c.h.b16 %v286
  %v1643 = vunpack.c.l.b16 %v287
  %v1644 = vunpack.c.h.b16 %v287
  %v1645 = vunpack.c.l.b16 %v288
  %v1646 = vunpack.c.h.b16 %v288
  %v1647 = vunpack.c.l.b16 %v289
  %v1648 = vunpack.c.h.b16 %v289
  %v1649 = vunpack.c.l.b16 %v290
  %v1650 = vunpack.c.h.b16 %v290
  %v1651 = vunpack.c.l.b16 %v291
  %v1652 = vunpack.c.h.b16 %v291
  %v1653 = vunpack.c.l.b16 %v292
  %v1654 = vunpack.c.h.b16 %v292
  %v1655 = vunpack.c.l.b16 %v293
  %v1656 = vunpack.c.h.b16 %v293
  %v1657 = vunpack.c.l.b16 %v294
  %v1658 = vunpack.c.h.b16 %v294
  %v1659 = vunpack.c.l.b16 %v295
  %v1660 = vunpack.c.h.b16 %v295
  %v1661 = vunpack.c.l.b16 %v296
  %v1662 = vunpack.c.h.b16 %v296
  %v1663 = vunpack.c.l.b16 %v297
  %v1664 = vunpack.c.h.b16 %v297
  %v1665 = vunpack.c.l.b16 %v298
  %v1666 = vunpack.c.h.b16 %v298
  %v1667 = vunpack.c.l.b16 %v299
  %v1668 = vunpack.c.h.b16 %v299
  %v1669 = vunpack.c.l.b16 %v300
  %v1670 = vunpack.c.h.b16 %v300
  %v1671 = vunpack.c.l.b16 %v301
  %v1672 = vunpack.c.h.b16 %v301
  %v1673 = vunpack.c.l.b16 %v302
  %v1674 = vunpack.c.h.b16 %v302
  %v1675 = vunpack.c.l.b16 %v303
  %v1676 = vunpack.c.h.b16 %v303
  %v1677 = vunpack.c.l.b16 %v304
  %v1678 = vunpack.c.h.b16 %v304
  %v1679 = vunpack.c.l.b16 %v305
  %v1680 = vunpack.c.h.b16 %v305
  %v1681 = vunpack.c.l.b16 %v306
  %v1682 = vunpack.c.h.b16 %v306
  %v1683 = vunpack.c.l.b16 %v307
  %v1684 = vunpack.c.h.b16 %v307
  %v1685 = vunpack.c.l.b16 %v308
  %v1686 = vunpack.c.h.b16 %v308
  %v1687 = vunpack.c.l.b16 %v309
  %v1688 = vunpack.c.h.b16 %v309
  %v1689 = vunpack.c.l.b16 %v310
  %v1690 = vunpack.c.h.b16 %v310
  %v1691 = vunpack.c.l.b16 %v311
  %v1692 = vunpack.c.h.b16 %v311
  %v1693 = vunpack.c.l.b16 %v312
  %v1694 = vunpack.c.h.b16 %v312
  %v1695 = vunpack.c.l.b16 %v313
  %v1696 = vunpack.c.h.b16 %v313
  %v1697 = vunpack.c.l.b16 %v314
  %v1698 = vunpack.c.h.b16 %v314
  %v1699 = vunpack.c.l.b16 %v315
  %v1700 = vunpack.c.h.b16 %v315
  %v1701 = vunpack.c.l.b16 %v316
  %v1702 = vunpack.c.h.b16 %v316
  %v1703 = vunpack.c.l.b16 %v317
  %v1704 = vunpack.c.h.b16 %v317
  %v1705 = vunpack.c.l.b16 %v318
  %v1706 = vunpack.c.h.b16 %v318
  %v1707 = vunpack.c.l.b16 %v319
  %v1708 = vunpack.c.h.b16 %v319
  %v1709 = vunpack.c.l.b16 %v320
  %v1710 = vunpack.c.h.b16 %v320
  %v1711 = vunpack.c.l.b16 %v321
  %v1712 = vunpack.c.h.b16 %v321
  %v1713 = vunpack.c.l.b16 %v322
  %v1714 = vunpack.c.h.b16 %v322
  %v1715 = vunpack.c.l.b16 %v323
  %v1716 = vunpack.c.h.b16 %v323
  %v1717 = vunpack.c.l.b16 %v324
  %v1718 = vunpack.c.h.b16 %v324
  %v1719 = vunpack.c.l.b16 %v325
  %v1720 = vunpack.c.h.b16 %v325
  %v1721 = vunpack.c.l.b16 %v326
  %v1722 = vunpack.c.h.b16 %v326
  %v1723 = vunpack.c.l.b16 %v327
  %v1724 = vunpack.c.h.b16 %v327
  %v1725 = vunpack.c.l.b16 %v328
  %v1726 = vunpack.c.h.b16 %v328
  %v1727 = vunpack.c.l.b16 %v329
  %v1728 = vunpack.c.h.b16 %v329
  %v1729 = vunpack.c.l.b16 %v330
  %v1730 = vunpack.c.h.b16 %v330
  %v1731 = vunpack.c.l.b16 %v331
  %v1732 = vunpack.c.h.b16 %v331
  %v1733 = vunpack.c.l.b16 %v332
  %v1734 = vunpack.c.h.b16 %v332
  %v1735 = vunpack.c.l.b16 %v333
  %v1736 = vunpack.c.h.b16 %v333
  %v1737 = vunpack.c.l.b16 %v334
  %v1738 = vunpack.c.h.b16 %v334
  %v1739 = vunpack.c.l.b16 %v335
  %v1740 = vunpack.c.h.b16 %v335
  %v1741 = vunpack.c.l.b16 %v336
  %v1742 = vunpack.c.h.b16 %v336
  %v1743 = vunpack.c.l.b16 %v337
  %v1744 = vunpack.c.h.b16 %v337
  %v1745 = vunpack.c.l.b16 %v338
  %v1746 = vunpack.c.h.b16 %v338
  %v1747 = vunpack.c.l.b16 %v339
  %v1748 = vunpack.c.h.b16 %v339
  %v1749 = vunpack.c.l.b16 %v340
  %v1750 = vunpack.c.h.b16 %v340
  %v1751 = vunpack.c.l.b16 %v341
  %v1752 = vunpack.c.h.b16 %v341
  %v1753 = vunpack.c.l.b16 %v342
  %v1754 = vunpack.c.h.b16 %v342
  %v1755 = vunpack.c.l.b16 %v343
  %v1756 = vunpack.c.h.b16 %v343
  %v1757 = vunpack.c.l.b16 %v344
  %v1758 = vunpack.c.h.b16 %v344
  %v1759 = vunpack.c.l.b16 %v345
  %v1760 = vunpack.c.h.b16 %v345
  %v1761 = vunpack.c.l.b16 %v346
  %v1762 = vunpack.c.h.b16 %v346
  %v1763 = vunpack.c.l.b16 %v347
  %v1764 = vunpack.c.h.b16 %v347
  %v1765 = vunpack.c.l.b16 %v348
  %v1766 = vunpack.c.h.b16 %v348
  %v1767 = vunpack.c.l.b16 %v349
  %v1768 = vunpack.c.h.b16 %v349
  %v1769 = vunpack.c.l.b16 %v350
  %v1770 = vunpack.c.h.b16 %v350
  %v1771 = vunpack.c.l.b16 %v351
  %v1772 = vunpack.c.h.b16 %v351
  %v1773 = vunpack.c.l.b16 %v352
  %v1774 = vunpack.c.h.b16 %v352
  %v1775 = vunpack.c.l.b16 %v353
  %v1776 = vunpack.c.h.b16 %v353
  %v1777 = vunpack.c.l.b16 %v354
  %v1778 = vunpack.c.h.b16 %v354
  %v1779 = vunpack.c.l.b16 %v355
  %v1780 = vunpack.c.h.b16 %v355
  %v1781 = vunpack.c.l.b16 %v356
  %v1782 = vunpack.c.h.b16 %v356
  %v1783 = vunpack.c.l.b16 %v357
  %v1784 = vunpack.c.h.b16 %v357
  %v1785 = vunpack.c.l.b16 %v358
  %v1786 = vunpack.c.h.b16 %v358
  %v1787 = vunpack.c.l.b16 %v359
  %v1788 = vunpack.c.h.b16 %v359
  %v1789 = vunpack.c.l.b16 %v360
  %v1790 = vunpack.c.h.b16 %v360
  %v1791 = vunpack.c.l.b16 %v361
  %v1792 = vunpack.c.h.b16 %v361
  %v1793 = vunpack.c.l.b16 %v362
  %v1794 = vunpack.c.h.b16 %v362
  %v1795 = vunpack.c.l.b16 %v363
  %v1796 = vunpack.c.h.b16 %v363
  %v1797 = vunpack.c.l.b16 %v364
  %v1798 = vunpack.c.h.b16 %v364
  %v1799 = vunpack.c.l.b16 %v365
  %v1800 = vunpack.c.h.b16 %v365
  %v1801 = vunpack.c.l.b16 %v366
  %v1802 = vunpack.c.h.b16 %v366
  %v1803 = vunpack.c.l.b16 %v367
  %v1804 = vunpack.c.h.b16 %v367
  %v1805 = vunpack.c.l.b16 %v368
  %v1806 = vunpack.c.h.b16 %v368
  %v1807 = vunpack.c.l.b16 %v369
  %v1808 = vunpack.c.h.b16 %v369
  %v1809 = vunpack.c.l.b16 %v370
  %v1810 = vunpack.c.h.b16 %v370
  %v1811 = vunpack.c.l.b16 %v371
  %v1812 = vunpack.c.h.b16 %v371
  %v1813 = vunpack.c.l.b16 %v372
  %v1814 = vunpack.c.h.b16 %v372
  %v1815 = vunpack.c.l.b16 %v373
  %v1816 = vunpack.c.h.b16 %v373
  %v1817 = vunpack.c.l.b16 %v374
  %v1818 = vunpack.c.h.b16 %v374
  %v1819 = vunpack.c.l.b16 %v375
  %v1820 = vunpack.c.h.b16 %v375
  %v1821 = vunpack.c.l.b16 %v376
  %v1822 = vunpack.c.h.b16 %v376
  %v1823 = vunpack.c.l.b16 %v377
  %v1824 = vunpack.c.h.b16 %v377
  %v1825 = vunpack.c.l.b16 %v378
  %v1826 = vunpack.c.h.b16 %v378
  %v1827 = vunpack.c.l.b16 %v379
  %v1828 = vunpack.c.h.b16 %v379
  %v1829 = vunpack.c.l.b16 %v380
  %v1830 = vunpack.c.h.b16 %v380
  %v1831 = vunpack.c.l.b16 %v381
  %v1832 = vunpack.c.h.b16 %v381
  %v1833 = vunpack.c.l.b16 %v382
  %v1834 = vunpack.c.h.b16 %v382
  %v1835 = vunpack.c.l.b16 %v383
  %v1836 = vunpack.c.h.b16 %v383
  %v1837 = vunpack.c.l.b16 %v384
  %v1838 = vunpack.c.h.b16 %v384
  %v1839 = vunpack.c.l.b16 %v385
  %v1840 = vunpack.c.h.b16 %v385
  %v1841 = vunpack.c.l.b16 %v386
  %v1842 = vunpack.c.h.b16 %v386
  %v1843 = vunpack.c.l.b16 %v387
  %v1844 = vunpack.c.h.b16 %v387
  %v1845 = vunpack.c.l.b16 %v388
  %v1846 = vunpack.c.h.b16 %v388
  %v1847 = vunpack.c.l.b16 %v389
  %v1848 = vunpack.c.h.b16 %v389
  %v1849 = vunpack.c.l.b16 %v390
  %v1850 = vunpack.c.h.b16 %v390
  %v1851 = vunpack.c.l.b16 %v391
  %v1852 = vunpack.c.h.b16 %v391
  %v1853 = vunpack.c.l.b16 %v392
  %v1854 = vunpack.c.h.b16 %v392
  %v1855 = vunpack.c.l.b16 %v393
  %v1856 = vunpack.c.h.b16 %v393
  %v1857 = vunpack.c.l.b16 %v394
  %v1858 = vunpack.c.h.b16 %v394
  %v1859 = vunpack.c.l.b16 %v395
  %v1860 = vunpack.c.h.b16 %v395
  %v1861 = vunpack.c.l.b16 %v396
  %v1862 = vunpack.c.h.b16 %v396
  %v1863 = vunpack.c.l.b16 %v397
  %v1864 = vunpack.c.h.b16 %v397
  %v1865 = vunpack.c.l.b16 %v398
  %v1866 = vunpack.c.h.b16 %v398
  %v1867 = vunpack.c.l.b16 %v399
  %v1868 = vunpack.c.h.b16 %v399
  %v1869 = vunpack.c.l.b16 %v400
  %v1870 = vunpack.c.h.b16 %v400
  %v1871 = vunpack.c.l.b16 %v401
  %v1872 = vunpack.c.h.b16 %v401
  %v1873 = vunpack.c.l.b16 %v402
  %v1874 = vunpack.c.h.b16 %v402
  %v1875 = vunpack.c.l.b16 %v403
  %v1876 = vunpack.c.h.b16 %v403
  %v1877 = vunpack.c.l.b16 %v404
  %v1878 = vunpack.c.h.b16 %v404
  %v1879 = vunpack.c.l.b16 %v405
  %v1880 = vunpack.c.h.b16 %v405
  %v1881 = vunpack.c.l.b16 %v406
  %v1882 = vunpack.c.h.b16 %v406
  %v1883 = vunpack.c.l.b16 %v407
  %v1884 = vunpack.c.h.b16 %v407
  %v1885 = vunpack.c.l.b16 %v408
  %v1886 = vunpack.c.h.b16 %v408
  %v1887 = vunpack.c.l.b16 %v409
  %v1888 = vunpack.c.h.b16 %v409
  %v1889 = vunpack.c.l.b16 %v410
  %v1890 = vunpack.c.h.b16 %v410
  %v1891 = vunpack.c.l.b16 %v411
  %v1892 = vunpack.c.h.b16 %v411
  %v1893 = vunpack.c.l.b16 %v412
  %v1894 = vunpack.c.h.b16 %v412
  %v1895 = vunpack.c.l.b16 %v413
  %v1896 = vunpack.c.h.b16 %v413
  %v1897 = vunpack.c.l.b16 %v414
  %v1898 = vunpack.c.h.b16 %v414
  %v1899 = vunpack.c.l.b16 %v415
  %v1900 = vunpack.c.h.b16 %v415
  %v1901 = vunpack.c.l.b16 %v416
  %v1902 = vunpack.c.h.b16 %v416
  %v1903 = vunpack.c.l.b16 %v417
  %v1904 = vunpack.c.h.b16 %v417
  %v1905 = vunpack.c.l.b16 %v418
  %v1906 = vunpack.c.h.b16 %v418
  %v1907 = vunpack.c.l.b16 %v419
  %v1908 = vunpack.c.h.b16 %v419
  %v1909 = vunpack.c.l.b16 %v420
  %v1910 = vunpack.c.h.b16 %v420
  %v1911 = vunpack.c.l.b16 %v421
  %v1912 = vunpack.c.h.b16 %v421
  %v1913 = vunpack.c.l.b16 %v422
  %v1914 = vunpack.c.h.b16 %v422
  %v1915 = vunpack.c.l.b16 %v423
  %v1916 = vunpack.c.h.b16 %v423
  %v1917 = vunpack.c.l.b16 %v424
  %v1918 = vunpack.c.h.b16 %v424
  %v1919 = vunpack.c.l.b16 %v425
  %v1920 = vunpack.c.h.b16 %v425
  %v1921 = vunpack.c.l.b16 %v426
  %v1922 = vunpack.c.h.b16 %v426
  %v1923 = vunpack.c.l.b16 %v427
  %v1924 = vunpack.c.h.b16 %v427
  %v1925 = vunpack.c.l.b16 %v428
  %v1926 = vunpack.c.h.b16 %v428
  %v1927 = vunpack.c.l.b16 %v429
  %v1928 = vunpack.c.h.b16 %v429
  %v1929 = vunpack.c.l.b16 %v430
  %v1930 = vunpack.c.h.b16 %v430
  %v1931 = vunpack.c.l.b16 %v431
  %v1932 = vunpack.c.h.b16 %v431
  %v1933 = vunpack.c.l.b16 %v432
  %v1934 = vunpack.c.h.b16 %v432
  %v1935 = vunpack.c.l.b16 %v433
  %v1936 = vunpack.c.h.b16 %v433
  %v1937 = vunpack.c.l.b16 %v434
  %v1938 = vunpack.c.h.b16 %v434
  %v1939 = vunpack.c.l.b16 %v435
  %v1940 = vunpack.c.h.b16 %v435
  %v1941 = vunpack.c.l.b16 %v436
  %v1942 = vunpack.c.h.b16 %v436
  %v1943 = vunpack.c.l.b16 %v437
  %v1944 = vunpack.c.h.b16 %v437
  %v1945 = vunpack.c.l.b16 %v438
  %v1946 = vunpack.c.h.b16 %v438
  %v1947 = vunpack.c.l.b16 %v439
  %v1948 = vunpack.c.h.b16 %v439
  %v1949 = vunpack.c.l.b16 %v440
  %v1950 = vunpack.c.h.b16 %v440
  %v1951 = vunpack.c.l.b16 %v441
  %v1952 = vunpack.c.h.b16 %v441
  %v1953 = vunpack.c.l.b16 %v442
  %v1954 = vunpack.c.h.b16 %v442
  %v1955 = vunpack.c.l.b16 %v443
  %v1956 = vunpack.c.h.b16 %v443
  %v1957 = vunpack.c.l.b16 %v444
  %v1958 = vunpack.c.h.b16 %v444
  %v1959 = vunpack.c.l.b16 %v445
  %v1960 = vunpack.c.h.b16 %v445
  %v1961 = vunpack.c.l.b16 %v446
  %v1962 = vunpack.c.h.b16 %v446
  %v1963 = vunpack.c.l.b16 %v447
  %v1964 = vunpack.c.h.b16 %v447
  %v1965 = vunpack.c.l.b16 %v448
  %v1966 = vunpack.c.h.b16 %v448
  %v1967 = vunpack.c.l.b16 %v449
  %v1968 = vunpack.c.h.b16 %v449
  %v1969 = vunpack.c.l.b16 %v450
  %v1970 = vunpack.c.h.b16 %v450
  %v1971 = vunpack.c.l.b16 %v451
  %v1972 = vunpack.c.h.b16 %v451
  %v1973 = vunpack.c.l.b16 %v452
  %v1974 = vunpack.c.h.b16 %v452
  %v1975 = vunpack.c.l.b16 %v453
  %v1976 = vunpack.c.h.b16 %v453
  %v1977 = vunpack.c.l.b16 %v454
  %v1978 = vunpack.c.h.b16 %v454
  %v1979 = vunpack.c.l.b16 %v455
  %v1980 = vunpack.c.h.b16 %v455
  %v1981 = vunpack.c.l.b16 %v456
  %v1982 = vunpack.c.h.b16 %v456
  %v1983 = vunpack.c.l.b16 %v457
  %v1984 = vunpack.c.h.b16 %v457
  %v1985 = vunpack.c.l.b16 %v458
  %v1986 = vunpack.c.h.b16 %v458
  %v1987 = vunpack.c.l.b16 %v459
  %v1988 = vunpack.c.h.b16 %v459
  %v1989 = vunpack.c.l.b16 %v460
  %v1990 = vunpack.c.h.b16 %v460
  %v1991 = vunpack.c.l.b16 %v461
  %v1992 = vunpack.c.h.b16 %v461
  %v1993 = vunpack.c.l.b16 %v462
  %v1994 = vunpack.c.h.b16 %v462
  %v1995 = vunpack.c.l.b16 %v463
  %v1996 = vunpack.c.h.b16 %v463
  %v1997 = vunpack.c.l.b16 %v464
  %v1998 = vunpack.c.h.b16 %v464
  %v1999 = vunpack.c.l.b16 %v465
  %v2000 = vunpack.c.h.b16 %v465
  %v2001 = vunpack.c.l.b16 %v466
  %v2002 = vunpack.c.h.b16 %v466
  %v2003 = vunpack.c.l.b16 %v467
  %v2004 = vunpack.c.h.b16 %v467
  %v2005 = vunpack.c.l.b16 %v468
  %v2006 = vunpack.c.h.b16 %v468
  %v2007 = vunpack.c.l.b16 %v469
  %v2008 = vunpack.c.h.b16 %v469
  %v2009 = vunpack.c.l.b16 %v470
  %v2010 = vunpack.c.h.b16 %v470
  %v2011 = vunpack.c.l.b16 %v471
  %v2012 = vunpack.c.h.b16 %v471
  %v2013 = vunpack.c.l.b16 %v472
  %v2014 = vunpack.c.h.b16 %v472
  %v2015 = vunpack.c.l.b16 %v473
  %v2016 = vunpack.c.h.b16 %v473
  %v2017 = vunpack.c.l.b16 %v474
  %v2018 = vunpack.c.h.b16 %v474
  %v2019 = vunpack.c.l.b16 %v475
  %v2020 = vunpack.c.h.b16 %v475
  %v2021 = vunpack.c.l.b16 %v476
  %v2022 = vunpack.c.h.b16 %v476
  %v2023 = vunpack.c.l.b16 %v477
  %v2024 = vunpack.c.h.b16 %v477
  %v2025 = vunpack.c.l.b16 %v478
  %v2026 = vunpack.c.h.b16 %v478
  %v2027 = vunpack.c.l.b16 %v479
  %v2028 = vunpack.c.h.b16 %v479
  %v2029 = vunpack.c.l.b16 %v480
  %v2030 = vunpack.c.h.b16 %v480
  %v2031 = vunpack.c.l.b16 %v481
  %v2032 = vunpack.c.h.b16 %v481
  %v2033 = vunpack.c.l.b16 %v482
  %v2034 = vunpack.c.h.b16 %v482
  %v2035 = vunpack.c.l.b16 %v483
  %v2036 = vunpack.c.h.b16 %v483
  %v2037 = vunpack.c.l.b16 %v484
  %v2038 = vunpack.c.h.b16 %v484
  %v2039 = vunpack.c.l.b16 %v485
  %v2040 = vunpack.c.h.b16 %v485
  %v2041 = vunpack.c.l.b16 %v486
  %v2042 = vunpack.c.h.b16 %v486
  %v2043 = vunpack.c.l.b16 %v487
  %v2044 = vunpack.c.h.b16 %v487
  %v2045 = vunpack.c.l.b16 %v488
  %v2046 = vunpack.c.h.b16 %v488
  %v2047 = vunpack.c.l.b16 %v489
  %v2048 = vunpack.c.h.b16 %v489
  %v2049 = vunpack.c.l.b16 %v490
  %v2050 = vunpack.c.h.b16 %v490
  %v2051 = vunpack.c.l.b16 %v491
  %v2052 = vunpack.c.h.b16 %v491
  %v2053 = vunpack.c.l.b16 %v492
  %v2054 = vunpack.c.h.b16 %v492
  %v2055 = vunpack.c.l.b16 %v493
  %v2056 = vunpack.c.h.b16 %v493
  %v2057 = vunpack.c.l.b16 %v494
  %v2058 = vunpack.c.h.b16 %v494
  %v2059 = vunpack.c.l.b16 %v495
  %v2060 = vunpack.c.h.b16 %v495
  %v2061 = vunpack.c.l.b16 %v496
  %v2062 = vunpack.c.h.b16 %v496
  %v2063 = vunpack.c.l.b16 %v497
  %v2064 = vunpack.c.h.b16 %v497
  %v2065 = vunpack.c.l.b16 %v498
  %v2066 = vunpack.c.h.b16 %v498
  %v2067 = vunpack.c.l.b16 %v499
  %v2068 = vunpack.c.h.b16 %v499
  %v2069 = vunpack.c.l.b16 %v500
  %v2070 = vunpack.c.h.b16 %v500
  %v2071 = vunpack.c.l.b16 %v501
  %v2072 = vunpack.c.h.b16 %v501
  %v2073 = vunpack.c.l.b16 %v502
  %v2074 = vunpack.c.h.b16 %v502
  %v2075 = vunpack.c.l.b16 %v503
  %v2076 = vunpack.c.h.b16 %v503
  %v2077 = vunpack.c.l.b16 %v504
  %v2078 = vunpack.c.h.b16 %v504
  %v2079 = vunpack.c.l.b16 %v505
  %v2080 = vunpack.c.h.b16 %v505
  %v2081 = vunpack.c.l.b16 %v506
  %v2082 = vunpack.c.h.b16 %v506
  %v2083 = vunpack.c.l.b16 %v507
  %v2084 = vunpack.c.h.b16 %v507
  %v2085 = vunpack.c.l.b16 %v508
  %v2086 = vunpack.c.h.b16 %v508
  %v2087 = vunpack.c.l.b16 %v509
  %v2088 = vunpack.c.h.b16 %v509
  %v2089 = vunpack.c.l.b16 %v510
  %v2090 = vunpack.c.h.b16 %v510
  %v2091 = vunpack.c.l.b16 %v511
  %v2092 = vunpack.c.h.b16 %v511
  %v2093 = vunpack.c.l.b16 %v512
  %v2094 = vunpack.c.h.b16 %v512
  %v2095 = vunpack.c.l.b16 %v513
  %v2096 = vunpack.c.h.b16 %v513
  %v2097 = vunpack.c.l.b16 %v514
  %v2098 = vunpack.c.h.b16 %v514
  %v2099 = vunpack.c.l.b16 %v515
  %v2100 = vunpack.c.h.b16 %v515
  %v2101 = vunpack.c.l.b16 %v516
  %v2102 = vunpack.c.h.b16 %v516
  %v2103 = vunpack.c.l.b16 %v517
  %v2104 = vunpack.c.h.b16 %v517
  %v2105 = vunpack.c.l.b16 %v518
  %v2106 = vunpack.c.h.b16 %v518
  %v2107 = vunpack.c.l.b16 %v519
  %v2108 = vunpack.c.h.b16 %v519
  %v2109 = vunpack.c.l.b16 %v520
  %v2110 = vunpack.c.h.b16 %v520
  %v2111 = vunpack.c.l.b16 %v521
  %v2112 = vunpack.c.h.b16 %v521
  %v2113 = vunpack.c.l.b16 %v522
  %v2114 = vunpack.c.h.b16 %v522
  %v2115 = vunpack.c.l.b16 %v523
  %v2116 = vunpack.c.h.b16 %v523
  %v2117 = vunpack.c.l.b16 %v524
  %v2118 = vunpack.c.h.b16 %v524
  %v2119 = vunpack.c.l.b16 %v525
  %v2120 = vunpack.c.h.b16 %v525
  %v2121 = vunpack.c.l.b16 %v526
  %v2122 = vunpack.c.h.b16 %v526
  %v2123 = vunpack.c.l.b16 %v527
  %v2124 = vunpack.c.h.b16 %v527
  %v2125 = vunpack.c.l.b16 %v528
  %v2126 = vunpack.c.h.b16 %v528
  %v2127 = vunpack.c.l.b16 %v529
  %v2128 = vunpack.c.h.b16 %v529
  %v2129 = vunpack.c.l.b16 %v530
  %v2130 = vunpack.c.h.b16 %v530
  %v2131 = vunpack.c.l.b16 %v531
  %v2132 = vunpack.c.h.b16 %v531
  %v2133 = vunpack.c.l.b16 %v532
  %v2134 = vunpack.c.h.b16 %v532
  %v2135 = vunpack.c.l.b16 %v533
  %v2136 = vunpack.c.h.b16 %v533
  %v2137 = vunpack.c.l.b16 %v534
  %v2138 = vunpack.c.h.b16 %v534
  %v2139 = vunpack.c.l.b16 %v535
  %v2140 = vunpack.c.h.b16 %v535
  %v2141 = vunpack.c.l.b16 %v536
  %v2142 = vunpack.c.h.b16 %v536
  %v2143 = vpack.c.b16 %v1127, %v1119
  %v2144 = vpack.c.b16 %v1128, %v1120
  %v2145 = vpack.c.b16 %v1129, %v1121
  %v2146 = vpack.c.b16 %v1130, %v1122
  %v2147 = vpack.c.b16 %v1131, %v1123
  %v2148 = vpack.c.b16 %v1132, %v1124
  %v2149 = vpack.c.b16 %v1133, %v1125
  %v2150 = vpack.c.b16 %v1134, %v1126
  %v2151 = vpack.c.b16 %v1143, %v1135
  %v2152 = vpack.c.b16 %v1144, %v1136
  %v2153 = vpack.c.b16 %v1145, %v1137
  %v2154 = vpack.c.b16 %v1146, %v1138
  %v2155 = vpack.c.b16 %v1147, %v1139
  %v2156 = vpack.c.b16 %v1148, %v1140
  %v2157 = vpack.c.b16 %v1149, %v1141
  %v2158 = vpack.c.b16 %v1150, %v1142
  %v2159 = vpack.c.b16 %v1159, %v1151
  %v2160 = vpack.c.b16 %v1160, %v1152
  %v2161 = vpack.c.b16 %v1161, %v1153
  %v2162 = vpack.c.b16 %v1162, %v1154
  %v2163 = vpack.c.b16 %v1163, %v1155
  %v2164 = vpack.c.b16 %v1164, %v1156
  %v2165 = vpack.c.b16 %v1165, %v1157
  %v2166 = vpack.c.b16 %v1166, %v1158
  %v2167 = vpack.c.b16 %v1175, %v1167
  %v2168 = vpack.c.b16 %v1176, %v1168
  %v2169 = vpack.c.b16 %v1177, %v1169
  %v2170 = vpack.c.b16 %v1178, %v1170
  %v2171 = vpack.c.b16 %v1179, %v1171
  %v2172 = vpack.c.b16 %v1180, %v1172
  %v2173 = vpack.c.b16 %v1181, %v1173
  %v2174 = vpack.c.b16 %v1182, %v1174
  %v2175 = vpack.c.b16 %v1191, %v1183
  %v2176 = vpack.c.b16 %v1192, %v1184
  %v2177 = vpack.c.b16 %v1193, %v1185
  %v2178 = vpack.c.b16 %v1194, %v1186
  %v2179 = vpack.c.b16 %v1195, %v1187
  %v2180 = vpack.c.b16 %v1196, %v1188
  %v2181 = vpack.c.b16 %v1197, %v1189
  %v2182 = vpack.c.b16 %v1198, %v1190
  %v2183 = vpack.c.b16 %v1207, %v1199
  %v2184 = vpack.c.b16 %v1208, %v1200
  %v2185 = vpack.c.b16 %v1209, %v1201
  %v2186 = vpack.c.b16 %v1210, %v1202
  %v2187 = vpack.c.b16 %v1211, %v1203
  %v2188 = vpack.c.b16 %v1212, %v1204
  %v2189 = vpack.c.b16 %v1213, %v1205
  %v2190 = vpack.c.b16 %v1214, %v1206
  %v2191 = vpack.c.b16 %v1223, %v1215
  %v2192 = vpack.c.b16 %v1224, %v1216
  %v2193 = vpack.c.b16 %v1225, %v1217
  %v2194 = vpack.c.b16 %v1226, %v1218
  %v2195 = vpack.c.b16 %v1227, %v1219
  %v2196 = vpack.c.b16 %v1228, %v1220
  %v2197 = vpack.c.b16 %v1229, %v1221
  %v2198 = vpack.c.b16 %v1230, %v1222
  %v2199 = vpack.c.b16 %v1239, %v1231
  %v2200 = vpack.c.b16 %v1240, %v1232
  %v2201 = vpack.c.b16 %v1241, %v1233
  %v2202 = vpack.c.b16 %v1242, %v1234
  %v2203 = vpack.c.b16 %v1243, %v1235
  %v2204 = vpack.c.b16 %v1244, %v1236
  %v2205 = vpack.c.b16 %v1245, %v1237
  %v2206 = vpack.c.b16 %v1246, %v1238
  %v2207 = vpack.c.b16 %v1255, %v1247
  %v2208 = vpack.c.b16 %v1256, %v1248
  %v2209 = vpack.c.b16 %v1257, %v1249
  %v2210 = vpack.c.b16 %v1258, %v1250
  %v2211 = vpack.c.b16 %v1259, %v1251
  %v2212 = vpack.c.b16 %v1260, %v1252
  %v2213 = vpack.c.b16 %v1261, %v1253
  %v2214 = vpack.c.b16 %v1262, %v1254
  %v2215 = vpack.c.b16 %v1271, %v1263
  %v2216 = vpack.c.b16 %v1272, %v1264
  %v2217 = vpack.c.b16 %v1273, %v1265
  %v2218 = vpack.c.b16 %v1274, %v1266
  %v2219 = vpack.c.b16 %v1275, %v1267
  %v2220 = vpack.c.b16 %v1276, %v1268
  %v2221 = vpack.c.b16 %v1277, %v1269
  %v2222 = vpack.c.b16 %v1278, %v1270
  %v2223 = vpack.c.b16 %v1287, %v1279
  %v2224 = vpack.c.b16 %v1288, %v1280
  %v2225 = vpack.c.b16 %v1289, %v1281
  %v2226 = vpack.c.b16 %v1290, %v1282
  %v2227 = vpack.c.b16 %v1291, %v1283
  %v2228 = vpack.c.b16 %v1292, %v1284
  %v2229 = vpack.c.b16 %v1293, %v1285
  %v2230 = vpack.c.b16 %v1294, %v1286
  %v2231 = vpack.c.b16 %v1303, %v1295
  %v2232 = vpack.c.b16 %v1304, %v1296
  %v2233 = vpack.c.b16 %v1305, %v1297
  %v2234 = vpack.c.b16 %v1306, %v1298
  %v2235 = vpack.c.b16 %v1307, %v1299
  %v2236 = vpack.c.b16 %v1308, %v1300
  %v2237 = vpack.c.b16 %v1309, %v1301
  %v2238 = vpack.c.b16 %v1310, %v1302
  %v2239 = vpack.c.b16 %v1319, %v1311
  %v2240 = vpack.c.b16 %v1320, %v1312
  %v2241 = vpack.c.b16 %v1321, %v1313
  %v2242 = vpack.c.b16 %v1322, %v1314
  %v2243 = vpack.c.b16 %v1323, %v1315
  %v2244 = vpack.c.b16 %v1324, %v1316
  %v2245 = vpack.c.b16 %v1325, %v1317
  %v2246 = vpack.c.b16 %v1326, %v1318
  %v2247 = vpack.c.b16 %v1335, %v1327
  %v2248 = vpack.c.b16 %v1336, %v1328
  %v2249 = vpack.c.b16 %v1337, %v1329
  %v2250 = vpack.c.b16 %v1338, %v1330
  %v2251 = vpack.c.b16 %v1339, %v1331
  %v2252 = vpack.c.b16 %v1340, %v1332
  %v2253 = vpack.c.b16 %v1341, %v1333
  %v2254 = vpack.c.b16 %v1342, %v1334
  %v2255 = vpack.c.b16 %v1351, %v1343
  %v2256 = vpack.c.b16 %v1352, %v1344
  %v2257 = vpack.c.b16 %v1353, %v1345
  %v2258 = vpack.c.b16 %v1354, %v1346
  %v2259 = vpack.c.b16 %v1355, %v1347
  %v2260 = vpack.c.b16 %v1356, %v1348
  %v2261 = vpack.c.b16 %v1357, %v1349
  %v2262 = vpack.c.b16 %v1358, %v1350
  %v2263 = vpack.c.b16 %v1367, %v1359
  %v2264 = vpack.c.b16 %v1368, %v1360
  %v2265 = vpack.c.b16 %v1369, %v1361
  %v2266 = vpack.c.b16 %v1370, %v1362
  %v2267 = vpack.c.b16 %v1371, %v1363
  %v2268 = vpack.c.b16 %v1372, %v1364
  %v2269 = vpack.c.b16 %v1373, %v1365
  %v2270 = vpack.c.b16 %v1374, %v1366
  %v2271 = vpack.c.b16 %v1383, %v1375
  %v2272 = vpack.c.b16 %v1384, %v1376
  %v2273 = vpack.c.b16 %v1385, %v1377
  %v2274 = vpack.c.b16 %v1386, %v1378
  %v2275 = vpack.c.b16 %v1387, %v1379
  %v2276 = vpack.c.b16 %v1388, %v1380
  %v2277 = vpack.c.b16 %v1389, %v1381
  %v2278 = vpack.c.b16 %v1390, %v1382
  %v2279 = vpack.c.b16 %v1399, %v1391
  %v2280 = vpack.c.b16 %v1400, %v1392
  %v2281 = vpack.c.b16 %v1401, %v1393
  %v2282 = vpack.c.b16 %v1402, %v1394
  %v2283 = vpack.c.b16 %v1403, %v1395
  %v2284 = vpack.c.b16 %v1404, %v1396
  %v2285 = vpack.c.b16 %v1405, %v1397
  %v2286 = vpack.c.b16 %v1406, %v1398
  %v2287 = vpack.c.b16 %v1415, %v1407
  %v2288 = vpack.c.b16 %v1416, %v1408
  %v2289 = vpack.c.b16 %v1417, %v1409
  %v2290 = vpack.c.b16 %v1418, %v1410
  %v2291 = vpack.c.b16 %v1419, %v1411
  %v2292 = vpack.c.b16 %v1420, %v1412
  %v2293 = vpack.c.b16 %v1421, %v1413
  %v2294 = vpack.c.b16 %v1422, %v1414
  %v2295 = vpack.c.b16 %v1431, %v1423
  %v2296 = vpack.c.b16 %v1432, %v1424
  %v2297 = vpack.c.b16 %v1433, %v1425
  %v2298 = vpack.c.b16 %v1434, %v1426
  %v2299 = vpack.c.b16 %v1435, %v1427
  %v2300 = vpack.c.b16 %v1436, %v1428
  %v2301 = vpack.c.b16 %v1437, %v1429
  %v2302 = vpack.c.b16 %v1438, %v1430
  %v2303 = vpack.c.b16 %v1447, %v1439
  %v2304 = vpack.c.b16 %v1448, %v1440
  %v2305 = vpack.c.b16 %v1449, %v1441
  %v2306 = vpack.c.b16 %v1450, %v1442
  %v2307 = vpack.c.b16 %v1451, %v1443
  %v2308 = vpack.c.b16 %v1452, %v1444
  %v2309 = vpack.c.b16 %v1453, %v1445
  %v2310 = vpack.c.b16 %v1454, %v1446
  %v2311 = vpack.c.b16 %v1463, %v1455
  %v2312 = vpack.c.b16 %v1464, %v1456
  %v2313 = vpack.c.b16 %v1465, %v1457
  %v2314 = vpack.c.b16 %v1466, %v1458
  %v2315 = vpack.c.b16 %v1467, %v1459
  %v2316 = vpack.c.b16 %v1468, %v1460
  %v2317 = vpack.c.b16 %v1469, %v1461
  %v2318 = vpack.c.b16 %v1470, %v1462
  %v2319 = vpack.c.b16 %v1479, %v1471
  %v2320 = vpack.c.b16 %v1480, %v1472
  %v2321 = vpack.c.b16 %v1481, %v1473
  %v2322 = vpack.c.b16 %v1482, %v1474
  %v2323 = vpack.c.b16 %v1483, %v1475
  %v2324 = vpack.c.b16 %v1484, %v1476
  %v2325 = vpack.c.b16 %v1485, %v1477
  %v2326 = vpack.c.b16 %v1486, %v1478
  %v2327 = vpack.c.b16 %v1495, %v1487
  %v2328 = vpack.c.b16 %v1496, %v1488
  %v2329 = vpack.c.b16 %v1497, %v1489
  %v2330 = vpack.c.b16 %v1498, %v1490
  %v2331 = vpack.c.b16 %v1499, %v1491
  %v2332 = vpack.c.b16 %v1500, %v1492
  %v2333 = vpack.c.b16 %v1501, %v1493
  %v2334 = vpack.c.b16 %v1502, %v1494
  %v2335 = vpack.c.b16 %v1511, %v1503
  %v2336 = vpack.c.b16 %v1512, %v1504
  %v2337 = vpack.c.b16 %v1513, %v1505
  %v2338 = vpack.c.b16 %v1514, %v1506
  %v2339 = vpack.c.b16 %v1515, %v1507
  %v2340 = vpack.c.b16 %v1516, %v1508
  %v2341 = vpack.c.b16 %v1517, %v1509
  %v2342 = vpack.c.b16 %v1518, %v1510
  %v2343 = vpack.c.b16 %v1527, %v1519
  %v2344 = vpack.c.b16 %v1528, %v1520
  %v2345 = vpack.c.b16 %v1529, %v1521
  %v2346 = vpack.c.b16 %v1530, %v1522
  %v2347 = vpack.c.b16 %v1531, %v1523
  %v2348 = vpack.c.b16 %v1532, %v1524
  %v2349 = vpack.c.b16 %v1533, %v1525
  %v2350 = vpack.c.b16 %v1534, %v1526
  %v2351 = vpack.c.b16 %v1543, %v1535
  %v2352 = vpack.c.b16 %v1544, %v1536
  %v2353 = vpack.c.b16 %v1545, %v1537
  %v2354 = vpack.c.b16 %v1546, %v1538
  %v2355 = vpack.c.b16 %v1547, %v1539
  %v2356 = vpack.c.b16 %v1548, %v1540
  %v2357 = vpack.c.b16 %v1549, %v1541
  %v2358 = vpack.c.b16 %v1550, %v1542
  %v2359 = vpack.c.b16 %v1559, %v1551
  %v2360 = vpack.c.b16 %v1560, %v1552
  %v2361 = vpack.c.b16 %v1561, %v1553
  %v2362 = vpack.c.b16 %v1562, %v1554
  %v2363 = vpack.c.b16 %v1563, %v1555
  %v2364 = vpack.c.b16 %v1564, %v1556
  %v2365 = vpack.c.b16 %v1565, %v1557
  %v2366 = vpack.c.b16 %v1566, %v1558
  %v2367 = vpack.c.b16 %v1575, %v1567
  %v2368 = vpack.c.b16 %v1576, %v1568
  %v2369 = vpack.c.b16 %v1577, %v1569
  %v2370 = vpack.c.b16 %v1578, %v1570
  %v2371 = vpack.c.b16 %v1579, %v1571
  %v2372 = vpack.c.b16 %v1580, %v1572
  %v2373 = vpack.c.b16 %v1581, %v1573
  %v2374 = vpack.c.b16 %v1582, %v1574
  %v2375 = vpack.c.b16 %v1591, %v1583
  %v2376 = vpack.c.b16 %v1592, %v1584
  %v2377 = vpack.c.b16 %v1593, %v1585
  %v2378 = vpack.c.b16 %v1594, %v1586
  %v2379 = vpack.c.b16 %v1595, %v1587
  %v2380 = vpack.c.b16 %v1596, %v1588
  %v2381 = vpack.c.b16 %v1597, %v1589
  %v2382 = vpack.c.b16 %v1598, %v1590
  %v2383 = vpack.c.b16 %v1607, %v1599
  %v2384 = vpack.c.b16 %v1608, %v1600
  %v2385 = vpack.c.b16 %v1609, %v1601
  %v2386 = vpack.c.b16 %v1610, %v1602
  %v2387 = vpack.c.b16 %v1611, %v1603
  %v2388 = vpack.c.b16 %v1612, %v1604
  %v2389 = vpack.c.b16 %v1613, %v1605
  %v2390 = vpack.c.b16 %v1614, %v1606
  %v2391 = vpack.c.b16 %v1623, %v1615
  %v2392 = vpack.c.b16 %v1624, %v1616
  %v2393 = vpack.c.b16 %v1625, %v1617
  %v2394 = vpack.c.b16 %v1626, %v1618
  %v2395 = vpack.c.b16 %v1627, %v1619
  %v2396 = vpack.c.b16 %v1628, %v1620
  %v2397 = vpack.c.b16 %v1629, %v1621
  %v2398 = vpack.c.b16 %v1630, %v1622
  %v2399 = vpack.c.b16 %v1639, %v1631
  %v2400 = vpack.c.b16 %v1640, %v1632
  %v2401 = vpack.c.b16 %v1641, %v1633
  %v2402 = vpack.c.b16 %v1642, %v1634
  %v2403 = vpack.c.b16 %v1643, %v1635
  %v2404 = vpack.c.b16 %v1644, %v1636
  %v2405 = vpack.c.b16 %v1645, %v1637
  %v2406 = vpack.c.b16 %v1646, %v1638
  %v2407 = vpack.c.b16 %v1655, %v1647
  %v2408 = vpack.c.b16 %v1656, %v1648
  %v2409 = vpack.c.b16 %v1657, %v1649
  %v2410 = vpack.c.b16 %v1658, %v1650
  %v2411 = vpack.c.b16 %v1659, %v1651
  %v2412 = vpack.c.b16 %v1660, %v1652
  %v2413 = vpack.c.b16 %v1661, %v1653
  %v2414 = vpack.c.b16 %v1662, %v1654
  %v2415 = vpack.c.b16 %v1671, %v1663
  %v2416 = vpack.c.b16 %v1672, %v1664
  %v2417 = vpack.c.b16 %v1673, %v1665
  %v2418 = vpack.c.b16 %v1674, %v1666
  %v2419 = vpack.c.b16 %v1675, %v1667
  %v2420 = vpack.c.b16 %v1676, %v1668
  %v2421 = vpack.c.b16 %v1677, %v1669
  %v2422 = vpack.c.b16 %v1678, %v1670
  %v2423 = vpack.c.b16 %v1687, %v1679
  %v2424 = vpack.c.b16 %v1688, %v1680
  %v2425 = vpack.c.b16 %v1689, %v1681
  %v2426 = vpack.c.b16 %v1690, %v1682
  %v2427 = vpack.c.b16 %v1691, %v1683
  %v2428 = vpack.c.b16 %v1692, %v1684
  %v2429 = vpack.c.b16 %v1693, %v1685
  %v2430 = vpack.c.b16 %v1694, %v1686
  %v2431 = vpack.c.b16 %v1703, %v1695
  %v2432 = vpack.c.b16 %v1704, %v1696
  %v2433 = vpack.c.b16 %v1705, %v1697
  %v2434 = vpack.c.b16 %v1706, %v1698
  %v2435 = vpack.c.b16 %v1707, %v1699
  %v2436 = vpack.c.b16 %v1708, %v1700
  %v2437 = vpack.c.b16 %v1709, %v1701
  %v2438 = vpack.c.b16 %v1710, %v1702
  %v2439 = vpack.c.b16 %v1719, %v1711
  %v2440 = vpack.c.b16 %v1720, %v1712
  %v2441 = vpack.c.b16 %v1721, %v1713
  %v2442 = vpack.c.b16 %v1722, %v1714
  %v2443 = vpack.c.b16 %v1723, %v1715
  %v2444 = vpack.c.b16 %v1724, %v1716
  %v2445 = vpack.c.b16 %v1725, %v1717
  %v2446 = vpack.c.b16 %v1726, %v1718
  %v2447 = vpack.c.b16 %v1735, %v1727
  %v2448 = vpack.c.b16 %v1736, %v1728
  %v2449 = vpack.c.b16 %v1737, %v1729
  %v2450 = vpack.c.b16 %v1738, %v1730
  %v2451 = vpack.c.b16 %v1739, %v1731
  %v2452 = vpack.c.b16 %v1740, %v1732
  %v2453 = vpack.c.b16 %v1741, %v1733
  %v2454 = vpack.c.b16 %v1742, %v1734
  %v2455 = vpack.c.b16 %v1751, %v1743
  %v2456 = vpack.c.b16 %v1752, %v1744
  %v2457 = vpack.c.b16 %v1753, %v1745
  %v2458 = vpack.c.b16 %v1754, %v1746
  %v2459 = vpack.c.b16 %v1755, %v1747
  %v2460 = vpack.c.b16 %v1756, %v1748
  %v2461 = vpack.c.b16 %v1757, %v1749
  %v2462 = vpack.c.b16 %v1758, %v1750
  %v2463 = vpack.c.b16 %v1767, %v1759
  %v2464 = vpack.c.b16 %v1768, %v1760
  %v2465 = vpack.c.b16 %v1769, %v1761
  %v2466 = vpack.c.b16 %v1770, %v1762
  %v2467 = vpack.c.b16 %v1771, %v1763
  %v2468 = vpack.c.b16 %v1772, %v1764
  %v2469 = vpack.c.b16 %v1773, %v1765
  %v2470 = vpack.c.b16 %v1774, %v1766
  %v2471 = vpack.c.b16 %v1783, %v1775
  %v2472 = vpack.c.b16 %v1784, %v1776
  %v2473 = vpack.c.b16 %v1785, %v1777
  %v2474 = vpack.c.b16 %v1786, %v1778
  %v2475 = vpack.c.b16 %v1787, %v1779
  %v2476 = vpack.c.b16 %v1788, %v1780
  %v2477 = vpack.c.b16 %v1789, %v1781
  %v2478 = vpack.c.b16 %v1790, %v1782
  %v2479 = vpack.c.b16 %v1799, %v1791
  %v2480 = vpack.c.b16 %v1800, %v1792
  %v2481 = vpack.c.b16 %v1801, %v1793
  %v2482 = vpack.c.b16 %v1802, %v1794
  %v2483 = vpack.c.b16 %v1803, %v1795
  %v2484 = vpack.c.b16 %v1804, %v1796
  %v2485 = vpack.c.b16 %v1805, %v1797
  %v2486 = vpack.c.b16 %v1806, %v1798
  %v2487 = vpack.c.b16 %v1815, %v1807
  %v2488 = vpack.c.b16 %v1816, %v1808
  %v2489 = vpack.c.b16 %v1817, %v1809
  %v2490 = vpack.c.b16 %v1818, %v1810
  %v2491 = vpack.c.b16 %v1819, %v1811
  %v2492 = vpack.c.b16 %v1820, %v1812
  %v2493 = vpack.c.b16 %v1821, %v1813
  %v2494 = vpack.c.b16 %v1822, %v1814
  %v2495 = vpack.c.b16 %v1831, %v1823
  %v2496 = vpack.c.b16 %v1832, %v1824
  %v2497 = vpack.c.b16 %v1833, %v1825
  %v2498 = vpack.c.b16 %v1834, %v1826
  %v2499 = vpack.c.b16 %v1835, %v1827
  %v2500 = vpack.c.b16 %v1836, %v1828
  %v2501 = vpack.c.b16 %v1837, %v1829
  %v2502 = vpack.c.b16 %v1838, %v1830
  %v2503 = vpack.c.b16 %v1847, %v1839
  %v2504 = vpack.c.b16 %v1848, %v1840
  %v2505 = vpack.c.b16 %v1849, %v1841
  %v2506 = vpack.c.b16 %v1850, %v1842
  %v2507 = vpack.c.b16 %v1851, %v1843
  %v2508 = vpack.c.b16 %v1852, %v1844
  %v2509 = vpack.c.b16 %v1853, %v1845
  %v2510 = vpack.c.b16 %v1854, %v1846
  %v2511 = vpack.c.b16 %v1863, %v1855
  %v2512 = vpack.c.b16 %v1864, %v1856
  %v2513 = vpack.c.b16 %v1865, %v1857
  %v2514 = vpack.c.b16 %v1866, %v1858
  %v2515 = vpack.c.b16 %v1867, %v1859
  %v2516 = vpack.c.b16 %v1868, %v1860
  %v2517 = vpack.c.b16 %v1869, %v1861
  %v2518 = vpack.c.b16 %v1870, %v1862
  %v2519 = vpack.c.b16 %v1879, %v1871
  %v2520 = vpack.c.b16 %v1880, %v1872
  %v2521 = vpack.c.b16 %v1881, %v1873
  %v2522 = vpack.c.b16 %v1882, %v1874
  %v2523 = vpack.c.b16 %v1883, %v1875
  %v2524 = vpack.c.b16 %v1884, %v1876
  %v2525 = vpack.c.b16 %v1885, %v1877
  %v2526 = vpack.c.b16 %v1886, %v1878
  %v2527 = vpack.c.b16 %v1895, %v1887
  %v2528 = vpack.c.b16 %v1896, %v1888
  %v2529 = vpack.c.b16 %v1897, %v1889
  %v2530 = vpack.c.b16 %v1898, %v1890
  %v2531 = vpack.c.b16 %v1899, %v1891
  %v2532 = vpack.c.b16 %v1900, %v1892
  %v2533 = vpack.c.b16 %v1901, %v1893
  %v2534 = vpack.c.b16 %v1902, %v1894
  %v2535 = vpack.c.b16 %v1911, %v1903
  %v2536 = vpack.c.b16 %v1912, %v1904
  %v2537 = vpack.c.b16 %v1913, %v1905
  %v2538 = vpack.c.b16 %v1914, %v1906
  %v2539 = vpack.c.b16 %v1915, %v1907
  %v2540 = vpack.c.b16 %v1916, %v1908
  %v2541 = vpack.c.b16 %v1917, %v1909
  %v2542 = vpack.c.b16 %v1918, %v1910
  %v2543 = vpack.c.b16 %v1927, %v1919
  %v2544 = vpack.c.b16 %v1928, %v1920
  %v2545 = vpack.c.b16 %v1929, %v1921
  %v2546 = vpack.c.b16 %v1930, %v1922
  %v2547 = vpack.c.b16 %v1931, %v1923
  %v2548 = vpack.c.b16 %v1932, %v1924
  %v2549 = vpack.c.b16 %v1933, %v1925
  %v2550 = vpack.c.b16 %v1934, %v1926
  %v2551 = vpack.c.b16 %v1943, %v1935
  %v2552 = vpack.c.b16 %v1944, %v1936
  %v2553 = vpack.c.b16 %v1945, %v1937
  %v2554 = vpack.c.b16 %v1946, %v1938
  %v2555 = vpack.c.b16 %v1947, %v1939
  %v2556 = vpack.c.b16 %v1948, %v1940
  %v2557 = vpack.c.b16 %v1949, %v1941
  %v2558 = vpack.c.b16 %v1950, %v1942
  %v2559 = vpack.c.b16 %v1959, %v1951
  %v2560 = vpack.c.b16 %v1960, %v1952
  %v2561 = vpack.c.b16 %v1961, %v1953
  %v2562 = vpack.c.b16 %v1962, %v1954
  %v2563 = vpack.c.b16 %v1963, %v1955
  %v2564 = vpack.c.b16 %v1964, %v1956
  %v2565 = vpack.c.b16 %v1965, %v1957
  %v2566 = vpack.c.b16 %v1966, %v1958
  %v2567 = vpack.c.b16 %v1975, %v1967
  %v2568 = vpack.c.b16 %v1976, %v1968
  %v2569 = vpack.c.b16 %v1977, %v1969
  %v2570 = vpack.c.b16 %v1978, %v1970
  %v2571 = vpack.c.b16 %v1979, %v1971
  %v2572 = vpack.c.b16 %v1980, %v1972
  %v2573 = vpack.c.b16 %v1981, %v1973
  %v2574 = vpack.c.b16 %v1982, %v1974
  %v2575 = vpack.c.b16 %v1991, %v1983
  %v2576 = vpack.c.b16 %v1992, %v1984
  %v2577 = vpack.c.b16 %v1993, %v1985
  %v2578 = vpack.c.b16 %v1994, %v1986
  %v2579 = vpack.c.b16 %v1995, %v1987
  %v2580 = vpack.c.b16 %v1996, %v1988
  %v2581 = vpack.c.b16 %v1997, %v1989
  %v2582 = vpack.c.b16 %v1998, %v1990
  %v2583 = vpack.c.b16 %v2007, %v1999
  %v2584 = vpack.c.b16 %v2008, %v2000
  %v2585 = vpack.c.b16 %v2009, %v2001
  %v2586 = vpack.c.b16 %v2010, %v2002
  %v2587 = vpack.c.b16 %v2011, %v2003
  %v2588 = vpack.c.b16 %v2012, %v2004
  %v2589 = vpack.c.b16 %v2013, %v2005
  %v2590 = vpack.c.b16 %v2014, %v2006
  %v2591 = vpack.c.b16 %v2023, %v2015
  %v2592 = vpack.c.b16 %v2024, %v2016
  %v2593 = vpack.c.b16 %v2025, %v2017
  %v2594 = vpack.c.b16 %v2026, %v2018
  %v2595 = vpack.c.b16 %v2027, %v2019
  %v2596 = vpack.c.b16 %v2028, %v2020
  %v2597 = vpack.c.b16 %v2029, %v2021
  %v2598 = vpack.c.b16 %v2030, %v2022
  %v2599 = vpack.c.b16 %v2039, %v2031
  %v2600 = vpack.c.b16 %v2040, %v2032
  %v2601 = vpack.c.b16 %v2041, %v2033
  %v2602 = vpack.c.b16 %v2042, %v2034
  %v2603 = vpack.c.b16 %v2043, %v2035
  %v2604 = vpack.c.b16 %v2044, %v2036
  %v2605 = vpack.c.b16 %v2045, %v2037
  %v2606 = vpack.c.b16 %v2046, %v2038
  %v2607 = vpack.c.b16 %v2055, %v2047
  %v2608 = vpack.c.b16 %v2056, %v2048
  %v2609 = vpack.c.b16 %v2057, %v2049
  %v2610 = vpack.c.b16 %v2058, %v2050
  %v2611 = vpack.c.b16 %v2059, %v2051
  %v2612 = vpack.c.b16 %v2060, %v2052
  %v2613 = vpack.c.b16 %v2061, %v2053
  %v2614 = vpack.c.b16 %v2062, %v2054
  %v2615 = vpack.c.b16 %v2071, %v2063
  %v2616 = vpack.c.b16 %v2072, %v2064
  %v2617 = vpack.c.b16 %v2073, %v2065
  %v2618 = vpack.c.b16 %v2074, %v2066
  %v2619 = vpack.c.b16 %v2075, %v2067
  %v2620 = vpack.c.b16 %v2076, %v2068
  %v2621 = vpack.c.b16 %v2077, %v2069
  %v2622 = vpack.c.b16 %v2078, %v2070
  %v2623 = vpack.c.b16 %v2087, %v2079
  %v2624 = vpack.c.b16 %v2088, %v2080
  %v2625 = vpack.c.b16 %v2089, %v2081
  %v2626 = vpack.c.b16 %v2090, %v2082
  %v2627 = vpack.c.b16 %v2091, %v2083
  %v2628 = vpack.c.b16 %v2092, %v2084
  %v2629 = vpack.c.b16 %v2093, %v2085
  %v2630 = vpack.c.b16 %v2094, %v2086
  %v2631 = vpack.c.b16 %v2103, %v2095
  %v2632 = vpack.c.b16 %v2104, %v2096
  %v2633 = vpack.c.b16 %v2105, %v2097
  %v2634 = vpack.c.b16 %v2106, %v2098
  %v2635 = vpack.c.b16 %v2107, %v2099
  %v2636 = vpack.c.b16 %v2108, %v2100
  %v2637 = vpack.c.b16 %v2109, %v2101
  %v2638 = vpack.c.b16 %v2110, %v2102
  %v2639 = vpack.c.b16 %v2119, %v2111
  %v2640 = vpack.c.b16 %v2120, %v2112
  %v2641 = vpack.c.b16 %v2121, %v2113
  %v2642 = vpack.c.b16 %v2122, %v2114
  %v2643 = vpack.c.b16 %v2123, %v2115
  %v2644 = vpack.c.b16 %v2124, %v2116
  %v2645 = vpack.c.b16 %v2125, %v2117
  %v2646 = vpack.c.b16 %v2126, %v2118
  %v2647 = vpack.c.b16 %v2135, %v2127
  %v2648 = vpack.c.b16 %v2136, %v2128
  %v2649 = vpack.c.b16 %v2137, %v2129
  %v2650 = vpack.c.b16 %v2138, %v2130
  %v2651 = vpack.c.b16 %v2139, %v2131
  %v2652 = vpack.c.b16 %v2140, %v2132
  %v2653 = vpack.c.b16 %v2141, %v2133
  %v2654 = vpack.c.b16 %v2142, %v2134
  %3167 = vmatprep.subr.bf16.mxu0 %v2144
  %3168 = vmatpush1.bf16.msra.mxu0 %v2143
  %3169 = vmatprep.subr.bf16.mxu0 %v2152
  %3170 = vmatpush1.bf16.msra.mxu0 %v2151
  %3171 = vmatprep.subr.bf16.mxu0 %v2160
  %3172 = vmatpush1.bf16.msra.mxu0 %v2159
  %3173 = vmatprep.subr.bf16.mxu0 %v2168
  %3174 = vmatpush1.bf16.msra.mxu0 %v2167
  %3175 = vmatprep.subr.bf16.mxu0 %v2176
  %3176 = vmatpush1.bf16.msra.mxu0 %v2175
  %3177 = vmatprep.subr.bf16.mxu0 %v2184
  %3178 = vmatpush1.bf16.msra.mxu0 %v2183
  %3179 = vmatprep.subr.bf16.mxu0 %v2192
  %3180 = vmatpush1.bf16.msra.mxu0 %v2191
  %3181 = vmatprep.subr.bf16.mxu0 %v2200
  %3182 = vmatpush1.bf16.msra.mxu0 %v2199
  %3183 = vmatprep.subr.bf16.mxu0 %v2208
  %3184 = vmatpush1.bf16.msra.mxu0 %v2207
  %3185 = vmatprep.subr.bf16.mxu0 %v2216
  %3186 = vmatpush1.bf16.msra.mxu0 %v2215
  %3187 = vmatprep.subr.bf16.mxu0 %v2224
  %3188 = vmatpush1.bf16.msra.mxu0 %v2223
  %3189 = vmatprep.subr.bf16.mxu0 %v2232
  %3190 = vmatpush1.bf16.msra.mxu0 %v2231
  %3191 = vmatprep.subr.bf16.mxu0 %v2240
  %3192 = vmatpush1.bf16.msra.mxu0 %v2239
  %3193 = vmatprep.subr.bf16.mxu0 %v2248
  %3194 = vmatpush1.bf16.msra.mxu0 %v2247
  %3195 = vmatprep.subr.bf16.mxu0 %v2256
  %3196 = vmatpush1.bf16.msra.mxu0 %v2255
  %3197 = vmatprep.subr.bf16.mxu0 %v2264
  %3198 = vmatpush1.bf16.msra.mxu0 %v2263
  %3199 = vmatprep.mubr.bf16.mxu0 %v592
  %3200 = vmatmul.mubr.bf16.gmra.mrb[0].mxu0 %v591
  %v3201 = vpop.f32.mrb[0].mxu0
  %v3202 = vadd.f32 %v542, %v3201
  %v3203 = vpop.f32.mrb[0].mxu0
  %v3204 = vadd.f32 %v546, %v3203
  %v3205 = vpop.f32.mrb[0].mxu0
  %v3206 = vpop.f32.mrb[0].mxu0
  %3207 = vdwg.mxu0
  %3208 = vmatprep.subr.bf16.mxu0 %v2272
  %3209 = vmatpush1.bf16.msra.mxu0 %v2271
  %3210 = vmatprep.subr.bf16.mxu0 %v2280
  %3211 = vmatpush1.bf16.msra.mxu0 %v2279
  %3212 = vmatprep.subr.bf16.mxu0 %v2288
  %3213 = vmatpush1.bf16.msra.mxu0 %v2287
  %3214 = vmatprep.subr.bf16.mxu0 %v2296
  %3215 = vmatpush1.bf16.msra.mxu0 %v2295
  %3216 = vmatprep.subr.bf16.mxu0 %v2304
  %3217 = vmatpush1.bf16.msra.mxu0 %v2303
  %3218 = vmatprep.subr.bf16.mxu0 %v2312
  %3219 = vmatpush1.bf16.msra.mxu0 %v2311
  %3220 = vmatprep.subr.bf16.mxu0 %v2320
  %3221 = vmatpush1.bf16.msra.mxu0 %v2319
  %3222 = vmatprep.subr.bf16.mxu0 %v2328
  %3223 = vmatpush1.bf16.msra.mxu0 %v2327
  %3224 = vmatprep.subr.bf16.mxu0 %v2336
  %3225 = vmatpush1.bf16.msra.mxu0 %v2335
  %3226 = vmatprep.subr.bf16.mxu0 %v2344
  %3227 = vmatpush1.bf16.msra.mxu0 %v2343
  %3228 = vmatprep.subr.bf16.mxu0 %v2352
  %3229 = vmatpush1.bf16.msra.mxu0 %v2351
  %3230 = vmatprep.subr.bf16.mxu0 %v2360
  %3231 = vmatpush1.bf16.msra.mxu0 %v2359
  %3232 = vmatprep.subr.bf16.mxu0 %v2368
  %3233 = vmatpush1.bf16.msra.mxu0 %v2367
  %3234 = vmatprep.subr.bf16.mxu0 %v2376
  %3235 = vmatpush1.bf16.msra.mxu0 %v2375
  %3236 = vmatprep.subr.bf16.mxu0 %v2384
  %3237 = vmatpush1.bf16.msra.mxu0 %v2383
  %3238 = vmatprep.subr.bf16.mxu0 %v2392
  %3239 = vmatpush1.bf16.msra.mxu0 %v2391
  %3240 = vmatprep.mubr.bf16.mxu0 %v594
  %3241 = vmatmul.mubr.bf16.gmra.mrb[0].mxu0 %v593
  %v3242 = vpop.f32.mrb[0].mxu0
  %v3243 = vadd.f32 %v3202, %v3242
  %v3244 = vpop.f32.mrb[0].mxu0
  %v3245 = vadd.f32 %v3204, %v3244
  %v3246 = vpop.f32.mrb[0].mxu0
  %v3247 = vpop.f32.mrb[0].mxu0
  %3248 = vdwg.mxu0
  %3249 = vmatprep.subr.bf16.mxu0 %v2400
  %3250 = vmatpush1.bf16.msra.mxu0 %v2399
  %3251 = vmatprep.subr.bf16.mxu0 %v2408
  %3252 = vmatpush1.bf16.msra.mxu0 %v2407
  %3253 = vmatprep.subr.bf16.mxu0 %v2416
  %3254 = vmatpush1.bf16.msra.mxu0 %v2415
  %3255 = vmatprep.subr.bf16.mxu0 %v2424
  %3256 = vmatpush1.bf16.msra.mxu0 %v2423
  %3257 = vmatprep.subr.bf16.mxu0 %v2432
  %3258 = vmatpush1.bf16.msra.mxu0 %v2431
  %3259 = vmatprep.subr.bf16.mxu0 %v2440
  %3260 = vmatpush1.bf16.msra.mxu0 %v2439
  %3261 = vmatprep.subr.bf16.mxu0 %v2448
  %3262 = vmatpush1.bf16.msra.mxu0 %v2447
  %3263 = vmatprep.subr.bf16.mxu0 %v2456
  %3264 = vmatpush1.bf16.msra.mxu0 %v2455
  %3265 = vmatprep.subr.bf16.mxu0 %v2464
  %3266 = vmatpush1.bf16.msra.mxu0 %v2463
  %3267 = vmatprep.subr.bf16.mxu0 %v2472
  %3268 = vmatpush1.bf16.msra.mxu0 %v2471
  %3269 = vmatprep.subr.bf16.mxu0 %v2480
  %3270 = vmatpush1.bf16.msra.mxu0 %v2479
  %3271 = vmatprep.subr.bf16.mxu0 %v2488
  %3272 = vmatpush1.bf16.msra.mxu0 %v2487
  %3273 = vmatprep.subr.bf16.mxu0 %v2496
  %3274 = vmatpush1.bf16.msra.mxu0 %v2495
  %3275 = vmatprep.subr.bf16.mxu0 %v2504
  %3276 = vmatpush1.bf16.msra.mxu0 %v2503
  %3277 = vmatprep.subr.bf16.mxu0 %v2512
  %3278 = vmatpush1.bf16.msra.mxu0 %v2511
  %3279 = vmatprep.subr.bf16.mxu0 %v2520
  %3280 = vmatpush1.bf16.msra.mxu0 %v2519
  %3281 = vmatprep.mubr.bf16.mxu0 %v596
  %3282 = vmatmul.mubr.bf16.gmra.mrb[0].mxu0 %v595
  %v3283 = vpop.f32.mrb[0].mxu0
  %v3284 = vadd.f32 %v3243, %v3283
  %v3285 = vpop.f32.mrb[0].mxu0
  %v3286 = vadd.f32 %v3245, %v3285
  %v3287 = vpop.f32.mrb[0].mxu0
  %v3288 = vpop.f32.mrb[0].mxu0
  %3289 = vdwg.mxu0
  %3290 = vmatprep.subr.bf16.mxu0 %v2528
  %3291 = vmatpush1.bf16.msra.mxu0 %v2527
  %3292 = vmatprep.subr.bf16.mxu0 %v2536
  %3293 = vmatpush1.bf16.msra.mxu0 %v2535
  %3294 = vmatprep.subr.bf16.mxu0 %v2544
  %3295 = vmatpush1.bf16.msra.mxu0 %v2543
  %3296 = vmatprep.subr.bf16.mxu0 %v2552
  %3297 = vmatpush1.bf16.msra.mxu0 %v2551
  %3298 = vmatprep.subr.bf16.mxu0 %v2560
  %3299 = vmatpush1.bf16.msra.mxu0 %v2559
  %3300 = vmatprep.subr.bf16.mxu0 %v2568
  %3301 = vmatpush1.bf16.msra.mxu0 %v2567
  %3302 = vmatprep.subr.bf16.mxu0 %v2576
  %3303 = vmatpush1.bf16.msra.mxu0 %v2575
  %3304 = vmatprep.subr.bf16.mxu0 %v2584
  %3305 = vmatpush1.bf16.msra.mxu0 %v2583
  %3306 = vmatprep.subr.bf16.mxu0 %v2592
  %3307 = vmatpush1.bf16.msra.mxu0 %v2591
  %3308 = vmatprep.subr.bf16.mxu0 %v2600
  %3309 = vmatpush1.bf16.msra.mxu0 %v2599
  %3310 = vmatprep.subr.bf16.mxu0 %v2608
  %3311 = vmatpush1.bf16.msra.mxu0 %v2607
  %3312 = vmatprep.subr.bf16.mxu0 %v2616
  %3313 = vmatpush1.bf16.msra.mxu0 %v2615
  %3314 = vmatprep.subr.bf16.mxu0 %v2624
  %3315 = vmatpush1.bf16.msra.mxu0 %v2623
  %3316 = vmatprep.subr.bf16.mxu0 %v2632
  %3317 = vmatpush1.bf16.msra.mxu0 %v2631
  %3318 = vmatprep.subr.bf16.mxu0 %v2640
  %3319 = vmatpush1.bf16.msra.mxu0 %v2639
  %3320 = vmatprep.subr.bf16.mxu0 %v2648
  %3321 = vmatpush1.bf16.msra.mxu0 %v2647
  %3322 = vmatprep.mubr.bf16.mxu0 %v598
  %3323 = vmatmul.mubr.bf16.gmra.mrb[0].mxu0 %v597
  %v3324 = vpop.f32.mrb[0].mxu0
  %v3325 = vadd.f32 %v3284, %v3324
  %v3326 = vpop.f32.mrb[0].mxu0
  %v3327 = vadd.f32 %v3286, %v3326
  %v3328 = vpop.f32.mrb[0].mxu0
  %v3329 = vpop.f32.mrb[0].mxu0
  %3330 = vdwg.mxu0
  %3331 = vmatprep.subr.bf16.mxu0 %v2146
  %3332 = vmatpush1.bf16.msra.mxu0 %v2145
  %3333 = vmatprep.subr.bf16.mxu0 %v2154
  %3334 = vmatpush1.bf16.msra.mxu0 %v2153
  %3335 = vmatprep.subr.bf16.mxu0 %v2162
  %3336 = vmatpush1.bf16.msra.mxu0 %v2161
  %3337 = vmatprep.subr.bf16.mxu0 %v2170
  %3338 = vmatpush1.bf16.msra.mxu0 %v2169
  %3339 = vmatprep.subr.bf16.mxu0 %v2178
  %3340 = vmatpush1.bf16.msra.mxu0 %v2177
  %3341 = vmatprep.subr.bf16.mxu0 %v2186
  %3342 = vmatpush1.bf16.msra.mxu0 %v2185
  %3343 = vmatprep.subr.bf16.mxu0 %v2194
  %3344 = vmatpush1.bf16.msra.mxu0 %v2193
  %3345 = vmatprep.subr.bf16.mxu0 %v2202
  %3346 = vmatpush1.bf16.msra.mxu0 %v2201
  %3347 = vmatprep.subr.bf16.mxu0 %v2210
  %3348 = vmatpush1.bf16.msra.mxu0 %v2209
  %3349 = vmatprep.subr.bf16.mxu0 %v2218
  %3350 = vmatpush1.bf16.msra.mxu0 %v2217
  %3351 = vmatprep.subr.bf16.mxu0 %v2226
  %3352 = vmatpush1.bf16.msra.mxu0 %v2225
  %3353 = vmatprep.subr.bf16.mxu0 %v2234
  %3354 = vmatpush1.bf16.msra.mxu0 %v2233
  %3355 = vmatprep.subr.bf16.mxu0 %v2242
  %3356 = vmatpush1.bf16.msra.mxu0 %v2241
  %3357 = vmatprep.subr.bf16.mxu0 %v2250
  %3358 = vmatpush1.bf16.msra.mxu0 %v2249
  %3359 = vmatprep.subr.bf16.mxu0 %v2258
  %3360 = vmatpush1.bf16.msra.mxu0 %v2257
  %3361 = vmatprep.subr.bf16.mxu0 %v2266
  %3362 = vmatpush1.bf16.msra.mxu0 %v2265
  %3363 = vmatprep.mubr.bf16.mxu0 %v592
  %3364 = vmatmul.mubr.bf16.gmra.mrb[0].mxu0 %v591
  %v3365 = vpop.f32.mrb[0].mxu0
  %v3366 = vadd.f32 %v550, %v3365
  %v3367 = vpop.f32.mrb[0].mxu0
  %v3368 = vadd.f32 %v554, %v3367
  %v3369 = vpop.f32.mrb[0].mxu0
  %v3370 = vpop.f32.mrb[0].mxu0
  %3371 = vdwg.mxu0
  %3372 = vmatprep.subr.bf16.mxu0 %v2274
  %3373 = vmatpush1.bf16.msra.mxu0 %v2273
  %3374 = vmatprep.subr.bf16.mxu0 %v2282
  %3375 = vmatpush1.bf16.msra.mxu0 %v2281
  %3376 = vmatprep.subr.bf16.mxu0 %v2290
  %3377 = vmatpush1.bf16.msra.mxu0 %v2289
  %3378 = vmatprep.subr.bf16.mxu0 %v2298
  %3379 = vmatpush1.bf16.msra.mxu0 %v2297
  %3380 = vmatprep.subr.bf16.mxu0 %v2306
  %3381 = vmatpush1.bf16.msra.mxu0 %v2305
  %3382 = vmatprep.subr.bf16.mxu0 %v2314
  %3383 = vmatpush1.bf16.msra.mxu0 %v2313
  %3384 = vmatprep.subr.bf16.mxu0 %v2322
  %3385 = vmatpush1.bf16.msra.mxu0 %v2321
  %3386 = vmatprep.subr.bf16.mxu0 %v2330
  %3387 = vmatpush1.bf16.msra.mxu0 %v2329
  %3388 = vmatprep.subr.bf16.mxu0 %v2338
  %3389 = vmatpush1.bf16.msra.mxu0 %v2337
  %3390 = vmatprep.subr.bf16.mxu0 %v2346
  %3391 = vmatpush1.bf16.msra.mxu0 %v2345
  %3392 = vmatprep.subr.bf16.mxu0 %v2354
  %3393 = vmatpush1.bf16.msra.mxu0 %v2353
  %3394 = vmatprep.subr.bf16.mxu0 %v2362
  %3395 = vmatpush1.bf16.msra.mxu0 %v2361
  %3396 = vmatprep.subr.bf16.mxu0 %v2370
  %3397 = vmatpush1.bf16.msra.mxu0 %v2369
  %3398 = vmatprep.subr.bf16.mxu0 %v2378
  %3399 = vmatpush1.bf16.msra.mxu0 %v2377
  %3400 = vmatprep.subr.bf16.mxu0 %v2386
  %3401 = vmatpush1.bf16.msra.mxu0 %v2385
  %3402 = vmatprep.subr.bf16.mxu0 %v2394
  %3403 = vmatpush1.bf16.msra.mxu0 %v2393
  %3404 = vmatprep.mubr.bf16.mxu0 %v594
  %3405 = vmatmul.mubr.bf16.gmra.mrb[0].mxu0 %v593
  %v3406 = vpop.f32.mrb[0].mxu0
  %v3407 = vadd.f32 %v3366, %v3406
  %v3408 = vpop.f32.mrb[0].mxu0
  %v3409 = vadd.f32 %v3368, %v3408
  %v3410 = vpop.f32.mrb[0].mxu0
  %v3411 = vpop.f32.mrb[0].mxu0
  %3412 = vdwg.mxu0
  %3413 = vmatprep.subr.bf16.mxu0 %v2402
  %3414 = vmatpush1.bf16.msra.mxu0 %v2401
  %3415 = vmatprep.subr.bf16.mxu0 %v2410
  %3416 = vmatpush1.bf16.msra.mxu0 %v2409
  %3417 = vmatprep.subr.bf16.mxu0 %v2418
  %3418 = vmatpush1.bf16.msra.mxu0 %v2417
  %3419 = vmatprep.subr.bf16.mxu0 %v2426
  %3420 = vmatpush1.bf16.msra.mxu0 %v2425
  %3421 = vmatprep.subr.bf16.mxu0 %v2434
  %3422 = vmatpush1.bf16.msra.mxu0 %v2433
  %3423 = vmatprep.subr.bf16.mxu0 %v2442
  %3424 = vmatpush1.bf16.msra.mxu0 %v2441
  %3425 = vmatprep.subr.bf16.mxu0 %v2450
  %3426 = vmatpush1.bf16.msra.mxu0 %v2449
  %3427 = vmatprep.subr.bf16.mxu0 %v2458
  %3428 = vmatpush1.bf16.msra.mxu0 %v2457
  %3429 = vmatprep.subr.bf16.mxu0 %v2466
  %3430 = vmatpush1.bf16.msra.mxu0 %v2465
  %3431 = vmatprep.subr.bf16.mxu0 %v2474
  %3432 = vmatpush1.bf16.msra.mxu0 %v2473
  %3433 = vmatprep.subr.bf16.mxu0 %v2482
  %3434 = vmatpush1.bf16.msra.mxu0 %v2481
  %3435 = vmatprep.subr.bf16.mxu0 %v2490
  %3436 = vmatpush1.bf16.msra.mxu0 %v2489
  %3437 = vmatprep.subr.bf16.mxu0 %v2498
  %3438 = vmatpush1.bf16.msra.mxu0 %v2497
  %3439 = vmatprep.subr.bf16.mxu0 %v2506
  %3440 = vmatpush1.bf16.msra.mxu0 %v2505
  %3441 = vmatprep.subr.bf16.mxu0 %v2514
  %3442 = vmatpush1.bf16.msra.mxu0 %v2513
  %3443 = vmatprep.subr.bf16.mxu0 %v2522
  %3444 = vmatpush1.bf16.msra.mxu0 %v2521
  %3445 = vmatprep.mubr.bf16.mxu0 %v596
  %3446 = vmatmul.mubr.bf16.gmra.mrb[0].mxu0 %v595
  %v3447 = vpop.f32.mrb[0].mxu0
  %v3448 = vadd.f32 %v3407, %v3447
  %v3449 = vpop.f32.mrb[0].mxu0
  %v3450 = vadd.f32 %v3409, %v3449
  %v3451 = vpop.f32.mrb[0].mxu0
  %v3452 = vpop.f32.mrb[0].mxu0
  %3453 = vdwg.mxu0
  %3454 = vmatprep.subr.bf16.mxu0 %v2530
  %3455 = vmatpush1.bf16.msra.mxu0 %v2529
  %3456 = vmatprep.subr.bf16.mxu0 %v2538
  %3457 = vmatpush1.bf16.msra.mxu0 %v2537
  %3458 = vmatprep.subr.bf16.mxu0 %v2546
  %3459 = vmatpush1.bf16.msra.mxu0 %v2545
  %3460 = vmatprep.subr.bf16.mxu0 %v2554
  %3461 = vmatpush1.bf16.msra.mxu0 %v2553
  %3462 = vmatprep.subr.bf16.mxu0 %v2562
  %3463 = vmatpush1.bf16.msra.mxu0 %v2561
  %3464 = vmatprep.subr.bf16.mxu0 %v2570
  %3465 = vmatpush1.bf16.msra.mxu0 %v2569
  %3466 = vmatprep.subr.bf16.mxu0 %v2578
  %3467 = vmatpush1.bf16.msra.mxu0 %v2577
  %3468 = vmatprep.subr.bf16.mxu0 %v2586
  %3469 = vmatpush1.bf16.msra.mxu0 %v2585
  %3470 = vmatprep.subr.bf16.mxu0 %v2594
  %3471 = vmatpush1.bf16.msra.mxu0 %v2593
  %3472 = vmatprep.subr.bf16.mxu0 %v2602
  %3473 = vmatpush1.bf16.msra.mxu0 %v2601
  %3474 = vmatprep.subr.bf16.mxu0 %v2610
  %3475 = vmatpush1.bf16.msra.mxu0 %v2609
  %3476 = vmatprep.subr.bf16.mxu0 %v2618
  %3477 = vmatpush1.bf16.msra.mxu0 %v2617
  %3478 = vmatprep.subr.bf16.mxu0 %v2626
  %3479 = vmatpush1.bf16.msra.mxu0 %v2625
  %3480 = vmatprep.subr.bf16.mxu0 %v2634
  %3481 = vmatpush1.bf16.msra.mxu0 %v2633
  %3482 = vmatprep.subr.bf16.mxu0 %v2642
  %3483 = vmatpush1.bf16.msra.mxu0 %v2641
  %3484 = vmatprep.subr.bf16.mxu0 %v2650
  %3485 = vmatpush1.bf16.msra.mxu0 %v2649
  %3486 = vmatprep.mubr.bf16.mxu0 %v598
  %3487 = vmatmul.mubr.bf16.gmra.mrb[0].mxu0 %v597
  %v3488 = vpop.f32.mrb[0].mxu0
  %v3489 = vadd.f32 %v3448, %v3488
  %v3490 = vpop.f32.mrb[0].mxu0
  %v3491 = vadd.f32 %v3450, %v3490
  %v3492 = vpop.f32.mrb[0].mxu0
  %v3493 = vpop.f32.mrb[0].mxu0
  %3494 = vdwg.mxu0
  %3495 = vmatprep.subr.bf16.mxu0 %v2148
  %3496 = vmatpush1.bf16.msra.mxu0 %v2147
  %3497 = vmatprep.subr.bf16.mxu0 %v2156
  %3498 = vmatpush1.bf16.msra.mxu0 %v2155
  %3499 = vmatprep.subr.bf16.mxu0 %v2164
  %3500 = vmatpush1.bf16.msra.mxu0 %v2163
  %3501 = vmatprep.subr.bf16.mxu0 %v2172
  %3502 = vmatpush1.bf16.msra.mxu0 %v2171
  %3503 = vmatprep.subr.bf16.mxu0 %v2180
  %3504 = vmatpush1.bf16.msra.mxu0 %v2179
  %3505 = vmatprep.subr.bf16.mxu0 %v2188
  %3506 = vmatpush1.bf16.msra.mxu0 %v2187
  %3507 = vmatprep.subr.bf16.mxu0 %v2196
  %3508 = vmatpush1.bf16.msra.mxu0 %v2195
  %3509 = vmatprep.subr.bf16.mxu0 %v2204
  %3510 = vmatpush1.bf16.msra.mxu0 %v2203
  %3511 = vmatprep.subr.bf16.mxu0 %v2212
  %3512 = vmatpush1.bf16.msra.mxu0 %v2211
  %3513 = vmatprep.subr.bf16.mxu0 %v2220
  %3514 = vmatpush1.bf16.msra.mxu0 %v2219
  %3515 = vmatprep.subr.bf16.mxu0 %v2228
  %3516 = vmatpush1.bf16.msra.mxu0 %v2227
  %3517 = vmatprep.subr.bf16.mxu0 %v2236
  %3518 = vmatpush1.bf16.msra.mxu0 %v2235
  %3519 = vmatprep.subr.bf16.mxu0 %v2244
  %3520 = vmatpush1.bf16.msra.mxu0 %v2243
  %3521 = vmatprep.subr.bf16.mxu0 %v2252
  %3522 = vmatpush1.bf16.msra.mxu0 %v2251
  %3523 = vmatprep.subr.bf16.mxu0 %v2260
  %3524 = vmatpush1.bf16.msra.mxu0 %v2259
  %3525 = vmatprep.subr.bf16.mxu0 %v2268
  %3526 = vmatpush1.bf16.msra.mxu0 %v2267
  %3527 = vmatprep.mubr.bf16.mxu0 %v592
  %3528 = vmatmul.mubr.bf16.gmra.mrb[0].mxu0 %v591
  %v3529 = vpop.f32.mrb[0].mxu0
  %v3530 = vadd.f32 %v558, %v3529
  %v3531 = vpop.f32.mrb[0].mxu0
  %v3532 = vadd.f32 %v562, %v3531
  %v3533 = vpop.f32.mrb[0].mxu0
  %v3534 = vpop.f32.mrb[0].mxu0
  %3535 = vdwg.mxu0
  %3536 = vmatprep.subr.bf16.mxu0 %v2276
  %3537 = vmatpush1.bf16.msra.mxu0 %v2275
  %3538 = vmatprep.subr.bf16.mxu0 %v2284
  %3539 = vmatpush1.bf16.msra.mxu0 %v2283
  %3540 = vmatprep.subr.bf16.mxu0 %v2292
  %3541 = vmatpush1.bf16.msra.mxu0 %v2291
  %3542 = vmatprep.subr.bf16.mxu0 %v2300
  %3543 = vmatpush1.bf16.msra.mxu0 %v2299
  %3544 = vmatprep.subr.bf16.mxu0 %v2308
  %3545 = vmatpush1.bf16.msra.mxu0 %v2307
  %3546 = vmatprep.subr.bf16.mxu0 %v2316
  %3547 = vmatpush1.bf16.msra.mxu0 %v2315
  %3548 = vmatprep.subr.bf16.mxu0 %v2324
  %3549 = vmatpush1.bf16.msra.mxu0 %v2323
  %3550 = vmatprep.subr.bf16.mxu0 %v2332
  %3551 = vmatpush1.bf16.msra.mxu0 %v2331
  %3552 = vmatprep.subr.bf16.mxu0 %v2340
  %3553 = vmatpush1.bf16.msra.mxu0 %v2339
  %3554 = vmatprep.subr.bf16.mxu0 %v2348
  %3555 = vmatpush1.bf16.msra.mxu0 %v2347
  %3556 = vmatprep.subr.bf16.mxu0 %v2356
  %3557 = vmatpush1.bf16.msra.mxu0 %v2355
  %3558 = vmatprep.subr.bf16.mxu0 %v2364
  %3559 = vmatpush1.bf16.msra.mxu0 %v2363
  %3560 = vmatprep.subr.bf16.mxu0 %v2372
  %3561 = vmatpush1.bf16.msra.mxu0 %v2371
  %3562 = vmatprep.subr.bf16.mxu0 %v2380
  %3563 = vmatpush1.bf16.msra.mxu0 %v2379
  %3564 = vmatprep.subr.bf16.mxu0 %v2388
  %3565 = vmatpush1.bf16.msra.mxu0 %v2387
  %3566 = vmatprep.subr.bf16.mxu0 %v2396
  %3567 = vmatpush1.bf16.msra.mxu0 %v2395
  %3568 = vmatprep.mubr.bf16.mxu0 %v594
  %3569 = vmatmul.mubr.bf16.gmra.mrb[0].mxu0 %v593
  %v3570 = vpop.f32.mrb[0].mxu0
  %v3571 = vadd.f32 %v3530, %v3570
  %v3572 = vpop.f32.mrb[0].mxu0
  %v3573 = vadd.f32 %v3532, %v3572
  %v3574 = vpop.f32.mrb[0].mxu0
  %v3575 = vpop.f32.mrb[0].mxu0
  %3576 = vdwg.mxu0
  %3577 = vmatprep.subr.bf16.mxu0 %v2404
  %3578 = vmatpush1.bf16.msra.mxu0 %v2403
  %3579 = vmatprep.subr.bf16.mxu0 %v2412
  %3580 = vmatpush1.bf16.msra.mxu0 %v2411
  %3581 = vmatprep.subr.bf16.mxu0 %v2420
  %3582 = vmatpush1.bf16.msra.mxu0 %v2419
  %3583 = vmatprep.subr.bf16.mxu0 %v2428
  %3584 = vmatpush1.bf16.msra.mxu0 %v2427
  %3585 = vmatprep.subr.bf16.mxu0 %v2436
  %3586 = vmatpush1.bf16.msra.mxu0 %v2435
  %3587 = vmatprep.subr.bf16.mxu0 %v2444
  %3588 = vmatpush1.bf16.msra.mxu0 %v2443
  %3589 = vmatprep.subr.bf16.mxu0 %v2452
  %3590 = vmatpush1.bf16.msra.mxu0 %v2451
  %3591 = vmatprep.subr.bf16.mxu0 %v2460
  %3592 = vmatpush1.bf16.msra.mxu0 %v2459
  %3593 = vmatprep.subr.bf16.mxu0 %v2468
  %3594 = vmatpush1.bf16.msra.mxu0 %v2467
  %3595 = vmatprep.subr.bf16.mxu0 %v2476
  %3596 = vmatpush1.bf16.msra.mxu0 %v2475
  %3597 = vmatprep.subr.bf16.mxu0 %v2484
  %3598 = vmatpush1.bf16.msra.mxu0 %v2483
  %3599 = vmatprep.subr.bf16.mxu0 %v2492
  %3600 = vmatpush1.bf16.msra.mxu0 %v2491
  %3601 = vmatprep.subr.bf16.mxu0 %v2500
  %3602 = vmatpush1.bf16.msra.mxu0 %v2499
  %3603 = vmatprep.subr.bf16.mxu0 %v2508
  %3604 = vmatpush1.bf16.msra.mxu0 %v2507
  %3605 = vmatprep.subr.bf16.mxu0 %v2516
  %3606 = vmatpush1.bf16.msra.mxu0 %v2515
  %3607 = vmatprep.subr.bf16.mxu0 %v2524
  %3608 = vmatpush1.bf16.msra.mxu0 %v2523
  %3609 = vmatprep.mubr.bf16.mxu0 %v596
  %3610 = vmatmul.mubr.bf16.gmra.mrb[0].mxu0 %v595
  %v3611 = vpop.f32.mrb[0].mxu0
  %v3612 = vadd.f32 %v3571, %v3611
  %v3613 = vpop.f32.mrb[0].mxu0
  %v3614 = vadd.f32 %v3573, %v3613
  %v3615 = vpop.f32.mrb[0].mxu0
  %v3616 = vpop.f32.mrb[0].mxu0
  %3617 = vdwg.mxu0
  %3618 = vmatprep.subr.bf16.mxu0 %v2532
  %3619 = vmatpush1.bf16.msra.mxu0 %v2531
  %3620 = vmatprep.subr.bf16.mxu0 %v2540
  %3621 = vmatpush1.bf16.msra.mxu0 %v2539
  %3622 = vmatprep.subr.bf16.mxu0 %v2548
  %3623 = vmatpush1.bf16.msra.mxu0 %v2547
  %3624 = vmatprep.subr.bf16.mxu0 %v2556
  %3625 = vmatpush1.bf16.msra.mxu0 %v2555
  %3626 = vmatprep.subr.bf16.mxu0 %v2564
  %3627 = vmatpush1.bf16.msra.mxu0 %v2563
  %3628 = vmatprep.subr.bf16.mxu0 %v2572
  %3629 = vmatpush1.bf16.msra.mxu0 %v2571
  %3630 = vmatprep.subr.bf16.mxu0 %v2580
  %3631 = vmatpush1.bf16.msra.mxu0 %v2579
  %3632 = vmatprep.subr.bf16.mxu0 %v2588
  %3633 = vmatpush1.bf16.msra.mxu0 %v2587
  %3634 = vmatprep.subr.bf16.mxu0 %v2596
  %3635 = vmatpush1.bf16.msra.mxu0 %v2595
  %3636 = vmatprep.subr.bf16.mxu0 %v2604
  %3637 = vmatpush1.bf16.msra.mxu0 %v2603
  %3638 = vmatprep.subr.bf16.mxu0 %v2612
  %3639 = vmatpush1.bf16.msra.mxu0 %v2611
  %3640 = vmatprep.subr.bf16.mxu0 %v2620
  %3641 = vmatpush1.bf16.msra.mxu0 %v2619
  %3642 = vmatprep.subr.bf16.mxu0 %v2628
  %3643 = vmatpush1.bf16.msra.mxu0 %v2627
  %3644 = vmatprep.subr.bf16.mxu0 %v2636
  %3645 = vmatpush1.bf16.msra.mxu0 %v2635
  %3646 = vmatprep.subr.bf16.mxu0 %v2644
  %3647 = vmatpush1.bf16.msra.mxu0 %v2643
  %3648 = vmatprep.subr.bf16.mxu0 %v2652
  %3649 = vmatpush1.bf16.msra.mxu0 %v2651
  %3650 = vmatprep.mubr.bf16.mxu0 %v598
  %3651 = vmatmul.mubr.bf16.gmra.mrb[0].mxu0 %v597
  %v3652 = vpop.f32.mrb[0].mxu0
  %v3653 = vadd.f32 %v3612, %v3652
  %v3654 = vpop.f32.mrb[0].mxu0
  %v3655 = vadd.f32 %v3614, %v3654
  %v3656 = vpop.f32.mrb[0].mxu0
  %v3657 = vpop.f32.mrb[0].mxu0
  %3658 = vdwg.mxu0
  %3659 = vmatprep.subr.bf16.mxu0 %v2150
  %3660 = vmatpush1.bf16.msra.mxu0 %v2149
  %3661 = vmatprep.subr.bf16.mxu0 %v2158
  %3662 = vmatpush1.bf16.msra.mxu0 %v2157
  %3663 = vmatprep.subr.bf16.mxu0 %v2166
  %3664 = vmatpush1.bf16.msra.mxu0 %v2165
  %3665 = vmatprep.subr.bf16.mxu0 %v2174
  %3666 = vmatpush1.bf16.msra.mxu0 %v2173
  %3667 = vmatprep.subr.bf16.mxu0 %v2182
  %3668 = vmatpush1.bf16.msra.mxu0 %v2181
  %3669 = vmatprep.subr.bf16.mxu0 %v2190
  %3670 = vmatpush1.bf16.msra.mxu0 %v2189
  %3671 = vmatprep.subr.bf16.mxu0 %v2198
  %3672 = vmatpush1.bf16.msra.mxu0 %v2197
  %3673 = vmatprep.subr.bf16.mxu0 %v2206
  %3674 = vmatpush1.bf16.msra.mxu0 %v2205
  %3675 = vmatprep.subr.bf16.mxu0 %v2214
  %3676 = vmatpush1.bf16.msra.mxu0 %v2213
  %3677 = vmatprep.subr.bf16.mxu0 %v2222
  %3678 = vmatpush1.bf16.msra.mxu0 %v2221
  %3679 = vmatprep.subr.bf16.mxu0 %v2230
  %3680 = vmatpush1.bf16.msra.mxu0 %v2229
  %3681 = vmatprep.subr.bf16.mxu0 %v2238
  %3682 = vmatpush1.bf16.msra.mxu0 %v2237
  %3683 = vmatprep.subr.bf16.mxu0 %v2246
  %3684 = vmatpush1.bf16.msra.mxu0 %v2245
  %3685 = vmatprep.subr.bf16.mxu0 %v2254
  %3686 = vmatpush1.bf16.msra.mxu0 %v2253
  %3687 = vmatprep.subr.bf16.mxu0 %v2262
  %3688 = vmatpush1.bf16.msra.mxu0 %v2261
  %3689 = vmatprep.subr.bf16.mxu0 %v2270
  %3690 = vmatpush1.bf16.msra.mxu0 %v2269
  %3691 = vmatprep.mubr.bf16.mxu0 %v592
  %3692 = vmatmul.mubr.bf16.gmra.mrb[0].mxu0 %v591
  %v3693 = vpop.f32.mrb[0].mxu0
  %v3694 = vadd.f32 %v566, %v3693
  %v3695 = vpop.f32.mrb[0].mxu0
  %v3696 = vadd.f32 %v570, %v3695
  %v3697 = vpop.f32.mrb[0].mxu0
  %v3698 = vpop.f32.mrb[0].mxu0
  %3699 = vdwg.mxu0
  %3700 = vmatprep.subr.bf16.mxu0 %v2278
  %3701 = vmatpush1.bf16.msra.mxu0 %v2277
  %3702 = vmatprep.subr.bf16.mxu0 %v2286
  %3703 = vmatpush1.bf16.msra.mxu0 %v2285
  %3704 = vmatprep.subr.bf16.mxu0 %v2294
  %3705 = vmatpush1.bf16.msra.mxu0 %v2293
  %3706 = vmatprep.subr.bf16.mxu0 %v2302
  %3707 = vmatpush1.bf16.msra.mxu0 %v2301
  %3708 = vmatprep.subr.bf16.mxu0 %v2310
  %3709 = vmatpush1.bf16.msra.mxu0 %v2309
  %3710 = vmatprep.subr.bf16.mxu0 %v2318
  %3711 = vmatpush1.bf16.msra.mxu0 %v2317
  %3712 = vmatprep.subr.bf16.mxu0 %v2326
  %3713 = vmatpush1.bf16.msra.mxu0 %v2325
  %3714 = vmatprep.subr.bf16.mxu0 %v2334
  %3715 = vmatpush1.bf16.msra.mxu0 %v2333
  %3716 = vmatprep.subr.bf16.mxu0 %v2342
  %3717 = vmatpush1.bf16.msra.mxu0 %v2341
  %3718 = vmatprep.subr.bf16.mxu0 %v2350
  %3719 = vmatpush1.bf16.msra.mxu0 %v2349
  %3720 = vmatprep.subr.bf16.mxu0 %v2358
  %3721 = vmatpush1.bf16.msra.mxu0 %v2357
  %3722 = vmatprep.subr.bf16.mxu0 %v2366
  %3723 = vmatpush1.bf16.msra.mxu0 %v2365
  %3724 = vmatprep.subr.bf16.mxu0 %v2374
  %3725 = vmatpush1.bf16.msra.mxu0 %v2373
  %3726 = vmatprep.subr.bf16.mxu0 %v2382
  %3727 = vmatpush1.bf16.msra.mxu0 %v2381
  %3728 = vmatprep.subr.bf16.mxu0 %v2390
  %3729 = vmatpush1.bf16.msra.mxu0 %v2389
  %3730 = vmatprep.subr.bf16.mxu0 %v2398
  %3731 = vmatpush1.bf16.msra.mxu0 %v2397
  %3732 = vmatprep.mubr.bf16.mxu0 %v594
  %3733 = vmatmul.mubr.bf16.gmra.mrb[0].mxu0 %v593
  %v3734 = vpop.f32.mrb[0].mxu0
  %v3735 = vadd.f32 %v3694, %v3734
  %v3736 = vpop.f32.mrb[0].mxu0
  %v3737 = vadd.f32 %v3696, %v3736
  %v3738 = vpop.f32.mrb[0].mxu0
  %v3739 = vpop.f32.mrb[0].mxu0
  %3740 = vdwg.mxu0
  %3741 = vmatprep.subr.bf16.mxu0 %v2406
  %3742 = vmatpush1.bf16.msra.mxu0 %v2405
  %3743 = vmatprep.subr.bf16.mxu0 %v2414
  %3744 = vmatpush1.bf16.msra.mxu0 %v2413
  %3745 = vmatprep.subr.bf16.mxu0 %v2422
  %3746 = vmatpush1.bf16.msra.mxu0 %v2421
  %3747 = vmatprep.subr.bf16.mxu0 %v2430
  %3748 = vmatpush1.bf16.msra.mxu0 %v2429
  %3749 = vmatprep.subr.bf16.mxu0 %v2438
  %3750 = vmatpush1.bf16.msra.mxu0 %v2437
  %3751 = vmatprep.subr.bf16.mxu0 %v2446
  %3752 = vmatpush1.bf16.msra.mxu0 %v2445
  %3753 = vmatprep.subr.bf16.mxu0 %v2454
  %3754 = vmatpush1.bf16.msra.mxu0 %v2453
  %3755 = vmatprep.subr.bf16.mxu0 %v2462
  %3756 = vmatpush1.bf16.msra.mxu0 %v2461
  %3757 = vmatprep.subr.bf16.mxu0 %v2470
  %3758 = vmatpush1.bf16.msra.mxu0 %v2469
  %3759 = vmatprep.subr.bf16.mxu0 %v2478
  %3760 = vmatpush1.bf16.msra.mxu0 %v2477
  %3761 = vmatprep.subr.bf16.mxu0 %v2486
  %3762 = vmatpush1.bf16.msra.mxu0 %v2485
  %3763 = vmatprep.subr.bf16.mxu0 %v2494
  %3764 = vmatpush1.bf16.msra.mxu0 %v2493
  %3765 = vmatprep.subr.bf16.mxu0 %v2502
  %3766 = vmatpush1.bf16.msra.mxu0 %v2501
  %3767 = vmatprep.subr.bf16.mxu0 %v2510
  %3768 = vmatpush1.bf16.msra.mxu0 %v2509
  %3769 = vmatprep.subr.bf16.mxu0 %v2518
  %3770 = vmatpush1.bf16.msra.mxu0 %v2517
  %3771 = vmatprep.subr.bf16.mxu0 %v2526
  %3772 = vmatpush1.bf16.msra.mxu0 %v2525
  %3773 = vmatprep.mubr.bf16.mxu0 %v596
  %3774 = vmatmul.mubr.bf16.gmra.mrb[0].mxu0 %v595
  %v3775 = vpop.f32.mrb[0].mxu0
  %v3776 = vadd.f32 %v3735, %v3775
  %v3777 = vpop.f32.mrb[0].mxu0
  %v3778 = vadd.f32 %v3737, %v3777
  %v3779 = vpop.f32.mrb[0].mxu0
  %v3780 = vpop.f32.mrb[0].mxu0
  %3781 = vdwg.mxu0
  %3782 = vmatprep.subr.bf16.mxu0 %v2534
  %3783 = vmatpush1.bf16.msra.mxu0 %v2533
  %3784 = vmatprep.subr.bf16.mxu0 %v2542
  %3785 = vmatpush1.bf16.msra.mxu0 %v2541
  %3786 = vmatprep.subr.bf16.mxu0 %v2550
  %3787 = vmatpush1.bf16.msra.mxu0 %v2549
  %3788 = vmatprep.subr.bf16.mxu0 %v2558
  %3789 = vmatpush1.bf16.msra.mxu0 %v2557
  %3790 = vmatprep.subr.bf16.mxu0 %v2566
  %3791 = vmatpush1.bf16.msra.mxu0 %v2565
  %3792 = vmatprep.subr.bf16.mxu0 %v2574
  %3793 = vmatpush1.bf16.msra.mxu0 %v2573
  %3794 = vmatprep.subr.bf16.mxu0 %v2582
  %3795 = vmatpush1.bf16.msra.mxu0 %v2581
  %3796 = vmatprep.subr.bf16.mxu0 %v2590
  %3797 = vmatpush1.bf16.msra.mxu0 %v2589
  %3798 = vmatprep.subr.bf16.mxu0 %v2598
  %3799 = vmatpush1.bf16.msra.mxu0 %v2597
  %3800 = vmatprep.subr.bf16.mxu0 %v2606
  %3801 = vmatpush1.bf16.msra.mxu0 %v2605
  %3802 = vmatprep.subr.bf16.mxu0 %v2614
  %3803 = vmatpush1.bf16.msra.mxu0 %v2613
  %3804 = vmatprep.subr.bf16.mxu0 %v2622
  %3805 = vmatpush1.bf16.msra.mxu0 %v2621
  %3806 = vmatprep.subr.bf16.mxu0 %v2630
  %3807 = vmatpush1.bf16.msra.mxu0 %v2629
  %3808 = vmatprep.subr.bf16.mxu0 %v2638
  %3809 = vmatpush1.bf16.msra.mxu0 %v2637
  %3810 = vmatprep.subr.bf16.mxu0 %v2646
  %3811 = vmatpush1.bf16.msra.mxu0 %v2645
  %3812 = vmatprep.subr.bf16.mxu0 %v2654
  %3813 = vmatpush1.bf16.msra.mxu0 %v2653
  %3814 = vmatprep.mubr.bf16.mxu0 %v598
  %3815 = vmatmul.mubr.bf16.gmra.mrb[0].mxu0 %v597
  %v3816 = vpop.f32.mrb[0].mxu0
  %v3817 = vadd.f32 %v3776, %v3816
  %v3818 = vpop.f32.mrb[0].mxu0
  %v3819 = vadd.f32 %v3778, %v3818
  %v3820 = vpop.f32.mrb[0].mxu0
  %v3821 = vpop.f32.mrb[0].mxu0
  %3822 = vdwg.mxu0
  %v3823 = vmax.f32 %v3325, 0.0
  %v3824 = vmax.f32 %v3327, 0.0
  %v3825 = vmax.f32 %v3489, 0.0
  %v3826 = vmax.f32 %v3491, 0.0
  %v3827 = vmax.f32 %v3653, 0.0
  %v3828 = vmax.f32 %v3655, 0.0
  %v3829 = vmax.f32 %v3817, 0.0
  %v3830 = vmax.f32 %v3819, 0.0
  %v3831 = vpack.c.bf16 %v3823, %v3823
  %v3832 = vpack.c.bf16 %v3824, %v3824
  %v3833 = vpack.c.bf16 %v3825, %v3825
  %v3834 = vpack.c.bf16 %v3826, %v3826
  %v3835 = vpack.c.bf16 %v3827, %v3827
  %v3836 = vpack.c.bf16 %v3828, %v3828
  %v3837 = vpack.c.bf16 %v3829, %v3829
  %v3838 = vpack.c.bf16 %v3830, %v3830
  %v3839 = vld [vmem:[%s3] sm:$0xf]
  %v3840 = vld [vmem:[%s3 + $0x4] sm:$0xf]
  %v3841 = vld [vmem:[%s3 + $0x8] sm:$0xf]
  %v3842 = vld [vmem:[%s3 + $0xc] sm:$0xf]
  %v3843 = vld [vmem:[%s3 + $0x10] sm:$0xf]
  %v3844 = vld [vmem:[%s3 + $0x14] sm:$0xf]
  %v3845 = vld [vmem:[%s3 + $0x18] sm:$0xf]
  %v3846 = vld [vmem:[%s3 + $0x1c] sm:$0xf]
  %v3847 = vld [vmem:[%s3 + $0x20] sm:$0xf]
  %v3848 = vld [vmem:[%s3 + $0x24] sm:$0xf]
  %v3849 = vld [vmem:[%s3 + $0x28] sm:$0xf]
  %v3850 = vld [vmem:[%s3 + $0x2c] sm:$0xf]
  %v3851 = vld [vmem:[%s3 + $0x30] sm:$0xf]
  %v3852 = vld [vmem:[%s3 + $0x34] sm:$0xf]
  %v3853 = vld [vmem:[%s3 + $0x38] sm:$0xf]
  %v3854 = vld [vmem:[%s3 + $0x3c] sm:$0xf]
  %v3855 = vld [vmem:[%s3 + $0x40] sm:$0xf]
  %v3856 = vld [vmem:[%s3 + $0x44] sm:$0xf]
  %v3857 = vld [vmem:[%s3 + $0x48] sm:$0xf]
  %v3858 = vld [vmem:[%s3 + $0x4c] sm:$0xf]
  %v3859 = vld [vmem:[%s3 + $0x50] sm:$0xf]
  %v3860 = vld [vmem:[%s3 + $0x54] sm:$0xf]
  %v3861 = vld [vmem:[%s3 + $0x58] sm:$0xf]
  %v3862 = vld [vmem:[%s3 + $0x5c] sm:$0xf]
  %v3863 = vld [vmem:[%s3 + $0x60] sm:$0xf]
  %v3864 = vld [vmem:[%s3 + $0x64] sm:$0xf]
  %v3865 = vld [vmem:[%s3 + $0x68] sm:$0xf]
  %v3866 = vld [vmem:[%s3 + $0x6c] sm:$0xf]
  %v3867 = vld [vmem:[%s3 + $0x70] sm:$0xf]
  %v3868 = vld [vmem:[%s3 + $0x74] sm:$0xf]
  %v3869 = vld [vmem:[%s3 + $0x78] sm:$0xf]
  %v3870 = vld [vmem:[%s3 + $0x7c] sm:$0xf]
  %v3871 = vld [vmem:[%s3 + $0x80] sm:$0xf]
  %v3872 = vld [vmem:[%s3 + $0x84] sm:$0xf]
  %v3873 = vld [vmem:[%s3 + $0x88] sm:$0xf]
  %v3874 = vld [vmem:[%s3 + $0x8c] sm:$0xf]
  %v3875 = vld [vmem:[%s3 + $0x90] sm:$0xf]
  %v3876 = vld [vmem:[%s3 + $0x94] sm:$0xf]
  %v3877 = vld [vmem:[%s3 + $0x98] sm:$0xf]
  %v3878 = vld [vmem:[%s3 + $0x9c] sm:$0xf]
  %v3879 = vld [vmem:[%s3 + $0xa0] sm:$0xf]
  %v3880 = vld [vmem:[%s3 + $0xa4] sm:$0xf]
  %v3881 = vld [vmem:[%s3 + $0xa8] sm:$0xf]
  %v3882 = vld [vmem:[%s3 + $0xac] sm:$0xf]
  %v3883 = vld [vmem:[%s3 + $0xb0] sm:$0xf]
  %v3884 = vld [vmem:[%s3 + $0xb4] sm:$0xf]
  %v3885 = vld [vmem:[%s3 + $0xb8] sm:$0xf]
  %v3886 = vld [vmem:[%s3 + $0xbc] sm:$0xf]
  %v3887 = vld [vmem:[%s3 + $0xc0] sm:$0xf]
  %v3888 = vld [vmem:[%s3 + $0xc4] sm:$0xf]
  %v3889 = vld [vmem:[%s3 + $0xc8] sm:$0xf]
  %v3890 = vld [vmem:[%s3 + $0xcc] sm:$0xf]
  %v3891 = vld [vmem:[%s3 + $0xd0] sm:$0xf]
  %v3892 = vld [vmem:[%s3 + $0xd4] sm:$0xf]
  %v3893 = vld [vmem:[%s3 + $0xd8] sm:$0xf]
  %v3894 = vld [vmem:[%s3 + $0xdc] sm:$0xf]
  %v3895 = vld [vmem:[%s3 + $0xe0] sm:$0xf]
  %v3896 = vld [vmem:[%s3 + $0xe4] sm:$0xf]
  %v3897 = vld [vmem:[%s3 + $0xe8] sm:$0xf]
  %v3898 = vld [vmem:[%s3 + $0xec] sm:$0xf]
  %v3899 = vld [vmem:[%s3 + $0xf0] sm:$0xf]
  %v3900 = vld [vmem:[%s3 + $0xf4] sm:$0xf]
  %v3901 = vld [vmem:[%s3 + $0xf8] sm:$0xf]
  %v3902 = vld [vmem:[%s3 + $0xfc] sm:$0xf]
  %v3903 = vld [vmem:[%s3 + $0x100] sm:$0xf]
  %v3904 = vld [vmem:[%s3 + $0x104] sm:$0xf]
  %v3905 = vld [vmem:[%s3 + $0x108] sm:$0xf]
  %v3906 = vld [vmem:[%s3 + $0x10c] sm:$0xf]
  %v3907 = vld [vmem:[%s3 + $0x110] sm:$0xf]
  %v3908 = vld [vmem:[%s3 + $0x114] sm:$0xf]
  %v3909 = vld [vmem:[%s3 + $0x118] sm:$0xf]
  %v3910 = vld [vmem:[%s3 + $0x11c] sm:$0xf]
  %v3911 = vld [vmem:[%s3 + $0x120] sm:$0xf]
  %v3912 = vld [vmem:[%s3 + $0x124] sm:$0xf]
  %v3913 = vld [vmem:[%s3 + $0x128] sm:$0xf]
  %v3914 = vld [vmem:[%s3 + $0x12c] sm:$0xf]
  %v3915 = vld [vmem:[%s3 + $0x130] sm:$0xf]
  %v3916 = vld [vmem:[%s3 + $0x134] sm:$0xf]
  %v3917 = vld [vmem:[%s3 + $0x138] sm:$0xf]
  %v3918 = vld [vmem:[%s3 + $0x13c] sm:$0xf]
  %v3919 = vld [vmem:[%s3 + $0x140] sm:$0xf]
  %v3920 = vld [vmem:[%s3 + $0x144] sm:$0xf]
  %v3921 = vld [vmem:[%s3 + $0x148] sm:$0xf]
  %v3922 = vld [vmem:[%s3 + $0x14c] sm:$0xf]
  %v3923 = vld [vmem:[%s3 + $0x150] sm:$0xf]
  %v3924 = vld [vmem:[%s3 + $0x154] sm:$0xf]
  %v3925 = vld [vmem:[%s3 + $0x158] sm:$0xf]
  %v3926 = vld [vmem:[%s3 + $0x15c] sm:$0xf]
  %v3927 = vld [vmem:[%s3 + $0x160] sm:$0xf]
  %v3928 = vld [vmem:[%s3 + $0x164] sm:$0xf]
  %v3929 = vld [vmem:[%s3 + $0x168] sm:$0xf]
  %v3930 = vld [vmem:[%s3 + $0x16c] sm:$0xf]
  %v3931 = vld [vmem:[%s3 + $0x170] sm:$0xf]
  %v3932 = vld [vmem:[%s3 + $0x174] sm:$0xf]
  %v3933 = vld [vmem:[%s3 + $0x178] sm:$0xf]
  %v3934 = vld [vmem:[%s3 + $0x17c] sm:$0xf]
  %v3935 = vld [vmem:[%s3 + $0x180] sm:$0xf]
  %v3936 = vld [vmem:[%s3 + $0x184] sm:$0xf]
  %v3937 = vld [vmem:[%s3 + $0x188] sm:$0xf]
  %v3938 = vld [vmem:[%s3 + $0x18c] sm:$0xf]
  %v3939 = vld [vmem:[%s3 + $0x190] sm:$0xf]
  %v3940 = vld [vmem:[%s3 + $0x194] sm:$0xf]
  %v3941 = vld [vmem:[%s3 + $0x198] sm:$0xf]
  %v3942 = vld [vmem:[%s3 + $0x19c] sm:$0xf]
  %v3943 = vld [vmem:[%s3 + $0x1a0] sm:$0xf]
  %v3944 = vld [vmem:[%s3 + $0x1a4] sm:$0xf]
  %v3945 = vld [vmem:[%s3 + $0x1a8] sm:$0xf]
  %v3946 = vld [vmem:[%s3 + $0x1ac] sm:$0xf]
  %v3947 = vld [vmem:[%s3 + $0x1b0] sm:$0xf]
  %v3948 = vld [vmem:[%s3 + $0x1b4] sm:$0xf]
  %v3949 = vld [vmem:[%s3 + $0x1b8] sm:$0xf]
  %v3950 = vld [vmem:[%s3 + $0x1bc] sm:$0xf]
  %v3951 = vld [vmem:[%s3 + $0x1c0] sm:$0xf]
  %v3952 = vld [vmem:[%s3 + $0x1c4] sm:$0xf]
  %v3953 = vld [vmem:[%s3 + $0x1c8] sm:$0xf]
  %v3954 = vld [vmem:[%s3 + $0x1cc] sm:$0xf]
  %v3955 = vld [vmem:[%s3 + $0x1d0] sm:$0xf]
  %v3956 = vld [vmem:[%s3 + $0x1d4] sm:$0xf]
  %v3957 = vld [vmem:[%s3 + $0x1d8] sm:$0xf]
  %v3958 = vld [vmem:[%s3 + $0x1dc] sm:$0xf]
  %v3959 = vld [vmem:[%s3 + $0x1e0] sm:$0xf]
  %v3960 = vld [vmem:[%s3 + $0x1e4] sm:$0xf]
  %v3961 = vld [vmem:[%s3 + $0x1e8] sm:$0xf]
  %v3962 = vld [vmem:[%s3 + $0x1ec] sm:$0xf]
  %v3963 = vld [vmem:[%s3 + $0x1f0] sm:$0xf]
  %v3964 = vld [vmem:[%s3 + $0x1f4] sm:$0xf]
  %v3965 = vld [vmem:[%s3 + $0x1f8] sm:$0xf]
  %v3966 = vld [vmem:[%s3 + $0x1fc] sm:$0xf]
  %v3967 = vld [vmem:[%s4] sm:$0x1]
  %v3969 = vlaneseq
  %v3970 = vshrl.u32 %v3969, 7
  %v3971 = vsub.s32 0, %v3970
  %v3972 = vrot.slane %v3967, %v3971
  %v4102 = vunpack.c.l.b16 %v3839
  %v4103 = vunpack.c.l.b16 %v3840
  %v4104 = vunpack.c.l.b16 %v3841
  %v4105 = vunpack.c.l.b16 %v3842
  %v4106 = vunpack.c.l.b16 %v3843
  %v4107 = vunpack.c.l.b16 %v3844
  %v4108 = vunpack.c.l.b16 %v3845
  %v4109 = vunpack.c.l.b16 %v3846
  %v4110 = vunpack.c.l.b16 %v3847
  %v4111 = vunpack.c.l.b16 %v3848
  %v4112 = vunpack.c.l.b16 %v3849
  %v4113 = vunpack.c.l.b16 %v3850
  %v4114 = vunpack.c.l.b16 %v3851
  %v4115 = vunpack.c.l.b16 %v3852
  %v4116 = vunpack.c.l.b16 %v3853
  %v4117 = vunpack.c.l.b16 %v3854
  %v4118 = vunpack.c.l.b16 %v3855
  %v4119 = vunpack.c.l.b16 %v3856
  %v4120 = vunpack.c.l.b16 %v3857
  %v4121 = vunpack.c.l.b16 %v3858
  %v4122 = vunpack.c.l.b16 %v3859
  %v4123 = vunpack.c.l.b16 %v3860
  %v4124 = vunpack.c.l.b16 %v3861
  %v4125 = vunpack.c.l.b16 %v3862
  %v4126 = vunpack.c.l.b16 %v3863
  %v4127 = vunpack.c.l.b16 %v3864
  %v4128 = vunpack.c.l.b16 %v3865
  %v4129 = vunpack.c.l.b16 %v3866
  %v4130 = vunpack.c.l.b16 %v3867
  %v4131 = vunpack.c.l.b16 %v3868
  %v4132 = vunpack.c.l.b16 %v3869
  %v4133 = vunpack.c.l.b16 %v3870
  %v4134 = vunpack.c.l.b16 %v3871
  %v4135 = vunpack.c.l.b16 %v3872
  %v4136 = vunpack.c.l.b16 %v3873
  %v4137 = vunpack.c.l.b16 %v3874
  %v4138 = vunpack.c.l.b16 %v3875
  %v4139 = vunpack.c.l.b16 %v3876
  %v4140 = vunpack.c.l.b16 %v3877
  %v4141 = vunpack.c.l.b16 %v3878
  %v4142 = vunpack.c.l.b16 %v3879
  %v4143 = vunpack.c.l.b16 %v3880
  %v4144 = vunpack.c.l.b16 %v3881
  %v4145 = vunpack.c.l.b16 %v3882
  %v4146 = vunpack.c.l.b16 %v3883
  %v4147 = vunpack.c.l.b16 %v3884
  %v4148 = vunpack.c.l.b16 %v3885
  %v4149 = vunpack.c.l.b16 %v3886
  %v4150 = vunpack.c.l.b16 %v3887
  %v4151 = vunpack.c.l.b16 %v3888
  %v4152 = vunpack.c.l.b16 %v3889
  %v4153 = vunpack.c.l.b16 %v3890
  %v4154 = vunpack.c.l.b16 %v3891
  %v4155 = vunpack.c.l.b16 %v3892
  %v4156 = vunpack.c.l.b16 %v3893
  %v4157 = vunpack.c.l.b16 %v3894
  %v4158 = vunpack.c.l.b16 %v3895
  %v4159 = vunpack.c.l.b16 %v3896
  %v4160 = vunpack.c.l.b16 %v3897
  %v4161 = vunpack.c.l.b16 %v3898
  %v4162 = vunpack.c.l.b16 %v3899
  %v4163 = vunpack.c.l.b16 %v3900
  %v4164 = vunpack.c.l.b16 %v3901
  %v4165 = vunpack.c.l.b16 %v3902
  %v4166 = vunpack.c.l.b16 %v3903
  %v4167 = vunpack.c.l.b16 %v3904
  %v4168 = vunpack.c.l.b16 %v3905
  %v4169 = vunpack.c.l.b16 %v3906
  %v4170 = vunpack.c.l.b16 %v3907
  %v4171 = vunpack.c.l.b16 %v3908
  %v4172 = vunpack.c.l.b16 %v3909
  %v4173 = vunpack.c.l.b16 %v3910
  %v4174 = vunpack.c.l.b16 %v3911
  %v4175 = vunpack.c.l.b16 %v3912
  %v4176 = vunpack.c.l.b16 %v3913
  %v4177 = vunpack.c.l.b16 %v3914
  %v4178 = vunpack.c.l.b16 %v3915
  %v4179 = vunpack.c.l.b16 %v3916
  %v4180 = vunpack.c.l.b16 %v3917
  %v4181 = vunpack.c.l.b16 %v3918
  %v4182 = vunpack.c.l.b16 %v3919
  %v4183 = vunpack.c.l.b16 %v3920
  %v4184 = vunpack.c.l.b16 %v3921
  %v4185 = vunpack.c.l.b16 %v3922
  %v4186 = vunpack.c.l.b16 %v3923
  %v4187 = vunpack.c.l.b16 %v3924
  %v4188 = vunpack.c.l.b16 %v3925
  %v4189 = vunpack.c.l.b16 %v3926
  %v4190 = vunpack.c.l.b16 %v3927
  %v4191 = vunpack.c.l.b16 %v3928
  %v4192 = vunpack.c.l.b16 %v3929
  %v4193 = vunpack.c.l.b16 %v3930
  %v4194 = vunpack.c.l.b16 %v3931
  %v4195 = vunpack.c.l.b16 %v3932
  %v4196 = vunpack.c.l.b16 %v3933
  %v4197 = vunpack.c.l.b16 %v3934
  %v4198 = vunpack.c.l.b16 %v3935
  %v4199 = vunpack.c.l.b16 %v3936
  %v4200 = vunpack.c.l.b16 %v3937
  %v4201 = vunpack.c.l.b16 %v3938
  %v4202 = vunpack.c.l.b16 %v3939
  %v4203 = vunpack.c.l.b16 %v3940
  %v4204 = vunpack.c.l.b16 %v3941
  %v4205 = vunpack.c.l.b16 %v3942
  %v4206 = vunpack.c.l.b16 %v3943
  %v4207 = vunpack.c.l.b16 %v3944
  %v4208 = vunpack.c.l.b16 %v3945
  %v4209 = vunpack.c.l.b16 %v3946
  %v4210 = vunpack.c.l.b16 %v3947
  %v4211 = vunpack.c.l.b16 %v3948
  %v4212 = vunpack.c.l.b16 %v3949
  %v4213 = vunpack.c.l.b16 %v3950
  %v4214 = vunpack.c.l.b16 %v3951
  %v4215 = vunpack.c.l.b16 %v3952
  %v4216 = vunpack.c.l.b16 %v3953
  %v4217 = vunpack.c.l.b16 %v3954
  %v4218 = vunpack.c.l.b16 %v3955
  %v4219 = vunpack.c.l.b16 %v3956
  %v4220 = vunpack.c.l.b16 %v3957
  %v4221 = vunpack.c.l.b16 %v3958
  %v4222 = vunpack.c.l.b16 %v3959
  %v4223 = vunpack.c.l.b16 %v3960
  %v4224 = vunpack.c.l.b16 %v3961
  %v4225 = vunpack.c.l.b16 %v3962
  %v4226 = vunpack.c.l.b16 %v3963
  %v4227 = vunpack.c.l.b16 %v3964
  %v4228 = vunpack.c.l.b16 %v3965
  %v4229 = vunpack.c.l.b16 %v3966
  %v4230 = vpack.c.b16 %v4103, %v4102
  %v4231 = vpack.c.b16 %v4105, %v4104
  %v4232 = vpack.c.b16 %v4107, %v4106
  %v4233 = vpack.c.b16 %v4109, %v4108
  %v4234 = vpack.c.b16 %v4111, %v4110
  %v4235 = vpack.c.b16 %v4113, %v4112
  %v4236 = vpack.c.b16 %v4115, %v4114
  %v4237 = vpack.c.b16 %v4117, %v4116
  %v4238 = vpack.c.b16 %v4119, %v4118
  %v4239 = vpack.c.b16 %v4121, %v4120
  %v4240 = vpack.c.b16 %v4123, %v4122
  %v4241 = vpack.c.b16 %v4125, %v4124
  %v4242 = vpack.c.b16 %v4127, %v4126
  %v4243 = vpack.c.b16 %v4129, %v4128
  %v4244 = vpack.c.b16 %v4131, %v4130
  %v4245 = vpack.c.b16 %v4133, %v4132
  %v4246 = vpack.c.b16 %v4135, %v4134
  %v4247 = vpack.c.b16 %v4137, %v4136
  %v4248 = vpack.c.b16 %v4139, %v4138
  %v4249 = vpack.c.b16 %v4141, %v4140
  %v4250 = vpack.c.b16 %v4143, %v4142
  %v4251 = vpack.c.b16 %v4145, %v4144
  %v4252 = vpack.c.b16 %v4147, %v4146
  %v4253 = vpack.c.b16 %v4149, %v4148
  %v4254 = vpack.c.b16 %v4151, %v4150
  %v4255 = vpack.c.b16 %v4153, %v4152
  %v4256 = vpack.c.b16 %v4155, %v4154
  %v4257 = vpack.c.b16 %v4157, %v4156
  %v4258 = vpack.c.b16 %v4159, %v4158
  %v4259 = vpack.c.b16 %v4161, %v4160
  %v4260 = vpack.c.b16 %v4163, %v4162
  %v4261 = vpack.c.b16 %v4165, %v4164
  %v4262 = vpack.c.b16 %v4167, %v4166
  %v4263 = vpack.c.b16 %v4169, %v4168
  %v4264 = vpack.c.b16 %v4171, %v4170
  %v4265 = vpack.c.b16 %v4173, %v4172
  %v4266 = vpack.c.b16 %v4175, %v4174
  %v4267 = vpack.c.b16 %v4177, %v4176
  %v4268 = vpack.c.b16 %v4179, %v4178
  %v4269 = vpack.c.b16 %v4181, %v4180
  %v4270 = vpack.c.b16 %v4183, %v4182
  %v4271 = vpack.c.b16 %v4185, %v4184
  %v4272 = vpack.c.b16 %v4187, %v4186
  %v4273 = vpack.c.b16 %v4189, %v4188
  %v4274 = vpack.c.b16 %v4191, %v4190
  %v4275 = vpack.c.b16 %v4193, %v4192
  %v4276 = vpack.c.b16 %v4195, %v4194
  %v4277 = vpack.c.b16 %v4197, %v4196
  %v4278 = vpack.c.b16 %v4199, %v4198
  %v4279 = vpack.c.b16 %v4201, %v4200
  %v4280 = vpack.c.b16 %v4203, %v4202
  %v4281 = vpack.c.b16 %v4205, %v4204
  %v4282 = vpack.c.b16 %v4207, %v4206
  %v4283 = vpack.c.b16 %v4209, %v4208
  %v4284 = vpack.c.b16 %v4211, %v4210
  %v4285 = vpack.c.b16 %v4213, %v4212
  %v4286 = vpack.c.b16 %v4215, %v4214
  %v4287 = vpack.c.b16 %v4217, %v4216
  %v4288 = vpack.c.b16 %v4219, %v4218
  %v4289 = vpack.c.b16 %v4221, %v4220
  %v4290 = vpack.c.b16 %v4223, %v4222
  %v4291 = vpack.c.b16 %v4225, %v4224
  %v4292 = vpack.c.b16 %v4227, %v4226
  %v4293 = vpack.c.b16 %v4229, %v4228
  %4358 = vmatprep.subr.bf16.mxu0 0
  %4359 = vmatpush1.bf16.msra.mxu0 %v4230
  %4360 = vmatprep.subr.bf16.mxu0 0
  %4361 = vmatpush1.bf16.msra.mxu0 %v4231
  %4362 = vmatprep.subr.bf16.mxu0 0
  %4363 = vmatpush1.bf16.msra.mxu0 %v4232
  %4364 = vmatprep.subr.bf16.mxu0 0
  %4365 = vmatpush1.bf16.msra.mxu0 %v4233
  %4366 = vmatprep.subr.bf16.mxu0 0
  %4367 = vmatpush1.bf16.msra.mxu0 %v4234
  %4368 = vmatprep.subr.bf16.mxu0 0
  %4369 = vmatpush1.bf16.msra.mxu0 %v4235
  %4370 = vmatprep.subr.bf16.mxu0 0
  %4371 = vmatpush1.bf16.msra.mxu0 %v4236
  %4372 = vmatprep.subr.bf16.mxu0 0
  %4373 = vmatpush1.bf16.msra.mxu0 %v4237
  %4374 = vmatprep.subr.bf16.mxu0 0
  %4375 = vmatpush1.bf16.msra.mxu0 %v4238
  %4376 = vmatprep.subr.bf16.mxu0 0
  %4377 = vmatpush1.bf16.msra.mxu0 %v4239
  %4378 = vmatprep.subr.bf16.mxu0 0
  %4379 = vmatpush1.bf16.msra.mxu0 %v4240
  %4380 = vmatprep.subr.bf16.mxu0 0
  %4381 = vmatpush1.bf16.msra.mxu0 %v4241
  %4382 = vmatprep.subr.bf16.mxu0 0
  %4383 = vmatpush1.bf16.msra.mxu0 %v4242
  %4384 = vmatprep.subr.bf16.mxu0 0
  %4385 = vmatpush1.bf16.msra.mxu0 %v4243
  %4386 = vmatprep.subr.bf16.mxu0 0
  %4387 = vmatpush1.bf16.msra.mxu0 %v4244
  %4388 = vmatprep.subr.bf16.mxu0 0
  %4389 = vmatpush1.bf16.msra.mxu0 %v4245
  %4390 = vmatprep.mubr.bf16.mxu0 %v3832
  %4391 = vmatmul.mubr.bf16.gmra.mrb[0].mxu0 %v3831
  %v4392 = vpop.f32.mrb[0].mxu0
  %v4393 = vadd.f32 %v3972, %v4392
  %v4394 = vpop.f32.mrb[0].mxu0
  %v4395 = vpop.f32.mrb[0].mxu0
  %v4396 = vpop.f32.mrb[0].mxu0
  %4397 = vdwg.mxu0
  %4398 = vmatprep.subr.bf16.mxu0 0
  %4399 = vmatpush1.bf16.msra.mxu0 %v4246
  %4400 = vmatprep.subr.bf16.mxu0 0
  %4401 = vmatpush1.bf16.msra.mxu0 %v4247
  %4402 = vmatprep.subr.bf16.mxu0 0
  %4403 = vmatpush1.bf16.msra.mxu0 %v4248
  %4404 = vmatprep.subr.bf16.mxu0 0
  %4405 = vmatpush1.bf16.msra.mxu0 %v4249
  %4406 = vmatprep.subr.bf16.mxu0 0
  %4407 = vmatpush1.bf16.msra.mxu0 %v4250
  %4408 = vmatprep.subr.bf16.mxu0 0
  %4409 = vmatpush1.bf16.msra.mxu0 %v4251
  %4410 = vmatprep.subr.bf16.mxu0 0
  %4411 = vmatpush1.bf16.msra.mxu0 %v4252
  %4412 = vmatprep.subr.bf16.mxu0 0
  %4413 = vmatpush1.bf16.msra.mxu0 %v4253
  %4414 = vmatprep.subr.bf16.mxu0 0
  %4415 = vmatpush1.bf16.msra.mxu0 %v4254
  %4416 = vmatprep.subr.bf16.mxu0 0
  %4417 = vmatpush1.bf16.msra.mxu0 %v4255
  %4418 = vmatprep.subr.bf16.mxu0 0
  %4419 = vmatpush1.bf16.msra.mxu0 %v4256
  %4420 = vmatprep.subr.bf16.mxu0 0
  %4421 = vmatpush1.bf16.msra.mxu0 %v4257
  %4422 = vmatprep.subr.bf16.mxu0 0
  %4423 = vmatpush1.bf16.msra.mxu0 %v4258
  %4424 = vmatprep.subr.bf16.mxu0 0
  %4425 = vmatpush1.bf16.msra.mxu0 %v4259
  %4426 = vmatprep.subr.bf16.mxu0 0
  %4427 = vmatpush1.bf16.msra.mxu0 %v4260
  %4428 = vmatprep.subr.bf16.mxu0 0
  %4429 = vmatpush1.bf16.msra.mxu0 %v4261
  %4430 = vmatprep.mubr.bf16.mxu0 %v3834
  %4431 = vmatmul.mubr.bf16.gmra.mrb[0].mxu0 %v3833
  %v4432 = vpop.f32.mrb[0].mxu0
  %v4433 = vadd.f32 %v4393, %v4432
  %v4434 = vpop.f32.mrb[0].mxu0
  %v4435 = vpop.f32.mrb[0].mxu0
  %v4436 = vpop.f32.mrb[0].mxu0
  %4437 = vdwg.mxu0
  %4438 = vmatprep.subr.bf16.mxu0 0
  %4439 = vmatpush1.bf16.msra.mxu0 %v4262
  %4440 = vmatprep.subr.bf16.mxu0 0
  %4441 = vmatpush1.bf16.msra.mxu0 %v4263
  %4442 = vmatprep.subr.bf16.mxu0 0
  %4443 = vmatpush1.bf16.msra.mxu0 %v4264
  %4444 = vmatprep.subr.bf16.mxu0 0
  %4445 = vmatpush1.bf16.msra.mxu0 %v4265
  %4446 = vmatprep.subr.bf16.mxu0 0
  %4447 = vmatpush1.bf16.msra.mxu0 %v4266
  %4448 = vmatprep.subr.bf16.mxu0 0
  %4449 = vmatpush1.bf16.msra.mxu0 %v4267
  %4450 = vmatprep.subr.bf16.mxu0 0
  %4451 = vmatpush1.bf16.msra.mxu0 %v4268
  %4452 = vmatprep.subr.bf16.mxu0 0
  %4453 = vmatpush1.bf16.msra.mxu0 %v4269
  %4454 = vmatprep.subr.bf16.mxu0 0
  %4455 = vmatpush1.bf16.msra.mxu0 %v4270
  %4456 = vmatprep.subr.bf16.mxu0 0
  %4457 = vmatpush1.bf16.msra.mxu0 %v4271
  %4458 = vmatprep.subr.bf16.mxu0 0
  %4459 = vmatpush1.bf16.msra.mxu0 %v4272
  %4460 = vmatprep.subr.bf16.mxu0 0
  %4461 = vmatpush1.bf16.msra.mxu0 %v4273
  %4462 = vmatprep.subr.bf16.mxu0 0
  %4463 = vmatpush1.bf16.msra.mxu0 %v4274
  %4464 = vmatprep.subr.bf16.mxu0 0
  %4465 = vmatpush1.bf16.msra.mxu0 %v4275
  %4466 = vmatprep.subr.bf16.mxu0 0
  %4467 = vmatpush1.bf16.msra.mxu0 %v4276
  %4468 = vmatprep.subr.bf16.mxu0 0
  %4469 = vmatpush1.bf16.msra.mxu0 %v4277
  %4470 = vmatprep.mubr.bf16.mxu0 %v3836
  %4471 = vmatmul.mubr.bf16.gmra.mrb[0].mxu0 %v3835
  %v4472 = vpop.f32.mrb[0].mxu0
  %v4473 = vadd.f32 %v4433, %v4472
  %v4474 = vpop.f32.mrb[0].mxu0
  %v4475 = vpop.f32.mrb[0].mxu0
  %v4476 = vpop.f32.mrb[0].mxu0
  %4477 = vdwg.mxu0
  %4478 = vmatprep.subr.bf16.mxu0 0
  %4479 = vmatpush1.bf16.msra.mxu0 %v4278
  %4480 = vmatprep.subr.bf16.mxu0 0
  %4481 = vmatpush1.bf16.msra.mxu0 %v4279
  %4482 = vmatprep.subr.bf16.mxu0 0
  %4483 = vmatpush1.bf16.msra.mxu0 %v4280
  %4484 = vmatprep.subr.bf16.mxu0 0
  %4485 = vmatpush1.bf16.msra.mxu0 %v4281
  %4486 = vmatprep.subr.bf16.mxu0 0
  %4487 = vmatpush1.bf16.msra.mxu0 %v4282
  %4488 = vmatprep.subr.bf16.mxu0 0
  %4489 = vmatpush1.bf16.msra.mxu0 %v4283
  %4490 = vmatprep.subr.bf16.mxu0 0
  %4491 = vmatpush1.bf16.msra.mxu0 %v4284
  %4492 = vmatprep.subr.bf16.mxu0 0
  %4493 = vmatpush1.bf16.msra.mxu0 %v4285
  %4494 = vmatprep.subr.bf16.mxu0 0
  %4495 = vmatpush1.bf16.msra.mxu0 %v4286
  %4496 = vmatprep.subr.bf16.mxu0 0
  %4497 = vmatpush1.bf16.msra.mxu0 %v4287
  %4498 = vmatprep.subr.bf16.mxu0 0
  %4499 = vmatpush1.bf16.msra.mxu0 %v4288
  %4500 = vmatprep.subr.bf16.mxu0 0
  %4501 = vmatpush1.bf16.msra.mxu0 %v4289
  %4502 = vmatprep.subr.bf16.mxu0 0
  %4503 = vmatpush1.bf16.msra.mxu0 %v4290
  %4504 = vmatprep.subr.bf16.mxu0 0
  %4505 = vmatpush1.bf16.msra.mxu0 %v4291
  %4506 = vmatprep.subr.bf16.mxu0 0
  %4507 = vmatpush1.bf16.msra.mxu0 %v4292
  %4508 = vmatprep.subr.bf16.mxu0 0
  %4509 = vmatpush1.bf16.msra.mxu0 %v4293
  %4510 = vmatprep.mubr.bf16.mxu0 %v3838
  %4511 = vmatmul.mubr.bf16.gmra.mrb[0].mxu0 %v3837
  %v4512 = vpop.f32.mrb[0].mxu0
  %v4513 = vadd.f32 %v4473, %v4512
  %v4514 = vpop.f32.mrb[0].mxu0
  %v4515 = vpop.f32.mrb[0].mxu0
  %v4516 = vpop.f32.mrb[0].mxu0
  %4517 = vdwg.mxu0
  %4518 = vmax.xlane.f32.xlu0 %v4513
  %v4519 = vpop.xlane.xlu0 %4518
  %v4520 = vsub.f32 %v4513, %v4519
  %v4521 = vmul.f32 %v4520, 1.442695
  %v4522 = vpow.pop %v4521
  %4523 = vadd.xlane.f32.xlu0 %v4522
  %v4524 = vpop.xlane.xlu0 %4523
  %v4525 = vrcp.pop %v4524
  %v4526 = vmul.f32 %v4524, %v4525
  %v4527 = vsub.f32 2.0, %v4526
  %v4528 = vmul.f32 %v4525, %v4527
  %v4529 = vmul.f32 %v4522, %v4528
  %4530 = vst [vmem:[%s5] sm:$0xff] %v4529
  // Predicated region
  $region22: #{mnist_forward.5} parent=0 // pred_check
    _
  $region23: #{mnist_forward.5} parent=0 // pred_check_branch
    %4532 = sbr.rel (0) target = $region25
  $region24: #{mnist_forward.5} parent=0 // pred_region
    _
  $region25: #{mnist_forward.5} parent=0 // pred_fallthru
    _
  // Predicated region
  $region26: #{mnist_forward.5} parent=0 // pred_check
    _
  $region27: #{mnist_forward.5} parent=0 // pred_check_branch
    %4534 = sbr.rel (0) target = $region29
  $region28: #{mnist_forward.5} parent=0 // pred_region
    _
  $region29: #{mnist_forward.5} parent=0 // pred_fallthru
    _

</llo_original>
